<compile_context>
chip_gen: v7x
topology: tpu7x:2x2x1
jax: 0.10.0
libtpu: 0.0.40
codegen_flags: <defaults>
</compile_context>

<pallas_src>
import jax
import jax.numpy as jnp
import numpy as np
from jax.experimental import pallas as pl
from jax.experimental.pallas import tpu as pltpu


# ---------------------------------------------------------------------------
# Fused kernel: conv3x3 -> deconv2x2(stride 2) -> conv3x3
# Grid = (batch n, output-row-chunk r).  Stages 1+2 run once per image at
# r == 0 and leave the upsampled, zero-padded activation in VMEM scratch;
# stage 3 consumes `row_block` output rows of it per grid step.
# ---------------------------------------------------------------------------

def _output_head_kernel(x_ref, w1_ref, b1_ref, wt_ref, bt_ref, w2_ref, b2_ref,
                        o_ref, xpad_ref, upad_ref):
    """x_ref: (1, H, W, C)             w1_ref/w2_ref: (9C, C) bf16
    wt_ref: (C, 4C) bf16, cols (dh,dw,co)   b*_ref: (1, C) f32
    o_ref: (1, ROWS, 2W, C)
    xpad_ref: (H+2, W+2, C)   f32 scratch (stage-1 input + zero halo)
    upad_ref: (2H+2, 2W+2, C) f32 scratch (stage-2 output + zero halo),
              persists across the row-chunk grid axis.
    """
    H, W, C = x_ref.shape[1], x_ref.shape[2], x_ref.shape[3]
    H2, W2 = 2 * H, 2 * W
    ROWS = o_ref.shape[1]
    r = pl.program_id(1)

    # ------------- stages 1 + 2: run once per image (first row chunk) ------
    @pl.when(r == 0)
    def _stages_1_and_2():
        # Zero ONLY the 1-px halo ring; interiors are fully overwritten below.
        # Done per image (not gated on a global first step) so it stays
        # correct under megacore sharding of the batch axis.
        xpad_ref[0:1, :, :] = jnp.zeros((1, W + 2, C), jnp.float32)
        xpad_ref[H + 1:H + 2, :, :] = jnp.zeros((1, W + 2, C), jnp.float32)
        xpad_ref[:, 0:1, :] = jnp.zeros((H + 2, 1, C), jnp.float32)
        xpad_ref[:, W + 1:W + 2, :] = jnp.zeros((H + 2, 1, C), jnp.float32)
        upad_ref[0:1, :, :] = jnp.zeros((1, W2 + 2, C), jnp.float32)
        upad_ref[H2 + 1:H2 + 2, :, :] = jnp.zeros((1, W2 + 2, C), jnp.float32)
        upad_ref[:, 0:1, :] = jnp.zeros((H2 + 2, 1, C), jnp.float32)
        upad_ref[:, W2 + 1:W2 + 2, :] = jnp.zeros((H2 + 2, 1, C), jnp.float32)

        # ---- stage 1: Conv2d 3x3, stride 1, padding 1 (one im2col matmul)
        xpad_ref[1:H + 1, 1:W + 1, :] = x_ref[0].astype(jnp.float32)
        patches = jnp.concatenate(
            [xpad_ref[kh:kh + H, kw:kw + W, :]
             .astype(jnp.bfloat16).reshape(H * W, C)
             for kh in range(3) for kw in range(3)],
            axis=1)                                              # (HW, 9C) bf16
        x1 = jax.lax.dot_general(
            patches, w1_ref[...],
            dimension_numbers=(((1,), (0,)), ((), ())),
            preferred_element_type=jnp.float32) + b1_ref[...]    # (HW, C) f32

        # ---- stage 2: ConvTranspose2d 2x2, stride 2 (one matmul + shuffle)
        taps = jax.lax.dot_general(
            x1.astype(jnp.bfloat16), wt_ref[...],
            dimension_numbers=(((1,), (0,)), ((), ())),
            preferred_element_type=jnp.float32)                  # (HW, 4C) f32
        # Columns ordered (dh, dw, co): each dh-half reshapes straight to
        # (H, 2W, C); only a row-granularity interleave of the two halves
        # remains (no per-pixel (dh, dw) sublane shuffles).
        half0 = taps[:, :2 * C].reshape(H, W2, C) + bt_ref[...]
        half1 = taps[:, 2 * C:].reshape(H, W2, C) + bt_ref[...]
        up = jnp.stack([half0, half1], axis=1).reshape(H2, W2, C)
        upad_ref[1:H2 + 1, 1:W2 + 1, :] = up

    # ------------- stage 3: Conv2d 3x3 on ROWS output rows per step --------
    r0 = pl.multiple_of(r * ROWS, ROWS)            # first output row of chunk
    patches2 = jnp.concatenate(
        [upad_ref[pl.ds(r0 + kh, ROWS), kw:kw + W2, :]
         .astype(jnp.bfloat16).reshape(ROWS * W2, C)
         for kh in range(3) for kw in range(3)],
        axis=1)                                             # (ROWS*W2, 9C) bf16
    out = jax.lax.dot_general(
        patches2, w2_ref[...],
        dimension_numbers=(((1,), (0,)), ((), ())),
        preferred_element_type=jnp.float32) + b2_ref[...]   # (ROWS*W2, C) f32
    o_ref[0] = out.reshape(ROWS, W2, C).astype(o_ref.dtype)


# ---------------------------------------------------------------------------
# Wrapper
# ---------------------------------------------------------------------------

def output_head(x, params, *, row_block=8):
    """x: (N, H, W, C) NHWC.  Equivalent to PyTorch OutputHead.forward (NCHW).

    params = (w1 (3,3,C,C), b1 (1,C), wt (2,2,C,C) [dh,dw,ci,co], bt (1,C),
              w2 (3,3,C,C), b2 (1,C)) in HWIO-style layouts.
    """
    w1, b1, wt, bt, w2, b2 = params
    N, H, W, C = x.shape
    H2, W2 = 2 * H, 2 * W
    if H2 % row_block != 0:
        row_block = H2
    n_chunks = H2 // row_block

    # Flatten + cast weights once, outside the kernel (bf16 MXU operands;
    # accumulation stays f32 inside the kernel).
    w1_mat = w1.reshape(9 * C, C).astype(jnp.bfloat16)              # (kh,kw,ci) x co
    wt_mat = jnp.transpose(wt, (2, 0, 1, 3)).reshape(C, 4 * C).astype(jnp.bfloat16)
    w2_mat = w2.reshape(9 * C, C).astype(jnp.bfloat16)
    b1 = b1.astype(jnp.float32)
    bt = bt.astype(jnp.float32)
    b2 = b2.astype(jnp.float32)

    # Explicit VMEM budget: single-buffered bf16 weights + f32 biases, f32
    # halo scratches, double-buffered I/O blocks, per-chunk im2col slabs and
    # f32 temporaries.  Clamp to a v7x-safe ceiling.
    itemsize = x.dtype.itemsize
    budget = (
        (2 * 9 * C * C + 4 * C * C) * 2 + 3 * C * 4
        + ((H + 2) * (W + 2) + (H2 + 2) * (W2 + 2)) * C * 4
        + 2 * H * W * C * itemsize
        + 2 * row_block * W2 * C * itemsize
        + (H * W * 9 * C + row_block * W2 * 9 * C) * 2
        + (H * W * 4 * C + H2 * W2 * C) * 4
    )
    vmem_limit = int(min(56 * 2 ** 20, max(32 * 2 ** 20, 2 * budget)))

    def weight_spec(shape):
        # Constant index_map -> DMA'd once, stays VMEM-resident; Buffered(1)
        # avoids allocating a useless second buffer for it.
        return pl.BlockSpec(shape, lambda n, r: (0, 0),
                            pipeline_mode=pl.Buffered(1))

    return pl.pallas_call(
        _output_head_kernel,
        out_shape=jax.ShapeDtypeStruct((N, H2, W2, C), x.dtype),
        grid=(N, n_chunks),
        in_specs=[
            pl.BlockSpec((1, H, W, C), lambda n, r: (n, 0, 0, 0)),
            weight_spec((9 * C, C)),        # w1
            weight_spec((1, C)),            # b1
            weight_spec((C, 4 * C)),        # wt
            weight_spec((1, C)),            # bt
            weight_spec((9 * C, C)),        # w2
            weight_spec((1, C)),            # b2
        ],
        out_specs=pl.BlockSpec((1, row_block, W2, C),
                               lambda n, r: (n, r, 0, 0)),
        scratch_shapes=[
            pltpu.VMEM((H + 2, W + 2, C), jnp.float32),
            pltpu.VMEM((H2 + 2, W2 + 2, C), jnp.float32),
        ],
        compiler_params=pltpu.CompilerParams(
            dimension_semantics=("parallel", "arbitrary"),
            vmem_limit_bytes=vmem_limit),
    )(x, w1_mat, b1, wt_mat, bt, w2_mat, b2)


# ---------------------------------------------------------------------------
# Pure-JAX reference (correctness check only)
# ---------------------------------------------------------------------------

def conv3x3_ref(x, w, b):
    y = jax.lax.conv_general_dilated(
        x, w, window_strides=(1, 1), padding=((1, 1), (1, 1)),
        dimension_numbers=('NHWC', 'HWIO', 'NHWC'))
    return y + b


def deconv2x2_ref(x, w, b):
    # out[n, 2h+dh, 2w+dw, o] = sum_i x[n,h,w,i] * w[dh,dw,i,o]
    y = jnp.einsum('nhwi,dkio->nhdwko', x, w)
    N, H, _, W, _, C = y.shape
    return y.reshape(N, 2 * H, 2 * W, C) + b


def output_head_ref(x, params):
    w1, b1, wt, bt, w2, b2 = params
    x = conv3x3_ref(x, w1, b1)
    x = deconv2x2_ref(x, wt, bt)
    x = conv3x3_ref(x, w2, b2)
    return x


# ---------------------------------------------------------------------------
# Main
# ---------------------------------------------------------------------------

if __name__ == "__main__":
    # Small deterministic stand-in for latent_size=768 (C kept a multiple of
    # 128 so activations/outputs are lane-dense, as at real model width).
    N, H, W, C = 2, 8, 8, 128
    key = jax.random.PRNGKey(0)
    kx, k1, kb1, kt, kbt, k2, kb2 = jax.random.split(key, 7)

    x = jax.random.normal(kx, (N, H, W, C), dtype=jnp.float32)

    scale_conv = 1.0 / np.sqrt(C * 3 * 3)
    scale_deconv = 1.0 / np.sqrt(C * 2 * 2)
    params = (
        jax.random.uniform(k1, (3, 3, C, C), jnp.float32, -scale_conv, scale_conv),
        jax.random.uniform(kb1, (1, C), jnp.float32, -scale_conv, scale_conv),
        jax.random.uniform(kt, (2, 2, C, C), jnp.float32, -scale_deconv, scale_deconv),
        jax.random.uniform(kbt, (1, C), jnp.float32, -scale_deconv, scale_deconv),
        jax.random.uniform(k2, (3, 3, C, C), jnp.float32, -scale_conv, scale_conv),
        jax.random.uniform(kb2, (1, C), jnp.float32, -scale_conv, scale_conv),
    )

    out = jax.block_until_ready(output_head(x, params))
    ref = jax.block_until_ready(output_head_ref(x, params))

    assert out.shape == (N, 2 * H, 2 * W, C), out.shape
    # bf16 MXU operands with f32 accumulation -> looser tolerance than pure f32.
    np.testing.assert_allclose(np.asarray(out), np.asarray(ref),
                               rtol=5e-2, atol=5e-2)

    print("KERNEL_OK")
</pallas_src>

<mosaic_0001>
module attributes {stable_mosaic.version = 11 : i64} {
  func.func @_output_head_kernel(%arg0: i32, %arg1: i32, %arg2: memref<1x8x8x128xf32, #tpu.memory_space<vmem>>, %arg3: memref<1152x128xbf16, #tpu.memory_space<vmem>>, %arg4: memref<1x128xf32, #tpu.memory_space<vmem>>, %arg5: memref<128x512xbf16, #tpu.memory_space<vmem>>, %arg6: memref<1x128xf32, #tpu.memory_space<vmem>>, %arg7: memref<1152x128xbf16, #tpu.memory_space<vmem>>, %arg8: memref<1x128xf32, #tpu.memory_space<vmem>>, %arg9: memref<1x8x16x128xf32, #tpu.memory_space<vmem>>, %arg10: memref<10x10x128xf32, #tpu.memory_space<vmem>>, %arg11: memref<18x18x128xf32, #tpu.memory_space<vmem>>) attributes {dimension_semantics = [#tpu.dimension_semantics<parallel>, #tpu.dimension_semantics<arbitrary>], iteration_bounds = array<i64: 2, 2>, scalar_prefetch = 0 : i64, scratch_operands = 2 : i64, tpu.core_type = #tpu.core_type<tc>, window_params = [{transform_indices = @transform_0, window_bounds = array<i64: 1, 8, 8, 128>}, {pipeline_mode = #tpu.pipeline_mode<synchronous>, transform_indices = @transform_1, window_bounds = array<i64: 1152, 128>}, {pipeline_mode = #tpu.pipeline_mode<synchronous>, transform_indices = @transform_2, window_bounds = array<i64: 1, 128>}, {pipeline_mode = #tpu.pipeline_mode<synchronous>, transform_indices = @transform_3, window_bounds = array<i64: 128, 512>}, {pipeline_mode = #tpu.pipeline_mode<synchronous>, transform_indices = @transform_4, window_bounds = array<i64: 1, 128>}, {pipeline_mode = #tpu.pipeline_mode<synchronous>, transform_indices = @transform_5, window_bounds = array<i64: 1152, 128>}, {pipeline_mode = #tpu.pipeline_mode<synchronous>, transform_indices = @transform_6, window_bounds = array<i64: 1, 128>}, {transform_indices = @transform_7, window_bounds = array<i64: 1, 8, 16, 128>}]} {
    %c0_i32 = arith.constant 0 : i32
    %0 = arith.cmpi eq, %arg1, %c0_i32 : i32
    %1 = arith.extui %0 : i1 to i32
    %c0_i32_0 = arith.constant 0 : i32
    %2 = arith.cmpi ne, %1, %c0_i32_0 : i32
    scf.if %2 {
      %cst_31 = arith.constant 0.000000e+00 : f32
      %60 = vector.broadcast %cst_31 : f32 to vector<1x10x128xf32>
      %c0_32 = arith.constant 0 : index
      %c0_33 = arith.constant 0 : index
      %c0_34 = arith.constant 0 : index
      %61 = vector.load %arg10[%c0_32, %c0_33, %c0_34] : memref<10x10x128xf32, #tpu.memory_space<vmem>>, vector<1x10x128xf32>
      tpu.vector_store %arg10[%c0_32, %c0_33, %c0_34], %60 {strides = array<i32>} : memref<10x10x128xf32, #tpu.memory_space<vmem>>, vector<1x10x128xf32>,
      %cst_35 = arith.constant 0.000000e+00 : f32
      %62 = vector.broadcast %cst_35 : f32 to vector<1x10x128xf32>
      %c9 = arith.constant 9 : index
      %c0_36 = arith.constant 0 : index
      %c0_37 = arith.constant 0 : index
      %63 = vector.load %arg10[%c9, %c0_36, %c0_37] : memref<10x10x128xf32, #tpu.memory_space<vmem>>, vector<1x10x128xf32>
      tpu.vector_store %arg10[%c9, %c0_36, %c0_37], %62 {strides = array<i32>} : memref<10x10x128xf32, #tpu.memory_space<vmem>>, vector<1x10x128xf32>,
      %cst_38 = arith.constant 0.000000e+00 : f32
      %64 = vector.broadcast %cst_38 : f32 to vector<10x1x128xf32>
      %c0_39 = arith.constant 0 : index
      %c0_40 = arith.constant 0 : index
      %c0_41 = arith.constant 0 : index
      %65 = vector.load %arg10[%c0_39, %c0_40, %c0_41] : memref<10x10x128xf32, #tpu.memory_space<vmem>>, vector<10x1x128xf32>
      tpu.vector_store %arg10[%c0_39, %c0_40, %c0_41], %64 {strides = array<i32>} : memref<10x10x128xf32, #tpu.memory_space<vmem>>, vector<10x1x128xf32>,
      %cst_42 = arith.constant 0.000000e+00 : f32
      %66 = vector.broadcast %cst_42 : f32 to vector<10x1x128xf32>
      %c0_43 = arith.constant 0 : index
      %c9_44 = arith.constant 9 : index
      %c0_45 = arith.constant 0 : index
      %67 = vector.load %arg10[%c0_43, %c9_44, %c0_45] : memref<10x10x128xf32, #tpu.memory_space<vmem>>, vector<10x1x128xf32>
      tpu.vector_store %arg10[%c0_43, %c9_44, %c0_45], %66 {strides = array<i32>} : memref<10x10x128xf32, #tpu.memory_space<vmem>>, vector<10x1x128xf32>,
      %cst_46 = arith.constant 0.000000e+00 : f32
      %68 = vector.broadcast %cst_46 : f32 to vector<1x18x128xf32>
      %c0_47 = arith.constant 0 : index
      %c0_48 = arith.constant 0 : index
      %c0_49 = arith.constant 0 : index
      %69 = vector.load %arg11[%c0_47, %c0_48, %c0_49] : memref<18x18x128xf32, #tpu.memory_space<vmem>>, vector<1x18x128xf32>
      tpu.vector_store %arg11[%c0_47, %c0_48, %c0_49], %68 {strides = array<i32>} : memref<18x18x128xf32, #tpu.memory_space<vmem>>, vector<1x18x128xf32>,
      %cst_50 = arith.constant 0.000000e+00 : f32
      %70 = vector.broadcast %cst_50 : f32 to vector<1x18x128xf32>
      %c17 = arith.constant 17 : index
      %c0_51 = arith.constant 0 : index
      %c0_52 = arith.constant 0 : index
      %71 = vector.load %arg11[%c17, %c0_51, %c0_52] : memref<18x18x128xf32, #tpu.memory_space<vmem>>, vector<1x18x128xf32>
      tpu.vector_store %arg11[%c17, %c0_51, %c0_52], %70 {strides = array<i32>} : memref<18x18x128xf32, #tpu.memory_space<vmem>>, vector<1x18x128xf32>,
      %cst_53 = arith.constant 0.000000e+00 : f32
      %72 = vector.broadcast %cst_53 : f32 to vector<18x1x128xf32>
      %c0_54 = arith.constant 0 : index
      %c0_55 = arith.constant 0 : index
      %c0_56 = arith.constant 0 : index
      %73 = vector.load %arg11[%c0_54, %c0_55, %c0_56] : memref<18x18x128xf32, #tpu.memory_space<vmem>>, vector<18x1x128xf32>
      tpu.vector_store %arg11[%c0_54, %c0_55, %c0_56], %72 {strides = array<i32>} : memref<18x18x128xf32, #tpu.memory_space<vmem>>, vector<18x1x128xf32>,
      %cst_57 = arith.constant 0.000000e+00 : f32
      %74 = vector.broadcast %cst_57 : f32 to vector<18x1x128xf32>
      %c0_58 = arith.constant 0 : index
      %c17_59 = arith.constant 17 : index
      %c0_60 = arith.constant 0 : index
      %75 = vector.load %arg11[%c0_58, %c17_59, %c0_60] : memref<18x18x128xf32, #tpu.memory_space<vmem>>, vector<18x1x128xf32>
      tpu.vector_store %arg11[%c0_58, %c17_59, %c0_60], %74 {strides = array<i32>} : memref<18x18x128xf32, #tpu.memory_space<vmem>>, vector<18x1x128xf32>,
      %c0_61 = arith.constant 0 : index
      %c0_62 = arith.constant 0 : index
      %c0_63 = arith.constant 0 : index
      %c0_64 = arith.constant 0 : index
      %76 = vector.load %arg2[%c0_61, %c0_62, %c0_63, %c0_64] : memref<1x8x8x128xf32, #tpu.memory_space<vmem>>, vector<1x8x8x128xf32>
      %77 = vector.shape_cast %76 : vector<1x8x8x128xf32> to vector<8x8x128xf32>
      %c1_65 = arith.constant 1 : index
      %c1_66 = arith.constant 1 : index
      %c0_67 = arith.constant 0 : index
      %78 = vector.load %arg10[%c1_65, %c1_66, %c0_67] : memref<10x10x128xf32, #tpu.memory_space<vmem>>, vector<8x8x128xf32>
      tpu.vector_store %arg10[%c1_65, %c1_66, %c0_67], %77 {strides = array<i32>} : memref<10x10x128xf32, #tpu.memory_space<vmem>>, vector<8x8x128xf32>,
      %c0_68 = arith.constant 0 : index
      %c0_69 = arith.constant 0 : index
      %c0_70 = arith.constant 0 : index
      %79 = vector.load %arg10[%c0_68, %c0_69, %c0_70] : memref<10x10x128xf32, #tpu.memory_space<vmem>>, vector<8x8x128xf32>
      %80 = arith.truncf %79 : vector<8x8x128xf32> to vector<8x8x128xbf16>
      %81 = vector.shape_cast %80 : vector<8x8x128xbf16> to vector<64x128xbf16>
      %c0_71 = arith.constant 0 : index
      %c1_72 = arith.constant 1 : index
      %c0_73 = arith.constant 0 : index
      %82 = vector.load %arg10[%c0_71, %c1_72, %c0_73] : memref<10x10x128xf32, #tpu.memory_space<vmem>>, vector<8x8x128xf32>
      %83 = arith.truncf %82 : vector<8x8x128xf32> to vector<8x8x128xbf16>
      %84 = vector.shape_cast %83 : vector<8x8x128xbf16> to vector<64x128xbf16>
      %c0_74 = arith.constant 0 : index
      %c2_75 = arith.constant 2 : index
      %c0_76 = arith.constant 0 : index
      %85 = vector.load %arg10[%c0_74, %c2_75, %c0_76] : memref<10x10x128xf32, #tpu.memory_space<vmem>>, vector<8x8x128xf32>
      %86 = arith.truncf %85 : vector<8x8x128xf32> to vector<8x8x128xbf16>
      %87 = vector.shape_cast %86 : vector<8x8x128xbf16> to vector<64x128xbf16>
      %c1_77 = arith.constant 1 : index
      %c0_78 = arith.constant 0 : index
      %c0_79 = arith.constant 0 : index
      %88 = vector.load %arg10[%c1_77, %c0_78, %c0_79] : memref<10x10x128xf32, #tpu.memory_space<vmem>>, vector<8x8x128xf32>
      %89 = arith.truncf %88 : vector<8x8x128xf32> to vector<8x8x128xbf16>
      %90 = vector.shape_cast %89 : vector<8x8x128xbf16> to vector<64x128xbf16>
      %c1_80 = arith.constant 1 : index
      %c1_81 = arith.constant 1 : index
      %c0_82 = arith.constant 0 : index
      %91 = vector.load %arg10[%c1_80, %c1_81, %c0_82] : memref<10x10x128xf32, #tpu.memory_space<vmem>>, vector<8x8x128xf32>
      %92 = arith.truncf %91 : vector<8x8x128xf32> to vector<8x8x128xbf16>
      %93 = vector.shape_cast %92 : vector<8x8x128xbf16> to vector<64x128xbf16>
      %c1_83 = arith.constant 1 : index
      %c2_84 = arith.constant 2 : index
      %c0_85 = arith.constant 0 : index
      %94 = vector.load %arg10[%c1_83, %c2_84, %c0_85] : memref<10x10x128xf32, #tpu.memory_space<vmem>>, vector<8x8x128xf32>
      %95 = arith.truncf %94 : vector<8x8x128xf32> to vector<8x8x128xbf16>
      %96 = vector.shape_cast %95 : vector<8x8x128xbf16> to vector<64x128xbf16>
      %c2_86 = arith.constant 2 : index
      %c0_87 = arith.constant 0 : index
      %c0_88 = arith.constant 0 : index
      %97 = vector.load %arg10[%c2_86, %c0_87, %c0_88] : memref<10x10x128xf32, #tpu.memory_space<vmem>>, vector<8x8x128xf32>
      %98 = arith.truncf %97 : vector<8x8x128xf32> to vector<8x8x128xbf16>
      %99 = vector.shape_cast %98 : vector<8x8x128xbf16> to vector<64x128xbf16>
      %c2_89 = arith.constant 2 : index
      %c1_90 = arith.constant 1 : index
      %c0_91 = arith.constant 0 : index
      %100 = vector.load %arg10[%c2_89, %c1_90, %c0_91] : memref<10x10x128xf32, #tpu.memory_space<vmem>>, vector<8x8x128xf32>
      %101 = arith.truncf %100 : vector<8x8x128xf32> to vector<8x8x128xbf16>
      %102 = vector.shape_cast %101 : vector<8x8x128xbf16> to vector<64x128xbf16>
      %c2_92 = arith.constant 2 : index
      %c2_93 = arith.constant 2 : index
      %c0_94 = arith.constant 0 : index
      %103 = vector.load %arg10[%c2_92, %c2_93, %c0_94] : memref<10x10x128xf32, #tpu.memory_space<vmem>>, vector<8x8x128xf32>
      %104 = arith.truncf %103 : vector<8x8x128xf32> to vector<8x8x128xbf16>
      %105 = vector.shape_cast %104 : vector<8x8x128xbf16> to vector<64x128xbf16>
      %106 = tpu.concatenate %81, %84, %87, %90, %93, %96, %99, %102, %105 in 1 : vector<64x128xbf16>, vector<64x128xbf16>, vector<64x128xbf16>, vector<64x128xbf16>, vector<64x128xbf16>, vector<64x128xbf16>, vector<64x128xbf16>, vector<64x128xbf16>, vector<64x128xbf16> -> vector<64x1152xbf16>
      %c0_95 = arith.constant 0 : index
      %c0_96 = arith.constant 0 : index
      %107 = vector.load %arg3[%c0_95, %c0_96] : memref<1152x128xbf16, #tpu.memory_space<vmem>>, vector<1152x128xbf16>
      %cst_97 = arith.constant dense<0.000000e+00> : vector<64x128xf32>
      %108 = tpu.matmul %106, %107, %cst_97 {dimension_numbers = #tpu.dot_dimension_numbers<[1], [0], [0], [1], [0, 0, 1, 1], [], []>} : vector<64x1152xbf16>, vector<1152x128xbf16>, vector<64x128xf32> -> vector<64x128xf32>
      %c0_98 = arith.constant 0 : index
      %c0_99 = arith.constant 0 : index
      %109 = vector.load %arg4[%c0_98, %c0_99] : memref<1x128xf32, #tpu.memory_space<vmem>>, vector<1x128xf32>
      %110 = vector.broadcast %109 : vector<1x128xf32> to vector<64x128xf32>
      %111 = arith.addf %108, %110 : vector<64x128xf32>
      %112 = arith.truncf %111 : vector<64x128xf32> to vector<64x128xbf16>
      %c0_100 = arith.constant 0 : index
      %c0_101 = arith.constant 0 : index
      %113 = vector.load %arg5[%c0_100, %c0_101] : memref<128x512xbf16, #tpu.memory_space<vmem>>, vector<128x512xbf16>
      %cst_102 = arith.constant dense<0.000000e+00> : vector<64x512xf32>
      %114 = tpu.matmul %112, %113, %cst_102 {dimension_numbers = #tpu.dot_dimension_numbers<[1], [0], [0], [1], [0, 0, 1, 1], [], []>} : vector<64x128xbf16>, vector<128x512xbf16>, vector<64x512xf32> -> vector<64x512xf32>
      %115 = vector.extract_strided_slice %114 {offsets = [0, 0], sizes = [64, 256], strides = [1, 1]} : vector<64x512xf32> to vector<64x256xf32>
      %116 = vector.shape_cast %115 : vector<64x256xf32> to vector<8x16x128xf32>
      %c0_103 = arith.constant 0 : index
      %c0_104 = arith.constant 0 : index
      %117 = vector.load %arg6[%c0_103, %c0_104] : memref<1x128xf32, #tpu.memory_space<vmem>>, vector<1x128xf32>
      %118 = vector.shape_cast %117 : vector<1x128xf32> to vector<1x1x128xf32>
      %119 = vector.broadcast %118 : vector<1x1x128xf32> to vector<8x16x128xf32>
      %120 = arith.addf %116, %119 : vector<8x16x128xf32>
      %121 = vector.extract_strided_slice %114 {offsets = [0, 256], sizes = [64, 256], strides = [1, 1]} : vector<64x512xf32> to vector<64x256xf32>
      %122 = vector.shape_cast %121 : vector<64x256xf32> to vector<8x16x128xf32>
      %c0_105 = arith.constant 0 : index
      %c0_106 = arith.constant 0 : index
      %123 = vector.load %arg6[%c0_105, %c0_106] : memref<1x128xf32, #tpu.memory_space<vmem>>, vector<1x128xf32>
      %124 = vector.shape_cast %123 : vector<1x128xf32> to vector<1x1x128xf32>
      %125 = vector.broadcast %124 : vector<1x1x128xf32> to vector<8x16x128xf32>
      %126 = arith.addf %122, %125 : vector<8x16x128xf32>
      %127 = vector.shape_cast %120 : vector<8x16x128xf32> to vector<8x1x16x128xf32>
      %128 = vector.shape_cast %126 : vector<8x16x128xf32> to vector<8x1x16x128xf32>
      %129 = tpu.concatenate %127, %128 in 1 : vector<8x1x16x128xf32>, vector<8x1x16x128xf32> -> vector<8x2x16x128xf32>
      %130 = vector.shape_cast %129 : vector<8x2x16x128xf32> to vector<16x16x128xf32>
      %c1_107 = arith.constant 1 : index
      %c1_108 = arith.constant 1 : index
      %c0_109 = arith.constant 0 : index
      %131 = vector.load %arg11[%c1_107, %c1_108, %c0_109] : memref<18x18x128xf32, #tpu.memory_space<vmem>>, vector<16x16x128xf32>
      tpu.vector_store %arg11[%c1_107, %c1_108, %c0_109], %130 {strides = array<i32>} : memref<18x18x128xf32, #tpu.memory_space<vmem>>, vector<16x16x128xf32>,
    } else {
    }
    %c8_i32 = arith.constant 8 : i32
    %3 = arith.muli %arg1, %c8_i32 : i32
    %4 = tpu.assume_multiple %3, 8 : i32
    %c0_i32_1 = arith.constant 0 : i32
    %5 = arith.addi %4, %c0_i32_1 : i32
    %6 = arith.index_cast %5 : i32 to index
    %c0 = arith.constant 0 : index
    %c0_2 = arith.constant 0 : index
    %7 = vector.load %arg11[%6, %c0, %c0_2] : memref<18x18x128xf32, #tpu.memory_space<vmem>>, vector<8x16x128xf32>
    %8 = arith.truncf %7 : vector<8x16x128xf32> to vector<8x16x128xbf16>
    %9 = vector.shape_cast %8 : vector<8x16x128xbf16> to vector<128x128xbf16>
    %c0_i32_3 = arith.constant 0 : i32
    %10 = arith.addi %4, %c0_i32_3 : i32
    %11 = arith.index_cast %10 : i32 to index
    %c1 = arith.constant 1 : index
    %c0_4 = arith.constant 0 : index
    %12 = vector.load %arg11[%11, %c1, %c0_4] : memref<18x18x128xf32, #tpu.memory_space<vmem>>, vector<8x16x128xf32>
    %13 = arith.truncf %12 : vector<8x16x128xf32> to vector<8x16x128xbf16>
    %14 = vector.shape_cast %13 : vector<8x16x128xbf16> to vector<128x128xbf16>
    %c0_i32_5 = arith.constant 0 : i32
    %15 = arith.addi %4, %c0_i32_5 : i32
    %16 = arith.index_cast %15 : i32 to index
    %c2 = arith.constant 2 : index
    %c0_6 = arith.constant 0 : index
    %17 = vector.load %arg11[%16, %c2, %c0_6] : memref<18x18x128xf32, #tpu.memory_space<vmem>>, vector<8x16x128xf32>
    %18 = arith.truncf %17 : vector<8x16x128xf32> to vector<8x16x128xbf16>
    %19 = vector.shape_cast %18 : vector<8x16x128xbf16> to vector<128x128xbf16>
    %c1_i32 = arith.constant 1 : i32
    %20 = arith.addi %4, %c1_i32 : i32
    %21 = arith.index_cast %20 : i32 to index
    %c0_7 = arith.constant 0 : index
    %c0_8 = arith.constant 0 : index
    %22 = vector.load %arg11[%21, %c0_7, %c0_8] : memref<18x18x128xf32, #tpu.memory_space<vmem>>, vector<8x16x128xf32>
    %23 = arith.truncf %22 : vector<8x16x128xf32> to vector<8x16x128xbf16>
    %24 = vector.shape_cast %23 : vector<8x16x128xbf16> to vector<128x128xbf16>
    %c1_i32_9 = arith.constant 1 : i32
    %25 = arith.addi %4, %c1_i32_9 : i32
    %26 = arith.index_cast %25 : i32 to index
    %c1_10 = arith.constant 1 : index
    %c0_11 = arith.constant 0 : index
    %27 = vector.load %arg11[%26, %c1_10, %c0_11] : memref<18x18x128xf32, #tpu.memory_space<vmem>>, vector<8x16x128xf32>
    %28 = arith.truncf %27 : vector<8x16x128xf32> to vector<8x16x128xbf16>
    %29 = vector.shape_cast %28 : vector<8x16x128xbf16> to vector<128x128xbf16>
    %c1_i32_12 = arith.constant 1 : i32
    %30 = arith.addi %4, %c1_i32_12 : i32
    %31 = arith.index_cast %30 : i32 to index
    %c2_13 = arith.constant 2 : index
    %c0_14 = arith.constant 0 : index
    %32 = vector.load %arg11[%31, %c2_13, %c0_14] : memref<18x18x128xf32, #tpu.memory_space<vmem>>, vector<8x16x128xf32>
    %33 = arith.truncf %32 : vector<8x16x128xf32> to vector<8x16x128xbf16>
    %34 = vector.shape_cast %33 : vector<8x16x128xbf16> to vector<128x128xbf16>
    %c2_i32 = arith.constant 2 : i32
    %35 = arith.addi %4, %c2_i32 : i32
    %36 = arith.index_cast %35 : i32 to index
    %c0_15 = arith.constant 0 : index
    %c0_16 = arith.constant 0 : index
    %37 = vector.load %arg11[%36, %c0_15, %c0_16] : memref<18x18x128xf32, #tpu.memory_space<vmem>>, vector<8x16x128xf32>
    %38 = arith.truncf %37 : vector<8x16x128xf32> to vector<8x16x128xbf16>
    %39 = vector.shape_cast %38 : vector<8x16x128xbf16> to vector<128x128xbf16>
    %c2_i32_17 = arith.constant 2 : i32
    %40 = arith.addi %4, %c2_i32_17 : i32
    %41 = arith.index_cast %40 : i32 to index
    %c1_18 = arith.constant 1 : index
    %c0_19 = arith.constant 0 : index
    %42 = vector.load %arg11[%41, %c1_18, %c0_19] : memref<18x18x128xf32, #tpu.memory_space<vmem>>, vector<8x16x128xf32>
    %43 = arith.truncf %42 : vector<8x16x128xf32> to vector<8x16x128xbf16>
    %44 = vector.shape_cast %43 : vector<8x16x128xbf16> to vector<128x128xbf16>
    %c2_i32_20 = arith.constant 2 : i32
    %45 = arith.addi %4, %c2_i32_20 : i32
    %46 = arith.index_cast %45 : i32 to index
    %c2_21 = arith.constant 2 : index
    %c0_22 = arith.constant 0 : index
    %47 = vector.load %arg11[%46, %c2_21, %c0_22] : memref<18x18x128xf32, #tpu.memory_space<vmem>>, vector<8x16x128xf32>
    %48 = arith.truncf %47 : vector<8x16x128xf32> to vector<8x16x128xbf16>
    %49 = vector.shape_cast %48 : vector<8x16x128xbf16> to vector<128x128xbf16>
    %50 = tpu.concatenate %9, %14, %19, %24, %29, %34, %39, %44, %49 in 1 : vector<128x128xbf16>, vector<128x128xbf16>, vector<128x128xbf16>, vector<128x128xbf16>, vector<128x128xbf16>, vector<128x128xbf16>, vector<128x128xbf16>, vector<128x128xbf16>, vector<128x128xbf16> -> vector<128x1152xbf16>
    %c0_23 = arith.constant 0 : index
    %c0_24 = arith.constant 0 : index
    %51 = vector.load %arg7[%c0_23, %c0_24] : memref<1152x128xbf16, #tpu.memory_space<vmem>>, vector<1152x128xbf16>
    %cst = arith.constant dense<0.000000e+00> : vector<128x128xf32>
    %52 = tpu.matmul %50, %51, %cst {dimension_numbers = #tpu.dot_dimension_numbers<[1], [0], [0], [1], [0, 0, 1, 1], [], []>} : vector<128x1152xbf16>, vector<1152x128xbf16>, vector<128x128xf32> -> vector<128x128xf32>
    %c0_25 = arith.constant 0 : index
    %c0_26 = arith.constant 0 : index
    %53 = vector.load %arg8[%c0_25, %c0_26] : memref<1x128xf32, #tpu.memory_space<vmem>>, vector<1x128xf32>
    %54 = vector.broadcast %53 : vector<1x128xf32> to vector<128x128xf32>
    %55 = arith.addf %52, %54 : vector<128x128xf32>
    %56 = vector.shape_cast %55 : vector<128x128xf32> to vector<8x16x128xf32>
    %c0_27 = arith.constant 0 : index
    %c0_28 = arith.constant 0 : index
    %c0_29 = arith.constant 0 : index
    %c0_30 = arith.constant 0 : index
    %57 = vector.load %arg9[%c0_27, %c0_28, %c0_29, %c0_30] : memref<1x8x16x128xf32, #tpu.memory_space<vmem>>, vector<1x8x16x128xf32>
    %58 = vector.shape_cast %57 : vector<1x8x16x128xf32> to vector<8x16x128xf32>
    %59 = vector.shape_cast %56 : vector<8x16x128xf32> to vector<1x8x16x128xf32>
    tpu.vector_store %arg9[%c0_27, %c0_28, %c0_29, %c0_30], %59 {strides = array<i32>} : memref<1x8x16x128xf32, #tpu.memory_space<vmem>>, vector<1x8x16x128xf32>,
    return
  }
  func.func @transform_0(%arg0: i32, %arg1: i32) -> (i32, i32, i32, i32) {
    %c0_i32 = arith.constant 0 : i32
    %c0_i32_0 = arith.constant 0 : i32
    %c0_i32_1 = arith.constant 0 : i32
    %c0_i32_2 = arith.constant 0 : i32
    return %arg0, %c0_i32, %c0_i32_0, %c0_i32_1 : i32, i32, i32, i32
  }
  func.func @transform_1(%arg0: i32, %arg1: i32) -> (i32, i32) {
    %c0_i32 = arith.constant 0 : i32
    %c0_i32_0 = arith.constant 0 : i32
    %c0_i32_1 = arith.constant 0 : i32
    return %c0_i32, %c0_i32_0 : i32, i32
  }
  func.func @transform_2(%arg0: i32, %arg1: i32) -> (i32, i32) {
    %c0_i32 = arith.constant 0 : i32
    %c0_i32_0 = arith.constant 0 : i32
    %c0_i32_1 = arith.constant 0 : i32
    return %c0_i32, %c0_i32_0 : i32, i32
  }
  func.func @transform_3(%arg0: i32, %arg1: i32) -> (i32, i32) {
    %c0_i32 = arith.constant 0 : i32
    %c0_i32_0 = arith.constant 0 : i32
    %c0_i32_1 = arith.constant 0 : i32
    return %c0_i32, %c0_i32_0 : i32, i32
  }
  func.func @transform_4(%arg0: i32, %arg1: i32) -> (i32, i32) {
    %c0_i32 = arith.constant 0 : i32
    %c0_i32_0 = arith.constant 0 : i32
    %c0_i32_1 = arith.constant 0 : i32
    return %c0_i32, %c0_i32_0 : i32, i32
  }
  func.func @transform_5(%arg0: i32, %arg1: i32) -> (i32, i32) {
    %c0_i32 = arith.constant 0 : i32
    %c0_i32_0 = arith.constant 0 : i32
    %c0_i32_1 = arith.constant 0 : i32
    return %c0_i32, %c0_i32_0 : i32, i32
  }
  func.func @transform_6(%arg0: i32, %arg1: i32) -> (i32, i32) {
    %c0_i32 = arith.constant 0 : i32
    %c0_i32_0 = arith.constant 0 : i32
    %c0_i32_1 = arith.constant 0 : i32
    return %c0_i32, %c0_i32_0 : i32, i32
  }
  func.func @transform_7(%arg0: i32, %arg1: i32) -> (i32, i32, i32, i32) {
    %c0_i32 = arith.constant 0 : i32
    %c0_i32_0 = arith.constant 0 : i32
    %c0_i32_1 = arith.constant 0 : i32
    return %arg0, %arg1, %c0_i32, %c0_i32_0 : i32, i32, i32, i32
  }
}

</mosaic_0001>

<llo_original>
// kernel: tpu_custom_call.1
$region0: #{tpu_custom_call.1}
  #allocation0 [shape = 'u32[]', space=smem, size = 0x4, offset = 0x4, fixed_abs, tag = 'smem constant byte address 0x4 - core index']
  #allocation1 [shape = 'u32[144,128]{1,0:T(1,128)}', space=vmem, size = 0x12000, scoped, tag = 'internal scratch']
  #allocation2 [shape = 'f32[10,10,128]{2,1,0:T(8,128)}', space=vmem, size = 0x14000, scoped, tag = 'scratch operand']
  #allocation3 [shape = 'f32[18,18,128]{2,1,0:T(8,128)}', space=vmem, size = 0x36000, scoped, tag = 'scratch operand']
  %s0 = inlined_call_operand.hbm [shape: f32[2,8,8,128], index: 0, kind: input, shape index: {}]
  %s1 = inlined_call_operand.hbm [shape: bf16[1152,128], index: 1, kind: input, shape index: {}]
  %s2 = inlined_call_operand.vmem [shape: f32[1,128], index: 2, kind: input, shape index: {}]
  %s3 = inlined_call_operand.hbm [shape: bf16[128,512], index: 3, kind: input, shape index: {}]
  %s4 = inlined_call_operand.vmem [shape: f32[1,128], index: 4, kind: input, shape index: {}]
  %s5 = inlined_call_operand.hbm [shape: bf16[1152,128], index: 5, kind: input, shape index: {}]
  %s6 = inlined_call_operand.vmem [shape: f32[1,128], index: 6, kind: input, shape index: {}]
  %s7 = inlined_call_operand.hbm [shape: f32[2,16,16,128], index: 7, kind: output, shape index: {}]
  %s8 = sld [smem:[#allocation0]]
  $region81: #{tpu_custom_call.1} parent=0
    _
  %s10 = ssub.s32 1, %s8
  %s11 = scalar_select 0, %s10, %s8
  $region1: #{tpu_custom_call.1} parent=0
    #allocation4 [shape = 'u8[65536]{0}', space=vmem, size = 0x10000, scoped, tag = 'input window, operand 0']
    #allocation5 [shape = 's32[2]{0}', space=sflag, size = 0x8, scoped, tag = 'scoped memory for tpu_custom_call.1']
    #allocation6 [shape = 's32[2]{0}', space=sflag, size = 0x8, scoped, tag = 'scoped memory for tpu_custom_call.1']
    #allocation7 [shape = 'u8[294912]{0}', space=vmem, size = 0x48000, scoped, tag = 'input window, operand 1, single buffered']
    #allocation8 [shape = 's32[1]{0}', space=sflag, size = 0x4, scoped, tag = 'scoped memory for tpu_custom_call.1']
    #allocation9 [shape = 'u8[131072]{0}', space=vmem, size = 0x20000, scoped, tag = 'input window, operand 3, single buffered']
    #allocation10 [shape = 'u8[294912]{0}', space=vmem, size = 0x48000, scoped, tag = 'input window, operand 5, single buffered']
    #allocation11 [shape = 's32[1]{0}', space=sflag, size = 0x4, scoped, tag = 'scoped memory for tpu_custom_call.1']
    #allocation12 [shape = 'u8[131072]{0}', space=vmem, size = 0x20000, scoped, tag = 'output window, operand 0']
    %12 = vsyncpa [#allocation5], 0
    %s13 = scalar_lea.sflag [#allocation5], 1
    %14 = vsyncpa %s13, 0
    %15 = vsyncpa [#allocation8], 0
    %16 = vsyncpa [#allocation11], 0
    %17 = vsyncpa [#allocation6], 0
    %s18 = scalar_lea.sflag [#allocation6], 1
    %19 = vsyncpa %s18, 0
    loop: start=0, step=1, limit=6
    $region2: #{tpu_custom_call.1} parent=1 // loop_pre_header
      _
    $region3: #{tpu_custom_call.1} parent=1 // loop_header
      %s21 = sphi 0, %s25
      %p22 = scmp.ge.s32.totalorder %s21, 6
      %s28 = sphi 0, %s40
      %s29 = sphi 0, %s36
      %s30 = sphi 0, %s28
      %s31 = sphi 0, %s29
      %s32 = sphi 0, %s30
      %s33 = sphi 0, %s31
      %s43 = sphi 0, %s45
      %s46 = sphi 0, %s43
      %s47 = sphi 0, %s46
      %s63 = sphi 0, %s47
      %s67 = sphi 0, %s67
      %s69 = sphi 0, %s67
      %s70 = sphi 0, %s69
      %s84 = sphi 0, %s70
      %s88 = sphi 0, %s88
      %s90 = sphi 0, %s88
      %s91 = sphi 0, %s90
      %s105 = sphi 0, %s91
      %s109 = sphi 0, %s109
      %s111 = sphi 0, %s109
      %s112 = sphi 0, %s111
      %s126 = sphi 0, %s112
      %s130 = sphi 0, %s130
      %s132 = sphi 0, %s130
      %s133 = sphi 0, %s132
      %s147 = sphi 0, %s133
      %s151 = sphi 0, %s151
      %s153 = sphi 0, %s151
      %s154 = sphi 0, %s153
      %s168 = sphi 0, %s154
      %s172 = sphi 0, %s172
      %s174 = sphi 0, %s172
      %s175 = sphi 0, %s174
      %s189 = sphi 0, %s175
      %s197 = sphi 0, %s199
      %s200 = sphi 0, %s197
      %s201 = sphi 0, %s200
      %s217 = sphi 0, %s201
    $region4: #{tpu_custom_call.1} parent=1 // loop_header_branch
      %24 = sbr.rel (%p22) target = $region8
    $region5: #{tpu_custom_call.1} parent=1 // loop_body
      %s26 = ssub.s32 %s21, 1
      %s27 = ssub.s32 %s21, 2
      %s34 = sadd.s32 1, %s29
      %p35 = scmp.ge.s32.totalorder %s34, 2
      %s36 = scalar_select %p35, 0, %s34
      %s37 = sadd.s32 1, %s28
      %s38 = scalar_select %p35, %s37, %s28
      %p39 = scmp.ge.s32.totalorder %s38, 2
      %s40 = scalar_select %p39, 0, %s38
      %s41 = ssub.s32 %s28, %s40
      %p42 = scmp.eq.s32.totalorder %s41, 0
      %s44 = sadd.s32 %s43, 1
      %s45 = scalar_select %p42, %s43, %s44
      %p48 = pneg %p42
      %p49 = scmp.eq.s32.totalorder %s21, 3
      %p50 = por %p48, %p49
      %p51 = scmp.ne.s32.totalorder %s43, %s46
      %p52 = scmp.eq.s32.totalorder %s21, 0
      %p53 = por %p51, %p52
      %p54 = scmp.ne.s32.totalorder %s43, %s46
      %p55 = scmp.eq.s32.totalorder %s26, 3
      %p56 = por %p54, %p55
      %p57 = scmp.ne.s32.totalorder %s46, %s47
      %p58 = scmp.eq.s32.totalorder %s26, 0
      %p59 = por %p57, %p58
      %p60 = scmp.ne.s32.totalorder %s46, %s47
      %p61 = scmp.eq.s32.totalorder %s27, 3
      %p62 = por %p60, %p61
      %p64 = scmp.ne.s32.totalorder %s47, %s63
      %p65 = scmp.eq.s32.totalorder %s27, 0
      %p66 = por %p64, %p65
      %s68 = sadd.s32 %s67, 1
      %p71 = scmp.eq.s32.totalorder %s21, 3
      %p72 = scmp.ne.s32.totalorder %s67, %s69
      %p73 = scmp.eq.s32.totalorder %s21, 0
      %p74 = por %p72, %p73
      %p75 = scmp.ne.s32.totalorder %s67, %s69
      %p76 = scmp.eq.s32.totalorder %s26, 3
      %p77 = por %p75, %p76
      %p78 = scmp.ne.s32.totalorder %s69, %s70
      %p79 = scmp.eq.s32.totalorder %s26, 0
      %p80 = por %p78, %p79
      %p81 = scmp.ne.s32.totalorder %s69, %s70
      %p82 = scmp.eq.s32.totalorder %s27, 3
      %p83 = por %p81, %p82
      %p85 = scmp.ne.s32.totalorder %s70, %s84
      %p86 = scmp.eq.s32.totalorder %s27, 0
      %p87 = por %p85, %p86
      %s89 = sadd.s32 %s88, 1
      %p92 = scmp.eq.s32.totalorder %s21, 3
      %p93 = scmp.ne.s32.totalorder %s88, %s90
      %p94 = scmp.eq.s32.totalorder %s21, 0
      %p95 = por %p93, %p94
      %p96 = scmp.ne.s32.totalorder %s88, %s90
      %p97 = scmp.eq.s32.totalorder %s26, 3
      %p98 = por %p96, %p97
      %p99 = scmp.ne.s32.totalorder %s90, %s91
      %p100 = scmp.eq.s32.totalorder %s26, 0
      %p101 = por %p99, %p100
      %p102 = scmp.ne.s32.totalorder %s90, %s91
      %p103 = scmp.eq.s32.totalorder %s27, 3
      %p104 = por %p102, %p103
      %p106 = scmp.ne.s32.totalorder %s91, %s105
      %p107 = scmp.eq.s32.totalorder %s27, 0
      %p108 = por %p106, %p107
      %s110 = sadd.s32 %s109, 1
      %p113 = scmp.eq.s32.totalorder %s21, 3
      %p114 = scmp.ne.s32.totalorder %s109, %s111
      %p115 = scmp.eq.s32.totalorder %s21, 0
      %p116 = por %p114, %p115
      %p117 = scmp.ne.s32.totalorder %s109, %s111
      %p118 = scmp.eq.s32.totalorder %s26, 3
      %p119 = por %p117, %p118
      %p120 = scmp.ne.s32.totalorder %s111, %s112
      %p121 = scmp.eq.s32.totalorder %s26, 0
      %p122 = por %p120, %p121
      %p123 = scmp.ne.s32.totalorder %s111, %s112
      %p124 = scmp.eq.s32.totalorder %s27, 3
      %p125 = por %p123, %p124
      %p127 = scmp.ne.s32.totalorder %s112, %s126
      %p128 = scmp.eq.s32.totalorder %s27, 0
      %p129 = por %p127, %p128
      %s131 = sadd.s32 %s130, 1
      %p134 = scmp.eq.s32.totalorder %s21, 3
      %p135 = scmp.ne.s32.totalorder %s130, %s132
      %p136 = scmp.eq.s32.totalorder %s21, 0
      %p137 = por %p135, %p136
      %p138 = scmp.ne.s32.totalorder %s130, %s132
      %p139 = scmp.eq.s32.totalorder %s26, 3
      %p140 = por %p138, %p139
      %p141 = scmp.ne.s32.totalorder %s132, %s133
      %p142 = scmp.eq.s32.totalorder %s26, 0
      %p143 = por %p141, %p142
      %p144 = scmp.ne.s32.totalorder %s132, %s133
      %p145 = scmp.eq.s32.totalorder %s27, 3
      %p146 = por %p144, %p145
      %p148 = scmp.ne.s32.totalorder %s133, %s147
      %p149 = scmp.eq.s32.totalorder %s27, 0
      %p150 = por %p148, %p149
      %s152 = sadd.s32 %s151, 1
      %p155 = scmp.eq.s32.totalorder %s21, 3
      %p156 = scmp.ne.s32.totalorder %s151, %s153
      %p157 = scmp.eq.s32.totalorder %s21, 0
      %p158 = por %p156, %p157
      %p159 = scmp.ne.s32.totalorder %s151, %s153
      %p160 = scmp.eq.s32.totalorder %s26, 3
      %p161 = por %p159, %p160
      %p162 = scmp.ne.s32.totalorder %s153, %s154
      %p163 = scmp.eq.s32.totalorder %s26, 0
      %p164 = por %p162, %p163
      %p165 = scmp.ne.s32.totalorder %s153, %s154
      %p166 = scmp.eq.s32.totalorder %s27, 3
      %p167 = por %p165, %p166
      %p169 = scmp.ne.s32.totalorder %s154, %s168
      %p170 = scmp.eq.s32.totalorder %s27, 0
      %p171 = por %p169, %p170
      %s173 = sadd.s32 %s172, 1
      %p176 = scmp.eq.s32.totalorder %s21, 3
      %p177 = scmp.ne.s32.totalorder %s172, %s174
      %p178 = scmp.eq.s32.totalorder %s21, 0
      %p179 = por %p177, %p178
      %p180 = scmp.ne.s32.totalorder %s172, %s174
      %p181 = scmp.eq.s32.totalorder %s26, 3
      %p182 = por %p180, %p181
      %p183 = scmp.ne.s32.totalorder %s174, %s175
      %p184 = scmp.eq.s32.totalorder %s26, 0
      %p185 = por %p183, %p184
      %p186 = scmp.ne.s32.totalorder %s174, %s175
      %p187 = scmp.eq.s32.totalorder %s27, 3
      %p188 = por %p186, %p187
      %p190 = scmp.ne.s32.totalorder %s175, %s189
      %p191 = scmp.eq.s32.totalorder %s27, 0
      %p192 = por %p190, %p191
      %s193 = ssub.s32 %s28, %s40
      %s194 = ssub.s32 %s29, %s36
      %s195 = sor.u32 %s193, %s194
      %p196 = scmp.eq.s32.totalorder %s195, 0
      %s198 = sadd.s32 %s197, 1
      %s199 = scalar_select %p196, %s197, %s198
      %p202 = pneg %p196
      %p203 = scmp.eq.s32.totalorder %s21, 3
      %p204 = por %p202, %p203
      %p205 = scmp.ne.s32.totalorder %s197, %s200
      %p206 = scmp.eq.s32.totalorder %s21, 0
      %p207 = por %p205, %p206
      %p208 = scmp.ne.s32.totalorder %s197, %s200
      %p209 = scmp.eq.s32.totalorder %s26, 3
      %p210 = por %p208, %p209
      %p211 = scmp.ne.s32.totalorder %s200, %s201
      %p212 = scmp.eq.s32.totalorder %s26, 0
      %p213 = por %p211, %p212
      %p214 = scmp.ne.s32.totalorder %s200, %s201
      %p215 = scmp.eq.s32.totalorder %s27, 3
      %p216 = por %p214, %p215
      %p218 = scmp.ne.s32.totalorder %s201, %s217
      %p219 = scmp.eq.s32.totalorder %s27, 0
      %p220 = por %p218, %p219
      %p221 = scmp.le.s32.totalorder 1, %s21
      %p222 = scmp.lt.s32.totalorder %s21, 5
      %p223 = pnand %p221, %p222
      %p224 = pneg %p223
      // Predicated region
      $region9: #{tpu_custom_call.1} parent=5 // pred_check
        _
      $region10: #{tpu_custom_call.1} parent=5 // pred_check_branch
        %226 = sbr.rel (%p223) target = $region12
      $region11: #{tpu_custom_call.1} parent=5 // pred_region
        %s227 = ssub.s32 %s21, 1
        // Predicated region
        $region13: #{tpu_custom_call.1} parent=11 // pred_check
          %p228 = pneg %p80
        $region14: #{tpu_custom_call.1} parent=11 // pred_check_branch
          %230 = sbr.rel (%p228) target = $region16
        $region15: #{tpu_custom_call.1} parent=11 // pred_region
          %s232 = ssub.s32 9216, 9216
          %233 = vsyncadd [#allocation8], %s232
          %s234 = sshll.u32 [#allocation7], 4
          %s235 = int_to_ptr.vmem [resolvable:$true] %s234
          %240 = dma.hbm_to_vmem [thread:$0]  %s1, 9216, %s235, [#allocation8], 64, 64, 4
        $region16: #{tpu_custom_call.1} parent=11 // pred_fallthru
          _
        // Predicated region
        $region17: #{tpu_custom_call.1} parent=11 // pred_check
          %p241 = pneg %p101
        $region18: #{tpu_custom_call.1} parent=11 // pred_check_branch
          %243 = sbr.rel (%p241) target = $region20
        $region19: #{tpu_custom_call.1} parent=11 // pred_region
          _
        $region20: #{tpu_custom_call.1} parent=11 // pred_fallthru
          _
        // Predicated region
        $region21: #{tpu_custom_call.1} parent=11 // pred_check
          %p244 = pneg %p122
        $region22: #{tpu_custom_call.1} parent=11 // pred_check_branch
          %246 = sbr.rel (%p244) target = $region24
        $region23: #{tpu_custom_call.1} parent=11 // pred_region
          %s248 = ssub.s32 4096, 4096
          %249 = vsyncadd [#allocation8], %s248
          %s250 = sshll.u32 [#allocation9], 4
          %s251 = int_to_ptr.vmem [resolvable:$true] %s250
          %256 = dma.hbm_to_vmem [thread:$0]  %s3, 4096, %s251, [#allocation8], 256, 256, 16
        $region24: #{tpu_custom_call.1} parent=11 // pred_fallthru
          _
        // Predicated region
        $region25: #{tpu_custom_call.1} parent=11 // pred_check
          %p257 = pneg %p143
        $region26: #{tpu_custom_call.1} parent=11 // pred_check_branch
          %259 = sbr.rel (%p257) target = $region28
        $region27: #{tpu_custom_call.1} parent=11 // pred_region
          _
        $region28: #{tpu_custom_call.1} parent=11 // pred_fallthru
          _
        // Predicated region
        $region29: #{tpu_custom_call.1} parent=11 // pred_check
          %p260 = pneg %p164
        $region30: #{tpu_custom_call.1} parent=11 // pred_check_branch
          %262 = sbr.rel (%p260) target = $region32
        $region31: #{tpu_custom_call.1} parent=11 // pred_region
          %s264 = ssub.s32 9216, 9216
          %265 = vsyncadd [#allocation11], %s264
          %s266 = sshll.u32 [#allocation10], 4
          %s267 = int_to_ptr.vmem [resolvable:$true] %s266
          %272 = dma.hbm_to_vmem [thread:$0]  %s5, 9216, %s267, [#allocation11], 64, 64, 4
        $region32: #{tpu_custom_call.1} parent=11 // pred_fallthru
          _
        // Predicated region
        $region33: #{tpu_custom_call.1} parent=11 // pred_check
          %p273 = pneg %p185
        $region34: #{tpu_custom_call.1} parent=11 // pred_check_branch
          %275 = sbr.rel (%p273) target = $region36
        $region35: #{tpu_custom_call.1} parent=11 // pred_region
          _
        $region36: #{tpu_custom_call.1} parent=11 // pred_fallthru
          _
      $region12: #{tpu_custom_call.1} parent=5 // pred_fallthru
        _
      %p276 = scmp.lt.s32.totalorder %s21, 4
      // Predicated region
      $region37: #{tpu_custom_call.1} parent=5 // pred_check
        %p277 = pneg %p276
      $region38: #{tpu_custom_call.1} parent=5 // pred_check_branch
        %279 = sbr.rel (%p277) target = $region40
      $region39: #{tpu_custom_call.1} parent=5 // pred_region
        // Predicated region
        $region41: #{tpu_custom_call.1} parent=39 // pred_check
          %p280 = pneg %p53
        $region42: #{tpu_custom_call.1} parent=39 // pred_check_branch
          %282 = sbr.rel (%p280) target = $region44
        $region43: #{tpu_custom_call.1} parent=39 // pred_region
          %s283 = sand.u32 %s43, 1
          %s284 = scalar_lea.sflag [#allocation5], %s283
          %s285 = sand.u32 %s43, 1
          %s286 = smul.addr %s285, 64
          %s287 = scalar_lea.vmem [#allocation4], %s286
          %s289 = ssub.s32 1024, 1024
          %290 = vsyncadd %s284, %s289
          %s291 = smul.addr %s28, 8
          %s292 = smul.addr %s291, 128
          %s293 = scalar_lea.hbm %s0, %s292
          %s294 = sshll.u32 %s287, 4
          %s295 = int_to_ptr.vmem [resolvable:$true] %s294
          %300 = dma.hbm_to_vmem [thread:$0]  %s293, 1024, %s295, %s284, 128, 128, 8
        $region44: #{tpu_custom_call.1} parent=39 // pred_fallthru
          _
      $region40: #{tpu_custom_call.1} parent=5 // pred_fallthru
        _
      %p301 = scmp.le.s32.totalorder 1, %s21
      %p302 = scmp.lt.s32.totalorder %s21, 5
      %p303 = pnand %p301, %p302
      %p304 = pneg %p303
      // Predicated region
      $region45: #{tpu_custom_call.1} parent=5 // pred_check
        _
      $region46: #{tpu_custom_call.1} parent=5 // pred_check_branch
        %306 = sbr.rel (%p303) target = $region48
      $region47: #{tpu_custom_call.1} parent=5 // pred_region
        %s307 = ssub.s32 %s21, 1
        %s308 = sand.u32 %s46, 1
        %s309 = scalar_lea.sflag [#allocation5], %s308
        %s310 = sand.u32 %s46, 1
        %s311 = smul.addr %s310, 64
        %s312 = scalar_lea.vmem [#allocation4], %s311
        // Predicated region
        $region49: #{tpu_custom_call.1} parent=47 // pred_check
          %p313 = pneg %p59
        $region50: #{tpu_custom_call.1} parent=47 // pred_check_branch
          %315 = sbr.rel (%p313) target = $region52
        $region51: #{tpu_custom_call.1} parent=47 // pred_region
          %316 = dma.done %s309, 1024
        $region52: #{tpu_custom_call.1} parent=47 // pred_fallthru
          _
        // Predicated region
        $region53: #{tpu_custom_call.1} parent=47 // pred_check
          %p317 = pneg %p80
        $region54: #{tpu_custom_call.1} parent=47 // pred_check_branch
          %319 = sbr.rel (%p317) target = $region56
        $region55: #{tpu_custom_call.1} parent=47 // pred_region
          %320 = dma.done [#allocation8], 9216
        $region56: #{tpu_custom_call.1} parent=47 // pred_fallthru
          _
        // Predicated region
        $region57: #{tpu_custom_call.1} parent=47 // pred_check
          %p321 = pneg %p122
        $region58: #{tpu_custom_call.1} parent=47 // pred_check_branch
          %323 = sbr.rel (%p321) target = $region60
        $region59: #{tpu_custom_call.1} parent=47 // pred_region
          %324 = dma.done [#allocation8], 4096
        $region60: #{tpu_custom_call.1} parent=47 // pred_fallthru
          _
        // Predicated region
        $region61: #{tpu_custom_call.1} parent=47 // pred_check
          %p325 = pneg %p164
        $region62: #{tpu_custom_call.1} parent=47 // pred_check_branch
          %327 = sbr.rel (%p325) target = $region64
        $region63: #{tpu_custom_call.1} parent=47 // pred_region
          %328 = dma.done [#allocation11], 9216
        $region64: #{tpu_custom_call.1} parent=47 // pred_fallthru
          _
        %s329 = sand.u32 %s46, 1
        %s330 = scalar_lea.sflag [#allocation5], %s329
        %s331 = sand.u32 %s46, 1
        %s332 = smul.addr %s331, 64
        %s333 = scalar_lea.vmem [#allocation4], %s332
        %p334 = pneg %p59
        %p335 = pneg %p56
        %p336 = pneg %p80
        %p337 = pneg %p77
        %p338 = pneg %p101
        %p339 = pneg %p98
        %p340 = pneg %p122
        %p341 = pneg %p119
        %p342 = pneg %p143
        %p343 = pneg %p140
        %p344 = pneg %p164
        %p345 = pneg %p161
        %p346 = pneg %p185
        %p347 = pneg %p182
        %p348 = pneg %p213
        %p349 = pneg %p210
        %s350 = sand.u32 %s200, 1
        %s351 = scalar_lea.sflag [#allocation6], %s350
        %s352 = sand.u32 %s200, 1
        %s353 = smul.addr %s352, 128
        %s354 = scalar_lea.vmem [#allocation12], %s353
        %s355 = smul.u32 8, %s31
        %p357 = scmp.eq.s32.totalorder %s31, 0
        // Predicated region
        $region65: #{tpu_custom_call.1} parent=47 // pred_check
          %p358 = pneg %p357
        $region66: #{tpu_custom_call.1} parent=47 // pred_check_branch
          %360 = sbr.rel (%p358) target = $region68
        $region67: #{tpu_custom_call.1} parent=47 // pred_region
          %361 = vst [vmem:[#allocation2] sm:$0xff] 0.0
          %362 = vst [vmem:[#allocation2 + $0x8] sm:$0x3] 0.0
          %s363 = scalar_lea.vmem [#allocation2], 144
          %364 = vst [vmem:[%s363] sm:$0xff] 0.0
          %365 = vst [vmem:[%s363 + $0x8] sm:$0x3] 0.0
          %366 = vst [vmem:[#allocation2] sm:$0x1] 0.0
          %367 = vst [vmem:[#allocation2 + $0x10] sm:$0x1] 0.0
          %368 = vst [vmem:[#allocation2 + $0x20] sm:$0x1] 0.0
          %369 = vst [vmem:[#allocation2 + $0x30] sm:$0x1] 0.0
          %370 = vst [vmem:[#allocation2 + $0x40] sm:$0x1] 0.0
          %371 = vst [vmem:[#allocation2 + $0x50] sm:$0x1] 0.0
          %372 = vst [vmem:[#allocation2 + $0x60] sm:$0x1] 0.0
          %373 = vst [vmem:[#allocation2 + $0x70] sm:$0x1] 0.0
          %374 = vst [vmem:[#allocation2 + $0x80] sm:$0x1] 0.0
          %375 = vst [vmem:[#allocation2 + $0x90] sm:$0x1] 0.0
          %376 = vst [vmem:[#allocation2 + $0x9] sm:$0x1] 0.0
          %377 = vst [vmem:[#allocation2 + $0x19] sm:$0x1] 0.0
          %378 = vst [vmem:[#allocation2 + $0x29] sm:$0x1] 0.0
          %379 = vst [vmem:[#allocation2 + $0x39] sm:$0x1] 0.0
          %380 = vst [vmem:[#allocation2 + $0x49] sm:$0x1] 0.0
          %381 = vst [vmem:[#allocation2 + $0x59] sm:$0x1] 0.0
          %382 = vst [vmem:[#allocation2 + $0x69] sm:$0x1] 0.0
          %383 = vst [vmem:[#allocation2 + $0x79] sm:$0x1] 0.0
          %384 = vst [vmem:[#allocation2 + $0x89] sm:$0x1] 0.0
          %385 = vst [vmem:[#allocation2 + $0x99] sm:$0x1] 0.0
          %386 = vst [vmem:[#allocation3] sm:$0xff] 0.0
          %387 = vst [vmem:[#allocation3 + $0x8] sm:$0xff] 0.0
          %388 = vst [vmem:[#allocation3 + $0x10] sm:$0x3] 0.0
          %s389 = scalar_lea.vmem [#allocation3], 408
          %390 = vst [vmem:[%s389] sm:$0xff] 0.0
          %391 = vst [vmem:[%s389 + $0x8] sm:$0xff] 0.0
          %392 = vst [vmem:[%s389 + $0x10] sm:$0x3] 0.0
          %393 = vst [vmem:[#allocation3] sm:$0x1] 0.0
          %394 = vst [vmem:[#allocation3 + $0x18] sm:$0x1] 0.0
          %395 = vst [vmem:[#allocation3 + $0x30] sm:$0x1] 0.0
          %396 = vst [vmem:[#allocation3 + $0x48] sm:$0x1] 0.0
          %397 = vst [vmem:[#allocation3 + $0x60] sm:$0x1] 0.0
          %398 = vst [vmem:[#allocation3 + $0x78] sm:$0x1] 0.0
          %399 = vst [vmem:[#allocation3 + $0x90] sm:$0x1] 0.0
          %400 = vst [vmem:[#allocation3 + $0xa8] sm:$0x1] 0.0
          %401 = vst [vmem:[#allocation3 + $0xc0] sm:$0x1] 0.0
          %402 = vst [vmem:[#allocation3 + $0xd8] sm:$0x1] 0.0
          %403 = vst [vmem:[#allocation3 + $0xf0] sm:$0x1] 0.0
          %404 = vst [vmem:[#allocation3 + $0x108] sm:$0x1] 0.0
          %405 = vst [vmem:[#allocation3 + $0x120] sm:$0x1] 0.0
          %406 = vst [vmem:[#allocation3 + $0x138] sm:$0x1] 0.0
          %407 = vst [vmem:[#allocation3 + $0x150] sm:$0x1] 0.0
          %408 = vst [vmem:[#allocation3 + $0x168] sm:$0x1] 0.0
          %409 = vst [vmem:[#allocation3 + $0x180] sm:$0x1] 0.0
          %410 = vst [vmem:[#allocation3 + $0x198] sm:$0x1] 0.0
          %411 = vst [vmem:[#allocation3 + $0x11] sm:$0x1] 0.0
          %412 = vst [vmem:[#allocation3 + $0x29] sm:$0x1] 0.0
          %413 = vst [vmem:[#allocation3 + $0x41] sm:$0x1] 0.0
          %414 = vst [vmem:[#allocation3 + $0x59] sm:$0x1] 0.0
          %415 = vst [vmem:[#allocation3 + $0x71] sm:$0x1] 0.0
          %416 = vst [vmem:[#allocation3 + $0x89] sm:$0x1] 0.0
          %417 = vst [vmem:[#allocation3 + $0xa1] sm:$0x1] 0.0
          %418 = vst [vmem:[#allocation3 + $0xb9] sm:$0x1] 0.0
          %419 = vst [vmem:[#allocation3 + $0xd1] sm:$0x1] 0.0
          %420 = vst [vmem:[#allocation3 + $0xe9] sm:$0x1] 0.0
          %421 = vst [vmem:[#allocation3 + $0x101] sm:$0x1] 0.0
          %422 = vst [vmem:[#allocation3 + $0x119] sm:$0x1] 0.0
          %423 = vst [vmem:[#allocation3 + $0x131] sm:$0x1] 0.0
          %424 = vst [vmem:[#allocation3 + $0x149] sm:$0x1] 0.0
          %425 = vst [vmem:[#allocation3 + $0x161] sm:$0x1] 0.0
          %426 = vst [vmem:[#allocation3 + $0x179] sm:$0x1] 0.0
          %427 = vst [vmem:[#allocation3 + $0x191] sm:$0x1] 0.0
          %428 = vst [vmem:[#allocation3 + $0x1a9] sm:$0x1] 0.0
          %v429 = vld [vmem:[%s312] sm:$0xff]
          %v430 = vld [vmem:[%s312 + $0x8] sm:$0xff]
          %v431 = vld [vmem:[%s312 + $0x10] sm:$0xff]
          %v432 = vld [vmem:[%s312 + $0x18] sm:$0xff]
          %v433 = vld [vmem:[%s312 + $0x20] sm:$0xff]
          %v434 = vld [vmem:[%s312 + $0x28] sm:$0xff]
          %v435 = vld [vmem:[%s312 + $0x30] sm:$0xff]
          %v436 = vld [vmem:[%s312 + $0x38] sm:$0xff]
          %s437 = scalar_lea.vmem [#allocation2], 16
          %438 = vst [vmem:[%s437 + $0x1] sm:$0xff] %v429
          %439 = vst [vmem:[%s437 + $0x11] sm:$0xff] %v430
          %440 = vst [vmem:[%s437 + $0x21] sm:$0xff] %v431
          %441 = vst [vmem:[%s437 + $0x31] sm:$0xff] %v432
          %442 = vst [vmem:[%s437 + $0x41] sm:$0xff] %v433
          %443 = vst [vmem:[%s437 + $0x51] sm:$0xff] %v434
          %444 = vst [vmem:[%s437 + $0x61] sm:$0xff] %v435
          %445 = vst [vmem:[%s437 + $0x71] sm:$0xff] %v436
          %v446 = vld [vmem:[#allocation2] sm:$0xff]
          %v447 = vld [vmem:[#allocation2 + $0x10] sm:$0xff]
          %v448 = vld [vmem:[#allocation2 + $0x20] sm:$0xff]
          %v449 = vld [vmem:[#allocation2 + $0x30] sm:$0xff]
          %v450 = vld [vmem:[#allocation2 + $0x40] sm:$0xff]
          %v451 = vld [vmem:[#allocation2 + $0x50] sm:$0xff]
          %v452 = vld [vmem:[#allocation2 + $0x60] sm:$0xff]
          %v453 = vld [vmem:[#allocation2 + $0x70] sm:$0xff]
          %v454 = vpack.c.bf16 %v446, %v446
          %v455 = vpack.c.bf16 %v447, %v447
          %v456 = vpack.c.bf16 %v448, %v448
          %v457 = vpack.c.bf16 %v449, %v449
          %v458 = vpack.c.bf16 %v450, %v450
          %v459 = vpack.c.bf16 %v451, %v451
          %v460 = vpack.c.bf16 %v452, %v452
          %v461 = vpack.c.bf16 %v453, %v453
          %v462 = vld [vmem:[#allocation2 + $0x1] sm:$0xff]
          %v463 = vld [vmem:[#allocation2 + $0x11] sm:$0xff]
          %v464 = vld [vmem:[#allocation2 + $0x21] sm:$0xff]
          %v465 = vld [vmem:[#allocation2 + $0x31] sm:$0xff]
          %v466 = vld [vmem:[#allocation2 + $0x41] sm:$0xff]
          %v467 = vld [vmem:[#allocation2 + $0x51] sm:$0xff]
          %v468 = vld [vmem:[#allocation2 + $0x61] sm:$0xff]
          %v469 = vld [vmem:[#allocation2 + $0x71] sm:$0xff]
          %v470 = vpack.c.bf16 %v462, %v462
          %v471 = vpack.c.bf16 %v463, %v463
          %v472 = vpack.c.bf16 %v464, %v464
          %v473 = vpack.c.bf16 %v465, %v465
          %v474 = vpack.c.bf16 %v466, %v466
          %v475 = vpack.c.bf16 %v467, %v467
          %v476 = vpack.c.bf16 %v468, %v468
          %v477 = vpack.c.bf16 %v469, %v469
          %v478 = vld [vmem:[#allocation2 + $0x2] sm:$0xff]
          %v479 = vld [vmem:[#allocation2 + $0x12] sm:$0xff]
          %v480 = vld [vmem:[#allocation2 + $0x22] sm:$0xff]
          %v481 = vld [vmem:[#allocation2 + $0x32] sm:$0xff]
          %v482 = vld [vmem:[#allocation2 + $0x42] sm:$0xff]
          %v483 = vld [vmem:[#allocation2 + $0x52] sm:$0xff]
          %v484 = vld [vmem:[#allocation2 + $0x62] sm:$0xff]
          %v485 = vld [vmem:[#allocation2 + $0x72] sm:$0xff]
          %v486 = vpack.c.bf16 %v478, %v478
          %v487 = vpack.c.bf16 %v479, %v479
          %v488 = vpack.c.bf16 %v480, %v480
          %v489 = vpack.c.bf16 %v481, %v481
          %v490 = vpack.c.bf16 %v482, %v482
          %v491 = vpack.c.bf16 %v483, %v483
          %v492 = vpack.c.bf16 %v484, %v484
          %v493 = vpack.c.bf16 %v485, %v485
          %v494 = vld [vmem:[%s437] sm:$0xff]
          %v495 = vld [vmem:[%s437 + $0x10] sm:$0xff]
          %v496 = vld [vmem:[%s437 + $0x20] sm:$0xff]
          %v497 = vld [vmem:[%s437 + $0x30] sm:$0xff]
          %v498 = vld [vmem:[%s437 + $0x40] sm:$0xff]
          %v499 = vld [vmem:[%s437 + $0x50] sm:$0xff]
          %v500 = vld [vmem:[%s437 + $0x60] sm:$0xff]
          %v501 = vld [vmem:[%s437 + $0x70] sm:$0xff]
          %v502 = vpack.c.bf16 %v494, %v494
          %v503 = vpack.c.bf16 %v495, %v495
          %v504 = vpack.c.bf16 %v496, %v496
          %v505 = vpack.c.bf16 %v497, %v497
          %v506 = vpack.c.bf16 %v498, %v498
          %v507 = vpack.c.bf16 %v499, %v499
          %v508 = vpack.c.bf16 %v500, %v500
          %v509 = vpack.c.bf16 %v501, %v501
          %v510 = vld [vmem:[%s437 + $0x1] sm:$0xff]
          %v511 = vld [vmem:[%s437 + $0x11] sm:$0xff]
          %v512 = vld [vmem:[%s437 + $0x21] sm:$0xff]
          %v513 = vld [vmem:[%s437 + $0x31] sm:$0xff]
          %v514 = vld [vmem:[%s437 + $0x41] sm:$0xff]
          %v515 = vld [vmem:[%s437 + $0x51] sm:$0xff]
          %v516 = vld [vmem:[%s437 + $0x61] sm:$0xff]
          %v517 = vld [vmem:[%s437 + $0x71] sm:$0xff]
          %v518 = vpack.c.bf16 %v510, %v510
          %v519 = vpack.c.bf16 %v511, %v511
          %v520 = vpack.c.bf16 %v512, %v512
          %v521 = vpack.c.bf16 %v513, %v513
          %v522 = vpack.c.bf16 %v514, %v514
          %v523 = vpack.c.bf16 %v515, %v515
          %v524 = vpack.c.bf16 %v516, %v516
          %v525 = vpack.c.bf16 %v517, %v517
          %v526 = vld [vmem:[%s437 + $0x2] sm:$0xff]
          %v527 = vld [vmem:[%s437 + $0x12] sm:$0xff]
          %v528 = vld [vmem:[%s437 + $0x22] sm:$0xff]
          %v529 = vld [vmem:[%s437 + $0x32] sm:$0xff]
          %v530 = vld [vmem:[%s437 + $0x42] sm:$0xff]
          %v531 = vld [vmem:[%s437 + $0x52] sm:$0xff]
          %v532 = vld [vmem:[%s437 + $0x62] sm:$0xff]
          %v533 = vld [vmem:[%s437 + $0x72] sm:$0xff]
          %v534 = vpack.c.bf16 %v526, %v526
          %v535 = vpack.c.bf16 %v527, %v527
          %v536 = vpack.c.bf16 %v528, %v528
          %v537 = vpack.c.bf16 %v529, %v529
          %v538 = vpack.c.bf16 %v530, %v530
          %v539 = vpack.c.bf16 %v531, %v531
          %v540 = vpack.c.bf16 %v532, %v532
          %v541 = vpack.c.bf16 %v533, %v533
          %s542 = scalar_lea.vmem [#allocation2], 32
          %v543 = vld [vmem:[%s542] sm:$0xff]
          %v544 = vld [vmem:[%s542 + $0x10] sm:$0xff]
          %v545 = vld [vmem:[%s542 + $0x20] sm:$0xff]
          %v546 = vld [vmem:[%s542 + $0x30] sm:$0xff]
          %v547 = vld [vmem:[%s542 + $0x40] sm:$0xff]
          %v548 = vld [vmem:[%s542 + $0x50] sm:$0xff]
          %v549 = vld [vmem:[%s542 + $0x60] sm:$0xff]
          %v550 = vld [vmem:[%s542 + $0x70] sm:$0xff]
          %v551 = vpack.c.bf16 %v543, %v543
          %v552 = vpack.c.bf16 %v544, %v544
          %v553 = vpack.c.bf16 %v545, %v545
          %v554 = vpack.c.bf16 %v546, %v546
          %v555 = vpack.c.bf16 %v547, %v547
          %v556 = vpack.c.bf16 %v548, %v548
          %v557 = vpack.c.bf16 %v549, %v549
          %v558 = vpack.c.bf16 %v550, %v550
          %v559 = vld [vmem:[%s542 + $0x1] sm:$0xff]
          %v560 = vld [vmem:[%s542 + $0x11] sm:$0xff]
          %v561 = vld [vmem:[%s542 + $0x21] sm:$0xff]
          %v562 = vld [vmem:[%s542 + $0x31] sm:$0xff]
          %v563 = vld [vmem:[%s542 + $0x41] sm:$0xff]
          %v564 = vld [vmem:[%s542 + $0x51] sm:$0xff]
          %v565 = vld [vmem:[%s542 + $0x61] sm:$0xff]
          %v566 = vld [vmem:[%s542 + $0x71] sm:$0xff]
          %v567 = vpack.c.bf16 %v559, %v559
          %v568 = vpack.c.bf16 %v560, %v560
          %v569 = vpack.c.bf16 %v561, %v561
          %v570 = vpack.c.bf16 %v562, %v562
          %v571 = vpack.c.bf16 %v563, %v563
          %v572 = vpack.c.bf16 %v564, %v564
          %v573 = vpack.c.bf16 %v565, %v565
          %v574 = vpack.c.bf16 %v566, %v566
          %v575 = vld [vmem:[%s542 + $0x2] sm:$0xff]
          %v576 = vld [vmem:[%s542 + $0x12] sm:$0xff]
          %v577 = vld [vmem:[%s542 + $0x22] sm:$0xff]
          %v578 = vld [vmem:[%s542 + $0x32] sm:$0xff]
          %v579 = vld [vmem:[%s542 + $0x42] sm:$0xff]
          %v580 = vld [vmem:[%s542 + $0x52] sm:$0xff]
          %v581 = vld [vmem:[%s542 + $0x62] sm:$0xff]
          %v582 = vld [vmem:[%s542 + $0x72] sm:$0xff]
          %v583 = vpack.c.bf16 %v575, %v575
          %v584 = vpack.c.bf16 %v576, %v576
          %v585 = vpack.c.bf16 %v577, %v577
          %v586 = vpack.c.bf16 %v578, %v578
          %v587 = vpack.c.bf16 %v579, %v579
          %v588 = vpack.c.bf16 %v580, %v580
          %v589 = vpack.c.bf16 %v581, %v581
          %v590 = vpack.c.bf16 %v582, %v582
          %v599 = vunpack.c.l.b16 %v454
          %v600 = vunpack.c.l.b16 %v455
          %v601 = vunpack.c.l.b16 %v456
          %v602 = vunpack.c.l.b16 %v457
          %v603 = vunpack.c.l.b16 %v458
          %v604 = vunpack.c.l.b16 %v459
          %v605 = vunpack.c.l.b16 %v460
          %v606 = vunpack.c.l.b16 %v461
          %v607 = vpack.c.b16 %v600, %v599
          %v608 = vpack.c.b16 %v602, %v601
          %v609 = vpack.c.b16 %v604, %v603
          %v610 = vpack.c.b16 %v606, %v605
          %v623 = vunpack.c.l.b16 %v470
          %v624 = vunpack.c.l.b16 %v471
          %v625 = vunpack.c.l.b16 %v472
          %v626 = vunpack.c.l.b16 %v473
          %v627 = vunpack.c.l.b16 %v474
          %v628 = vunpack.c.l.b16 %v475
          %v629 = vunpack.c.l.b16 %v476
          %v630 = vunpack.c.l.b16 %v477
          %v631 = vpack.c.b16 %v624, %v623
          %v632 = vpack.c.b16 %v626, %v625
          %v633 = vpack.c.b16 %v628, %v627
          %v634 = vpack.c.b16 %v630, %v629
          %v647 = vunpack.c.l.b16 %v486
          %v648 = vunpack.c.l.b16 %v487
          %v649 = vunpack.c.l.b16 %v488
          %v650 = vunpack.c.l.b16 %v489
          %v651 = vunpack.c.l.b16 %v490
          %v652 = vunpack.c.l.b16 %v491
          %v653 = vunpack.c.l.b16 %v492
          %v654 = vunpack.c.l.b16 %v493
          %v655 = vpack.c.b16 %v648, %v647
          %v656 = vpack.c.b16 %v650, %v649
          %v657 = vpack.c.b16 %v652, %v651
          %v658 = vpack.c.b16 %v654, %v653
          %v671 = vunpack.c.l.b16 %v502
          %v672 = vunpack.c.l.b16 %v503
          %v673 = vunpack.c.l.b16 %v504
          %v674 = vunpack.c.l.b16 %v505
          %v675 = vunpack.c.l.b16 %v506
          %v676 = vunpack.c.l.b16 %v507
          %v677 = vunpack.c.l.b16 %v508
          %v678 = vunpack.c.l.b16 %v509
          %v679 = vpack.c.b16 %v672, %v671
          %v680 = vpack.c.b16 %v674, %v673
          %v681 = vpack.c.b16 %v676, %v675
          %v682 = vpack.c.b16 %v678, %v677
          %v695 = vunpack.c.l.b16 %v518
          %v696 = vunpack.c.l.b16 %v519
          %v697 = vunpack.c.l.b16 %v520
          %v698 = vunpack.c.l.b16 %v521
          %v699 = vunpack.c.l.b16 %v522
          %v700 = vunpack.c.l.b16 %v523
          %v701 = vunpack.c.l.b16 %v524
          %v702 = vunpack.c.l.b16 %v525
          %v703 = vpack.c.b16 %v696, %v695
          %v704 = vpack.c.b16 %v698, %v697
          %v705 = vpack.c.b16 %v700, %v699
          %v706 = vpack.c.b16 %v702, %v701
          %v719 = vunpack.c.l.b16 %v534
          %v720 = vunpack.c.l.b16 %v535
          %v721 = vunpack.c.l.b16 %v536
          %v722 = vunpack.c.l.b16 %v537
          %v723 = vunpack.c.l.b16 %v538
          %v724 = vunpack.c.l.b16 %v539
          %v725 = vunpack.c.l.b16 %v540
          %v726 = vunpack.c.l.b16 %v541
          %v727 = vpack.c.b16 %v720, %v719
          %v728 = vpack.c.b16 %v722, %v721
          %v729 = vpack.c.b16 %v724, %v723
          %v730 = vpack.c.b16 %v726, %v725
          %v743 = vunpack.c.l.b16 %v551
          %v744 = vunpack.c.l.b16 %v552
          %v745 = vunpack.c.l.b16 %v553
          %v746 = vunpack.c.l.b16 %v554
          %v747 = vunpack.c.l.b16 %v555
          %v748 = vunpack.c.l.b16 %v556
          %v749 = vunpack.c.l.b16 %v557
          %v750 = vunpack.c.l.b16 %v558
          %v751 = vpack.c.b16 %v744, %v743
          %v752 = vpack.c.b16 %v746, %v745
          %v753 = vpack.c.b16 %v748, %v747
          %v754 = vpack.c.b16 %v750, %v749
          %v767 = vunpack.c.l.b16 %v567
          %v768 = vunpack.c.l.b16 %v568
          %v769 = vunpack.c.l.b16 %v569
          %v770 = vunpack.c.l.b16 %v570
          %v771 = vunpack.c.l.b16 %v571
          %v772 = vunpack.c.l.b16 %v572
          %v773 = vunpack.c.l.b16 %v573
          %v774 = vunpack.c.l.b16 %v574
          %v775 = vpack.c.b16 %v768, %v767
          %v776 = vpack.c.b16 %v770, %v769
          %v777 = vpack.c.b16 %v772, %v771
          %v778 = vpack.c.b16 %v774, %v773
          %v791 = vunpack.c.l.b16 %v583
          %v792 = vunpack.c.l.b16 %v584
          %v793 = vunpack.c.l.b16 %v585
          %v794 = vunpack.c.l.b16 %v586
          %v795 = vunpack.c.l.b16 %v587
          %v796 = vunpack.c.l.b16 %v588
          %v797 = vunpack.c.l.b16 %v589
          %v798 = vunpack.c.l.b16 %v590
          %v799 = vpack.c.b16 %v792, %v791
          %v800 = vpack.c.b16 %v794, %v793
          %v801 = vpack.c.b16 %v796, %v795
          %v802 = vpack.c.b16 %v798, %v797
          %v807 = vld [vmem:[#allocation7] sm:$0xf]
          %v808 = vld [vmem:[#allocation7 + $0x4] sm:$0xf]
          %v809 = vld [vmem:[#allocation7 + $0x8] sm:$0xf]
          %v810 = vld [vmem:[#allocation7 + $0xc] sm:$0xf]
          %v811 = vld [vmem:[#allocation7 + $0x10] sm:$0xf]
          %v812 = vld [vmem:[#allocation7 + $0x14] sm:$0xf]
          %v813 = vld [vmem:[#allocation7 + $0x18] sm:$0xf]
          %v814 = vld [vmem:[#allocation7 + $0x1c] sm:$0xf]
          %v815 = vld [vmem:[#allocation7 + $0x20] sm:$0xf]
          %v816 = vld [vmem:[#allocation7 + $0x24] sm:$0xf]
          %v817 = vld [vmem:[#allocation7 + $0x28] sm:$0xf]
          %v818 = vld [vmem:[#allocation7 + $0x2c] sm:$0xf]
          %v819 = vld [vmem:[#allocation7 + $0x30] sm:$0xf]
          %v820 = vld [vmem:[#allocation7 + $0x34] sm:$0xf]
          %v821 = vld [vmem:[#allocation7 + $0x38] sm:$0xf]
          %v822 = vld [vmem:[#allocation7 + $0x3c] sm:$0xf]
          %v823 = vld [vmem:[#allocation7 + $0x40] sm:$0xf]
          %v824 = vld [vmem:[#allocation7 + $0x44] sm:$0xf]
          %v825 = vld [vmem:[#allocation7 + $0x48] sm:$0xf]
          %v826 = vld [vmem:[#allocation7 + $0x4c] sm:$0xf]
          %v827 = vld [vmem:[#allocation7 + $0x50] sm:$0xf]
          %v828 = vld [vmem:[#allocation7 + $0x54] sm:$0xf]
          %v829 = vld [vmem:[#allocation7 + $0x58] sm:$0xf]
          %v830 = vld [vmem:[#allocation7 + $0x5c] sm:$0xf]
          %v831 = vld [vmem:[#allocation7 + $0x60] sm:$0xf]
          %v832 = vld [vmem:[#allocation7 + $0x64] sm:$0xf]
          %v833 = vld [vmem:[#allocation7 + $0x68] sm:$0xf]
          %v834 = vld [vmem:[#allocation7 + $0x6c] sm:$0xf]
          %v835 = vld [vmem:[#allocation7 + $0x70] sm:$0xf]
          %v836 = vld [vmem:[#allocation7 + $0x74] sm:$0xf]
          %v837 = vld [vmem:[#allocation7 + $0x78] sm:$0xf]
          %v838 = vld [vmem:[#allocation7 + $0x7c] sm:$0xf]
          %v839 = vld [vmem:[#allocation7 + $0x80] sm:$0xf]
          %v840 = vld [vmem:[#allocation7 + $0x84] sm:$0xf]
          %v841 = vld [vmem:[#allocation7 + $0x88] sm:$0xf]
          %v842 = vld [vmem:[#allocation7 + $0x8c] sm:$0xf]
          %v843 = vld [vmem:[#allocation7 + $0x90] sm:$0xf]
          %v844 = vld [vmem:[#allocation7 + $0x94] sm:$0xf]
          %v845 = vld [vmem:[#allocation7 + $0x98] sm:$0xf]
          %v846 = vld [vmem:[#allocation7 + $0x9c] sm:$0xf]
          %v847 = vld [vmem:[#allocation7 + $0xa0] sm:$0xf]
          %v848 = vld [vmem:[#allocation7 + $0xa4] sm:$0xf]
          %v849 = vld [vmem:[#allocation7 + $0xa8] sm:$0xf]
          %v850 = vld [vmem:[#allocation7 + $0xac] sm:$0xf]
          %v851 = vld [vmem:[#allocation7 + $0xb0] sm:$0xf]
          %v852 = vld [vmem:[#allocation7 + $0xb4] sm:$0xf]
          %v853 = vld [vmem:[#allocation7 + $0xb8] sm:$0xf]
          %v854 = vld [vmem:[#allocation7 + $0xbc] sm:$0xf]
          %v855 = vld [vmem:[#allocation7 + $0xc0] sm:$0xf]
          %v856 = vld [vmem:[#allocation7 + $0xc4] sm:$0xf]
          %v857 = vld [vmem:[#allocation7 + $0xc8] sm:$0xf]
          %v858 = vld [vmem:[#allocation7 + $0xcc] sm:$0xf]
          %v859 = vld [vmem:[#allocation7 + $0xd0] sm:$0xf]
          %v860 = vld [vmem:[#allocation7 + $0xd4] sm:$0xf]
          %v861 = vld [vmem:[#allocation7 + $0xd8] sm:$0xf]
          %v862 = vld [vmem:[#allocation7 + $0xdc] sm:$0xf]
          %v863 = vld [vmem:[#allocation7 + $0xe0] sm:$0xf]
          %v864 = vld [vmem:[#allocation7 + $0xe4] sm:$0xf]
          %v865 = vld [vmem:[#allocation7 + $0xe8] sm:$0xf]
          %v866 = vld [vmem:[#allocation7 + $0xec] sm:$0xf]
          %v867 = vld [vmem:[#allocation7 + $0xf0] sm:$0xf]
          %v868 = vld [vmem:[#allocation7 + $0xf4] sm:$0xf]
          %v869 = vld [vmem:[#allocation7 + $0xf8] sm:$0xf]
          %v870 = vld [vmem:[#allocation7 + $0xfc] sm:$0xf]
          %v871 = vld [vmem:[#allocation7 + $0x100] sm:$0xf]
          %v872 = vld [vmem:[#allocation7 + $0x104] sm:$0xf]
          %v873 = vld [vmem:[#allocation7 + $0x108] sm:$0xf]
          %v874 = vld [vmem:[#allocation7 + $0x10c] sm:$0xf]
          %v875 = vld [vmem:[#allocation7 + $0x110] sm:$0xf]
          %v876 = vld [vmem:[#allocation7 + $0x114] sm:$0xf]
          %v877 = vld [vmem:[#allocation7 + $0x118] sm:$0xf]
          %v878 = vld [vmem:[#allocation7 + $0x11c] sm:$0xf]
          %v879 = vld [vmem:[#allocation7 + $0x120] sm:$0xf]
          %v880 = vld [vmem:[#allocation7 + $0x124] sm:$0xf]
          %v881 = vld [vmem:[#allocation7 + $0x128] sm:$0xf]
          %v882 = vld [vmem:[#allocation7 + $0x12c] sm:$0xf]
          %v883 = vld [vmem:[#allocation7 + $0x130] sm:$0xf]
          %v884 = vld [vmem:[#allocation7 + $0x134] sm:$0xf]
          %v885 = vld [vmem:[#allocation7 + $0x138] sm:$0xf]
          %v886 = vld [vmem:[#allocation7 + $0x13c] sm:$0xf]
          %v887 = vld [vmem:[#allocation7 + $0x140] sm:$0xf]
          %v888 = vld [vmem:[#allocation7 + $0x144] sm:$0xf]
          %v889 = vld [vmem:[#allocation7 + $0x148] sm:$0xf]
          %v890 = vld [vmem:[#allocation7 + $0x14c] sm:$0xf]
          %v891 = vld [vmem:[#allocation7 + $0x150] sm:$0xf]
          %v892 = vld [vmem:[#allocation7 + $0x154] sm:$0xf]
          %v893 = vld [vmem:[#allocation7 + $0x158] sm:$0xf]
          %v894 = vld [vmem:[#allocation7 + $0x15c] sm:$0xf]
          %v895 = vld [vmem:[#allocation7 + $0x160] sm:$0xf]
          %v896 = vld [vmem:[#allocation7 + $0x164] sm:$0xf]
          %v897 = vld [vmem:[#allocation7 + $0x168] sm:$0xf]
          %v898 = vld [vmem:[#allocation7 + $0x16c] sm:$0xf]
          %v899 = vld [vmem:[#allocation7 + $0x170] sm:$0xf]
          %v900 = vld [vmem:[#allocation7 + $0x174] sm:$0xf]
          %v901 = vld [vmem:[#allocation7 + $0x178] sm:$0xf]
          %v902 = vld [vmem:[#allocation7 + $0x17c] sm:$0xf]
          %v903 = vld [vmem:[#allocation7 + $0x180] sm:$0xf]
          %v904 = vld [vmem:[#allocation7 + $0x184] sm:$0xf]
          %v905 = vld [vmem:[#allocation7 + $0x188] sm:$0xf]
          %v906 = vld [vmem:[#allocation7 + $0x18c] sm:$0xf]
          %v907 = vld [vmem:[#allocation7 + $0x190] sm:$0xf]
          %v908 = vld [vmem:[#allocation7 + $0x194] sm:$0xf]
          %v909 = vld [vmem:[#allocation7 + $0x198] sm:$0xf]
          %v910 = vld [vmem:[#allocation7 + $0x19c] sm:$0xf]
          %v911 = vld [vmem:[#allocation7 + $0x1a0] sm:$0xf]
          %v912 = vld [vmem:[#allocation7 + $0x1a4] sm:$0xf]
          %v913 = vld [vmem:[#allocation7 + $0x1a8] sm:$0xf]
          %v914 = vld [vmem:[#allocation7 + $0x1ac] sm:$0xf]
          %v915 = vld [vmem:[#allocation7 + $0x1b0] sm:$0xf]
          %v916 = vld [vmem:[#allocation7 + $0x1b4] sm:$0xf]
          %v917 = vld [vmem:[#allocation7 + $0x1b8] sm:$0xf]
          %v918 = vld [vmem:[#allocation7 + $0x1bc] sm:$0xf]
          %v919 = vld [vmem:[#allocation7 + $0x1c0] sm:$0xf]
          %v920 = vld [vmem:[#allocation7 + $0x1c4] sm:$0xf]
          %v921 = vld [vmem:[#allocation7 + $0x1c8] sm:$0xf]
          %v922 = vld [vmem:[#allocation7 + $0x1cc] sm:$0xf]
          %v923 = vld [vmem:[#allocation7 + $0x1d0] sm:$0xf]
          %v924 = vld [vmem:[#allocation7 + $0x1d4] sm:$0xf]
          %v925 = vld [vmem:[#allocation7 + $0x1d8] sm:$0xf]
          %v926 = vld [vmem:[#allocation7 + $0x1dc] sm:$0xf]
          %v927 = vld [vmem:[#allocation7 + $0x1e0] sm:$0xf]
          %v928 = vld [vmem:[#allocation7 + $0x1e4] sm:$0xf]
          %v929 = vld [vmem:[#allocation7 + $0x1e8] sm:$0xf]
          %v930 = vld [vmem:[#allocation7 + $0x1ec] sm:$0xf]
          %v931 = vld [vmem:[#allocation7 + $0x1f0] sm:$0xf]
          %v932 = vld [vmem:[#allocation7 + $0x1f4] sm:$0xf]
          %v933 = vld [vmem:[#allocation7 + $0x1f8] sm:$0xf]
          %v934 = vld [vmem:[#allocation7 + $0x1fc] sm:$0xf]
          %v935 = vld [vmem:[#allocation7 + $0x200] sm:$0xf]
          %v936 = vld [vmem:[#allocation7 + $0x204] sm:$0xf]
          %v937 = vld [vmem:[#allocation7 + $0x208] sm:$0xf]
          %v938 = vld [vmem:[#allocation7 + $0x20c] sm:$0xf]
          %v939 = vld [vmem:[#allocation7 + $0x210] sm:$0xf]
          %v940 = vld [vmem:[#allocation7 + $0x214] sm:$0xf]
          %v941 = vld [vmem:[#allocation7 + $0x218] sm:$0xf]
          %v942 = vld [vmem:[#allocation7 + $0x21c] sm:$0xf]
          %v943 = vld [vmem:[#allocation7 + $0x220] sm:$0xf]
          %v944 = vld [vmem:[#allocation7 + $0x224] sm:$0xf]
          %v945 = vld [vmem:[#allocation7 + $0x228] sm:$0xf]
          %v946 = vld [vmem:[#allocation7 + $0x22c] sm:$0xf]
          %v947 = vld [vmem:[#allocation7 + $0x230] sm:$0xf]
          %v948 = vld [vmem:[#allocation7 + $0x234] sm:$0xf]
          %v949 = vld [vmem:[#allocation7 + $0x238] sm:$0xf]
          %v950 = vld [vmem:[#allocation7 + $0x23c] sm:$0xf]
          %v951 = vld [vmem:[%s2] sm:$0x1]
          %v953 = vlaneseq
          %v954 = vshrl.u32 %v953, 7
          %v955 = vsub.s32 0, %v954
          %v956 = vrot.slane %v951, %v955
          %v1102 = vunpack.c.l.b16 %v807
          %v1103 = vunpack.c.l.b16 %v808
          %v1104 = vunpack.c.l.b16 %v809
          %v1105 = vunpack.c.l.b16 %v810
          %v1106 = vunpack.c.l.b16 %v811
          %v1107 = vunpack.c.l.b16 %v812
          %v1108 = vunpack.c.l.b16 %v813
          %v1109 = vunpack.c.l.b16 %v814
          %v1110 = vunpack.c.l.b16 %v815
          %v1111 = vunpack.c.l.b16 %v816
          %v1112 = vunpack.c.l.b16 %v817
          %v1113 = vunpack.c.l.b16 %v818
          %v1114 = vunpack.c.l.b16 %v819
          %v1115 = vunpack.c.l.b16 %v820
          %v1116 = vunpack.c.l.b16 %v821
          %v1117 = vunpack.c.l.b16 %v822
          %v1118 = vunpack.c.l.b16 %v823
          %v1119 = vunpack.c.l.b16 %v824
          %v1120 = vunpack.c.l.b16 %v825
          %v1121 = vunpack.c.l.b16 %v826
          %v1122 = vunpack.c.l.b16 %v827
          %v1123 = vunpack.c.l.b16 %v828
          %v1124 = vunpack.c.l.b16 %v829
          %v1125 = vunpack.c.l.b16 %v830
          %v1126 = vunpack.c.l.b16 %v831
          %v1127 = vunpack.c.l.b16 %v832
          %v1128 = vunpack.c.l.b16 %v833
          %v1129 = vunpack.c.l.b16 %v834
          %v1130 = vunpack.c.l.b16 %v835
          %v1131 = vunpack.c.l.b16 %v836
          %v1132 = vunpack.c.l.b16 %v837
          %v1133 = vunpack.c.l.b16 %v838
          %v1134 = vunpack.c.l.b16 %v839
          %v1135 = vunpack.c.l.b16 %v840
          %v1136 = vunpack.c.l.b16 %v841
          %v1137 = vunpack.c.l.b16 %v842
          %v1138 = vunpack.c.l.b16 %v843
          %v1139 = vunpack.c.l.b16 %v844
          %v1140 = vunpack.c.l.b16 %v845
          %v1141 = vunpack.c.l.b16 %v846
          %v1142 = vunpack.c.l.b16 %v847
          %v1143 = vunpack.c.l.b16 %v848
          %v1144 = vunpack.c.l.b16 %v849
          %v1145 = vunpack.c.l.b16 %v850
          %v1146 = vunpack.c.l.b16 %v851
          %v1147 = vunpack.c.l.b16 %v852
          %v1148 = vunpack.c.l.b16 %v853
          %v1149 = vunpack.c.l.b16 %v854
          %v1150 = vunpack.c.l.b16 %v855
          %v1151 = vunpack.c.l.b16 %v856
          %v1152 = vunpack.c.l.b16 %v857
          %v1153 = vunpack.c.l.b16 %v858
          %v1154 = vunpack.c.l.b16 %v859
          %v1155 = vunpack.c.l.b16 %v860
          %v1156 = vunpack.c.l.b16 %v861
          %v1157 = vunpack.c.l.b16 %v862
          %v1158 = vunpack.c.l.b16 %v863
          %v1159 = vunpack.c.l.b16 %v864
          %v1160 = vunpack.c.l.b16 %v865
          %v1161 = vunpack.c.l.b16 %v866
          %v1162 = vunpack.c.l.b16 %v867
          %v1163 = vunpack.c.l.b16 %v868
          %v1164 = vunpack.c.l.b16 %v869
          %v1165 = vunpack.c.l.b16 %v870
          %v1166 = vunpack.c.l.b16 %v871
          %v1167 = vunpack.c.l.b16 %v872
          %v1168 = vunpack.c.l.b16 %v873
          %v1169 = vunpack.c.l.b16 %v874
          %v1170 = vunpack.c.l.b16 %v875
          %v1171 = vunpack.c.l.b16 %v876
          %v1172 = vunpack.c.l.b16 %v877
          %v1173 = vunpack.c.l.b16 %v878
          %v1174 = vunpack.c.l.b16 %v879
          %v1175 = vunpack.c.l.b16 %v880
          %v1176 = vunpack.c.l.b16 %v881
          %v1177 = vunpack.c.l.b16 %v882
          %v1178 = vunpack.c.l.b16 %v883
          %v1179 = vunpack.c.l.b16 %v884
          %v1180 = vunpack.c.l.b16 %v885
          %v1181 = vunpack.c.l.b16 %v886
          %v1182 = vunpack.c.l.b16 %v887
          %v1183 = vunpack.c.l.b16 %v888
          %v1184 = vunpack.c.l.b16 %v889
          %v1185 = vunpack.c.l.b16 %v890
          %v1186 = vunpack.c.l.b16 %v891
          %v1187 = vunpack.c.l.b16 %v892
          %v1188 = vunpack.c.l.b16 %v893
          %v1189 = vunpack.c.l.b16 %v894
          %v1190 = vunpack.c.l.b16 %v895
          %v1191 = vunpack.c.l.b16 %v896
          %v1192 = vunpack.c.l.b16 %v897
          %v1193 = vunpack.c.l.b16 %v898
          %v1194 = vunpack.c.l.b16 %v899
          %v1195 = vunpack.c.l.b16 %v900
          %v1196 = vunpack.c.l.b16 %v901
          %v1197 = vunpack.c.l.b16 %v902
          %v1198 = vunpack.c.l.b16 %v903
          %v1199 = vunpack.c.l.b16 %v904
          %v1200 = vunpack.c.l.b16 %v905
          %v1201 = vunpack.c.l.b16 %v906
          %v1202 = vunpack.c.l.b16 %v907
          %v1203 = vunpack.c.l.b16 %v908
          %v1204 = vunpack.c.l.b16 %v909
          %v1205 = vunpack.c.l.b16 %v910
          %v1206 = vunpack.c.l.b16 %v911
          %v1207 = vunpack.c.l.b16 %v912
          %v1208 = vunpack.c.l.b16 %v913
          %v1209 = vunpack.c.l.b16 %v914
          %v1210 = vunpack.c.l.b16 %v915
          %v1211 = vunpack.c.l.b16 %v916
          %v1212 = vunpack.c.l.b16 %v917
          %v1213 = vunpack.c.l.b16 %v918
          %v1214 = vunpack.c.l.b16 %v919
          %v1215 = vunpack.c.l.b16 %v920
          %v1216 = vunpack.c.l.b16 %v921
          %v1217 = vunpack.c.l.b16 %v922
          %v1218 = vunpack.c.l.b16 %v923
          %v1219 = vunpack.c.l.b16 %v924
          %v1220 = vunpack.c.l.b16 %v925
          %v1221 = vunpack.c.l.b16 %v926
          %v1222 = vunpack.c.l.b16 %v927
          %v1223 = vunpack.c.l.b16 %v928
          %v1224 = vunpack.c.l.b16 %v929
          %v1225 = vunpack.c.l.b16 %v930
          %v1226 = vunpack.c.l.b16 %v931
          %v1227 = vunpack.c.l.b16 %v932
          %v1228 = vunpack.c.l.b16 %v933
          %v1229 = vunpack.c.l.b16 %v934
          %v1230 = vunpack.c.l.b16 %v935
          %v1231 = vunpack.c.l.b16 %v936
          %v1232 = vunpack.c.l.b16 %v937
          %v1233 = vunpack.c.l.b16 %v938
          %v1234 = vunpack.c.l.b16 %v939
          %v1235 = vunpack.c.l.b16 %v940
          %v1236 = vunpack.c.l.b16 %v941
          %v1237 = vunpack.c.l.b16 %v942
          %v1238 = vunpack.c.l.b16 %v943
          %v1239 = vunpack.c.l.b16 %v944
          %v1240 = vunpack.c.l.b16 %v945
          %v1241 = vunpack.c.l.b16 %v946
          %v1242 = vunpack.c.l.b16 %v947
          %v1243 = vunpack.c.l.b16 %v948
          %v1244 = vunpack.c.l.b16 %v949
          %v1245 = vunpack.c.l.b16 %v950
          %v1246 = vpack.c.b16 %v1103, %v1102
          %v1247 = vpack.c.b16 %v1105, %v1104
          %v1248 = vpack.c.b16 %v1107, %v1106
          %v1249 = vpack.c.b16 %v1109, %v1108
          %v1250 = vpack.c.b16 %v1111, %v1110
          %v1251 = vpack.c.b16 %v1113, %v1112
          %v1252 = vpack.c.b16 %v1115, %v1114
          %v1253 = vpack.c.b16 %v1117, %v1116
          %v1254 = vpack.c.b16 %v1119, %v1118
          %v1255 = vpack.c.b16 %v1121, %v1120
          %v1256 = vpack.c.b16 %v1123, %v1122
          %v1257 = vpack.c.b16 %v1125, %v1124
          %v1258 = vpack.c.b16 %v1127, %v1126
          %v1259 = vpack.c.b16 %v1129, %v1128
          %v1260 = vpack.c.b16 %v1131, %v1130
          %v1261 = vpack.c.b16 %v1133, %v1132
          %v1262 = vpack.c.b16 %v1135, %v1134
          %v1263 = vpack.c.b16 %v1137, %v1136
          %v1264 = vpack.c.b16 %v1139, %v1138
          %v1265 = vpack.c.b16 %v1141, %v1140
          %v1266 = vpack.c.b16 %v1143, %v1142
          %v1267 = vpack.c.b16 %v1145, %v1144
          %v1268 = vpack.c.b16 %v1147, %v1146
          %v1269 = vpack.c.b16 %v1149, %v1148
          %v1270 = vpack.c.b16 %v1151, %v1150
          %v1271 = vpack.c.b16 %v1153, %v1152
          %v1272 = vpack.c.b16 %v1155, %v1154
          %v1273 = vpack.c.b16 %v1157, %v1156
          %v1274 = vpack.c.b16 %v1159, %v1158
          %v1275 = vpack.c.b16 %v1161, %v1160
          %v1276 = vpack.c.b16 %v1163, %v1162
          %v1277 = vpack.c.b16 %v1165, %v1164
          %v1278 = vpack.c.b16 %v1167, %v1166
          %v1279 = vpack.c.b16 %v1169, %v1168
          %v1280 = vpack.c.b16 %v1171, %v1170
          %v1281 = vpack.c.b16 %v1173, %v1172
          %v1282 = vpack.c.b16 %v1175, %v1174
          %v1283 = vpack.c.b16 %v1177, %v1176
          %v1284 = vpack.c.b16 %v1179, %v1178
          %v1285 = vpack.c.b16 %v1181, %v1180
          %v1286 = vpack.c.b16 %v1183, %v1182
          %v1287 = vpack.c.b16 %v1185, %v1184
          %v1288 = vpack.c.b16 %v1187, %v1186
          %v1289 = vpack.c.b16 %v1189, %v1188
          %v1290 = vpack.c.b16 %v1191, %v1190
          %v1291 = vpack.c.b16 %v1193, %v1192
          %v1292 = vpack.c.b16 %v1195, %v1194
          %v1293 = vpack.c.b16 %v1197, %v1196
          %v1294 = vpack.c.b16 %v1199, %v1198
          %v1295 = vpack.c.b16 %v1201, %v1200
          %v1296 = vpack.c.b16 %v1203, %v1202
          %v1297 = vpack.c.b16 %v1205, %v1204
          %v1298 = vpack.c.b16 %v1207, %v1206
          %v1299 = vpack.c.b16 %v1209, %v1208
          %v1300 = vpack.c.b16 %v1211, %v1210
          %v1301 = vpack.c.b16 %v1213, %v1212
          %v1302 = vpack.c.b16 %v1215, %v1214
          %v1303 = vpack.c.b16 %v1217, %v1216
          %v1304 = vpack.c.b16 %v1219, %v1218
          %v1305 = vpack.c.b16 %v1221, %v1220
          %v1306 = vpack.c.b16 %v1223, %v1222
          %v1307 = vpack.c.b16 %v1225, %v1224
          %v1308 = vpack.c.b16 %v1227, %v1226
          %v1309 = vpack.c.b16 %v1229, %v1228
          %v1310 = vpack.c.b16 %v1231, %v1230
          %v1311 = vpack.c.b16 %v1233, %v1232
          %v1312 = vpack.c.b16 %v1235, %v1234
          %v1313 = vpack.c.b16 %v1237, %v1236
          %v1314 = vpack.c.b16 %v1239, %v1238
          %v1315 = vpack.c.b16 %v1241, %v1240
          %v1316 = vpack.c.b16 %v1243, %v1242
          %v1317 = vpack.c.b16 %v1245, %v1244
          %1390 = vmatprep.subr.bf16.mxu0 0
          %1391 = vmatpush1.bf16.msra.mxu0 %v1246
          %1392 = vmatprep.subr.bf16.mxu0 0
          %1393 = vmatpush1.bf16.msra.mxu0 %v1247
          %1394 = vmatprep.subr.bf16.mxu0 0
          %1395 = vmatpush1.bf16.msra.mxu0 %v1248
          %1396 = vmatprep.subr.bf16.mxu0 0
          %1397 = vmatpush1.bf16.msra.mxu0 %v1249
          %1398 = vmatprep.subr.bf16.mxu0 0
          %1399 = vmatpush1.bf16.msra.mxu0 %v1250
          %1400 = vmatprep.subr.bf16.mxu0 0
          %1401 = vmatpush1.bf16.msra.mxu0 %v1251
          %1402 = vmatprep.subr.bf16.mxu0 0
          %1403 = vmatpush1.bf16.msra.mxu0 %v1252
          %1404 = vmatprep.subr.bf16.mxu0 0
          %1405 = vmatpush1.bf16.msra.mxu0 %v1253
          %1406 = vmatprep.subr.bf16.mxu0 0
          %1407 = vmatpush1.bf16.msra.mxu0 %v1254
          %1408 = vmatprep.subr.bf16.mxu0 0
          %1409 = vmatpush1.bf16.msra.mxu0 %v1255
          %1410 = vmatprep.subr.bf16.mxu0 0
          %1411 = vmatpush1.bf16.msra.mxu0 %v1256
          %1412 = vmatprep.subr.bf16.mxu0 0
          %1413 = vmatpush1.bf16.msra.mxu0 %v1257
          %1414 = vmatprep.subr.bf16.mxu0 0
          %1415 = vmatpush1.bf16.msra.mxu0 %v1258
          %1416 = vmatprep.subr.bf16.mxu0 0
          %1417 = vmatpush1.bf16.msra.mxu0 %v1259
          %1418 = vmatprep.subr.bf16.mxu0 0
          %1419 = vmatpush1.bf16.msra.mxu0 %v1260
          %1420 = vmatprep.subr.bf16.mxu0 0
          %1421 = vmatpush1.bf16.msra.mxu0 %v1261
          %1422 = vmatprep.mubr.bf16.mxu0 %v631
          %1423 = vmatmul.mubr.bf16.gmra.mrb[0].mxu0 %v607
          %v1424 = vpop.f32.mrb[0].mxu0
          %v1425 = vadd.f32 %v956, %v1424
          %v1426 = vpop.f32.mrb[0].mxu0
          %v1427 = vpop.f32.mrb[0].mxu0
          %v1428 = vadd.f32 %v956, %v1427
          %v1429 = vpop.f32.mrb[0].mxu0
          %1430 = vmatprep.mubr.bf16.mxu0 %v632
          %1431 = vmatmul.mubr.bf16.gmra.mrb[0].mxu0 %v608
          %v1432 = vpop.f32.mrb[0].mxu0
          %v1433 = vadd.f32 %v956, %v1432
          %v1434 = vpop.f32.mrb[0].mxu0
          %v1435 = vpop.f32.mrb[0].mxu0
          %v1436 = vadd.f32 %v956, %v1435
          %v1437 = vpop.f32.mrb[0].mxu0
          %1438 = vmatprep.mubr.bf16.mxu0 %v633
          %1439 = vmatmul.mubr.bf16.gmra.mrb[0].mxu0 %v609
          %v1440 = vpop.f32.mrb[0].mxu0
          %v1441 = vadd.f32 %v956, %v1440
          %v1442 = vpop.f32.mrb[0].mxu0
          %v1443 = vpop.f32.mrb[0].mxu0
          %v1444 = vadd.f32 %v956, %v1443
          %v1445 = vpop.f32.mrb[0].mxu0
          %1446 = vmatprep.mubr.bf16.mxu0 %v634
          %1447 = vmatmul.mubr.bf16.gmra.mrb[0].mxu0 %v610
          %v1448 = vpop.f32.mrb[0].mxu0
          %v1449 = vadd.f32 %v956, %v1448
          %v1450 = vpop.f32.mrb[0].mxu0
          %v1451 = vpop.f32.mrb[0].mxu0
          %v1452 = vadd.f32 %v956, %v1451
          %v1453 = vpop.f32.mrb[0].mxu0
          %1454 = vdwg.mxu0
          %1455 = vmatprep.subr.bf16.mxu0 0
          %1456 = vmatpush1.bf16.msra.mxu0 %v1262
          %1457 = vmatprep.subr.bf16.mxu0 0
          %1458 = vmatpush1.bf16.msra.mxu0 %v1263
          %1459 = vmatprep.subr.bf16.mxu0 0
          %1460 = vmatpush1.bf16.msra.mxu0 %v1264
          %1461 = vmatprep.subr.bf16.mxu0 0
          %1462 = vmatpush1.bf16.msra.mxu0 %v1265
          %1463 = vmatprep.subr.bf16.mxu0 0
          %1464 = vmatpush1.bf16.msra.mxu0 %v1266
          %1465 = vmatprep.subr.bf16.mxu0 0
          %1466 = vmatpush1.bf16.msra.mxu0 %v1267
          %1467 = vmatprep.subr.bf16.mxu0 0
          %1468 = vmatpush1.bf16.msra.mxu0 %v1268
          %1469 = vmatprep.subr.bf16.mxu0 0
          %1470 = vmatpush1.bf16.msra.mxu0 %v1269
          %1471 = vmatprep.subr.bf16.mxu0 0
          %1472 = vmatpush1.bf16.msra.mxu0 %v1270
          %1473 = vmatprep.subr.bf16.mxu0 0
          %1474 = vmatpush1.bf16.msra.mxu0 %v1271
          %1475 = vmatprep.subr.bf16.mxu0 0
          %1476 = vmatpush1.bf16.msra.mxu0 %v1272
          %1477 = vmatprep.subr.bf16.mxu0 0
          %1478 = vmatpush1.bf16.msra.mxu0 %v1273
          %1479 = vmatprep.subr.bf16.mxu0 0
          %1480 = vmatpush1.bf16.msra.mxu0 %v1274
          %1481 = vmatprep.subr.bf16.mxu0 0
          %1482 = vmatpush1.bf16.msra.mxu0 %v1275
          %1483 = vmatprep.subr.bf16.mxu0 0
          %1484 = vmatpush1.bf16.msra.mxu0 %v1276
          %1485 = vmatprep.subr.bf16.mxu0 0
          %1486 = vmatpush1.bf16.msra.mxu0 %v1277
          %1487 = vmatprep.mubr.bf16.mxu0 %v679
          %1488 = vmatmul.mubr.bf16.gmra.mrb[0].mxu0 %v655
          %v1489 = vpop.f32.mrb[0].mxu0
          %v1490 = vadd.f32 %v1425, %v1489
          %v1491 = vpop.f32.mrb[0].mxu0
          %v1492 = vpop.f32.mrb[0].mxu0
          %v1493 = vadd.f32 %v1428, %v1492
          %v1494 = vpop.f32.mrb[0].mxu0
          %1495 = vmatprep.mubr.bf16.mxu0 %v680
          %1496 = vmatmul.mubr.bf16.gmra.mrb[0].mxu0 %v656
          %v1497 = vpop.f32.mrb[0].mxu0
          %v1498 = vadd.f32 %v1433, %v1497
          %v1499 = vpop.f32.mrb[0].mxu0
          %v1500 = vpop.f32.mrb[0].mxu0
          %v1501 = vadd.f32 %v1436, %v1500
          %v1502 = vpop.f32.mrb[0].mxu0
          %1503 = vmatprep.mubr.bf16.mxu0 %v681
          %1504 = vmatmul.mubr.bf16.gmra.mrb[0].mxu0 %v657
          %v1505 = vpop.f32.mrb[0].mxu0
          %v1506 = vadd.f32 %v1441, %v1505
          %v1507 = vpop.f32.mrb[0].mxu0
          %v1508 = vpop.f32.mrb[0].mxu0
          %v1509 = vadd.f32 %v1444, %v1508
          %v1510 = vpop.f32.mrb[0].mxu0
          %1511 = vmatprep.mubr.bf16.mxu0 %v682
          %1512 = vmatmul.mubr.bf16.gmra.mrb[0].mxu0 %v658
          %v1513 = vpop.f32.mrb[0].mxu0
          %v1514 = vadd.f32 %v1449, %v1513
          %v1515 = vpop.f32.mrb[0].mxu0
          %v1516 = vpop.f32.mrb[0].mxu0
          %v1517 = vadd.f32 %v1452, %v1516
          %v1518 = vpop.f32.mrb[0].mxu0
          %1519 = vdwg.mxu0
          %1520 = vmatprep.subr.bf16.mxu0 0
          %1521 = vmatpush1.bf16.msra.mxu0 %v1278
          %1522 = vmatprep.subr.bf16.mxu0 0
          %1523 = vmatpush1.bf16.msra.mxu0 %v1279
          %1524 = vmatprep.subr.bf16.mxu0 0
          %1525 = vmatpush1.bf16.msra.mxu0 %v1280
          %1526 = vmatprep.subr.bf16.mxu0 0
          %1527 = vmatpush1.bf16.msra.mxu0 %v1281
          %1528 = vmatprep.subr.bf16.mxu0 0
          %1529 = vmatpush1.bf16.msra.mxu0 %v1282
          %1530 = vmatprep.subr.bf16.mxu0 0
          %1531 = vmatpush1.bf16.msra.mxu0 %v1283
          %1532 = vmatprep.subr.bf16.mxu0 0
          %1533 = vmatpush1.bf16.msra.mxu0 %v1284
          %1534 = vmatprep.subr.bf16.mxu0 0
          %1535 = vmatpush1.bf16.msra.mxu0 %v1285
          %1536 = vmatprep.subr.bf16.mxu0 0
          %1537 = vmatpush1.bf16.msra.mxu0 %v1286
          %1538 = vmatprep.subr.bf16.mxu0 0
          %1539 = vmatpush1.bf16.msra.mxu0 %v1287
          %1540 = vmatprep.subr.bf16.mxu0 0
          %1541 = vmatpush1.bf16.msra.mxu0 %v1288
          %1542 = vmatprep.subr.bf16.mxu0 0
          %1543 = vmatpush1.bf16.msra.mxu0 %v1289
          %1544 = vmatprep.subr.bf16.mxu0 0
          %1545 = vmatpush1.bf16.msra.mxu0 %v1290
          %1546 = vmatprep.subr.bf16.mxu0 0
          %1547 = vmatpush1.bf16.msra.mxu0 %v1291
          %1548 = vmatprep.subr.bf16.mxu0 0
          %1549 = vmatpush1.bf16.msra.mxu0 %v1292
          %1550 = vmatprep.subr.bf16.mxu0 0
          %1551 = vmatpush1.bf16.msra.mxu0 %v1293
          %1552 = vmatprep.mubr.bf16.mxu0 %v727
          %1553 = vmatmul.mubr.bf16.gmra.mrb[0].mxu0 %v703
          %v1554 = vpop.f32.mrb[0].mxu0
          %v1555 = vadd.f32 %v1490, %v1554
          %v1556 = vpop.f32.mrb[0].mxu0
          %v1557 = vpop.f32.mrb[0].mxu0
          %v1558 = vadd.f32 %v1493, %v1557
          %v1559 = vpop.f32.mrb[0].mxu0
          %1560 = vmatprep.mubr.bf16.mxu0 %v728
          %1561 = vmatmul.mubr.bf16.gmra.mrb[0].mxu0 %v704
          %v1562 = vpop.f32.mrb[0].mxu0
          %v1563 = vadd.f32 %v1498, %v1562
          %v1564 = vpop.f32.mrb[0].mxu0
          %v1565 = vpop.f32.mrb[0].mxu0
          %v1566 = vadd.f32 %v1501, %v1565
          %v1567 = vpop.f32.mrb[0].mxu0
          %1568 = vmatprep.mubr.bf16.mxu0 %v729
          %1569 = vmatmul.mubr.bf16.gmra.mrb[0].mxu0 %v705
          %v1570 = vpop.f32.mrb[0].mxu0
          %v1571 = vadd.f32 %v1506, %v1570
          %v1572 = vpop.f32.mrb[0].mxu0
          %v1573 = vpop.f32.mrb[0].mxu0
          %v1574 = vadd.f32 %v1509, %v1573
          %v1575 = vpop.f32.mrb[0].mxu0
          %1576 = vmatprep.mubr.bf16.mxu0 %v730
          %1577 = vmatmul.mubr.bf16.gmra.mrb[0].mxu0 %v706
          %v1578 = vpop.f32.mrb[0].mxu0
          %v1579 = vadd.f32 %v1514, %v1578
          %v1580 = vpop.f32.mrb[0].mxu0
          %v1581 = vpop.f32.mrb[0].mxu0
          %v1582 = vadd.f32 %v1517, %v1581
          %v1583 = vpop.f32.mrb[0].mxu0
          %1584 = vdwg.mxu0
          %1585 = vmatprep.subr.bf16.mxu0 0
          %1586 = vmatpush1.bf16.msra.mxu0 %v1294
          %1587 = vmatprep.subr.bf16.mxu0 0
          %1588 = vmatpush1.bf16.msra.mxu0 %v1295
          %1589 = vmatprep.subr.bf16.mxu0 0
          %1590 = vmatpush1.bf16.msra.mxu0 %v1296
          %1591 = vmatprep.subr.bf16.mxu0 0
          %1592 = vmatpush1.bf16.msra.mxu0 %v1297
          %1593 = vmatprep.subr.bf16.mxu0 0
          %1594 = vmatpush1.bf16.msra.mxu0 %v1298
          %1595 = vmatprep.subr.bf16.mxu0 0
          %1596 = vmatpush1.bf16.msra.mxu0 %v1299
          %1597 = vmatprep.subr.bf16.mxu0 0
          %1598 = vmatpush1.bf16.msra.mxu0 %v1300
          %1599 = vmatprep.subr.bf16.mxu0 0
          %1600 = vmatpush1.bf16.msra.mxu0 %v1301
          %1601 = vmatprep.subr.bf16.mxu0 0
          %1602 = vmatpush1.bf16.msra.mxu0 %v1302
          %1603 = vmatprep.subr.bf16.mxu0 0
          %1604 = vmatpush1.bf16.msra.mxu0 %v1303
          %1605 = vmatprep.subr.bf16.mxu0 0
          %1606 = vmatpush1.bf16.msra.mxu0 %v1304
          %1607 = vmatprep.subr.bf16.mxu0 0
          %1608 = vmatpush1.bf16.msra.mxu0 %v1305
          %1609 = vmatprep.subr.bf16.mxu0 0
          %1610 = vmatpush1.bf16.msra.mxu0 %v1306
          %1611 = vmatprep.subr.bf16.mxu0 0
          %1612 = vmatpush1.bf16.msra.mxu0 %v1307
          %1613 = vmatprep.subr.bf16.mxu0 0
          %1614 = vmatpush1.bf16.msra.mxu0 %v1308
          %1615 = vmatprep.subr.bf16.mxu0 0
          %1616 = vmatpush1.bf16.msra.mxu0 %v1309
          %1617 = vmatprep.mubr.bf16.mxu0 %v775
          %1618 = vmatmul.mubr.bf16.gmra.mrb[0].mxu0 %v751
          %v1619 = vpop.f32.mrb[0].mxu0
          %v1620 = vadd.f32 %v1555, %v1619
          %v1621 = vpop.f32.mrb[0].mxu0
          %v1622 = vpop.f32.mrb[0].mxu0
          %v1623 = vadd.f32 %v1558, %v1622
          %v1624 = vpop.f32.mrb[0].mxu0
          %1625 = vmatprep.mubr.bf16.mxu0 %v776
          %1626 = vmatmul.mubr.bf16.gmra.mrb[0].mxu0 %v752
          %v1627 = vpop.f32.mrb[0].mxu0
          %v1628 = vadd.f32 %v1563, %v1627
          %v1629 = vpop.f32.mrb[0].mxu0
          %v1630 = vpop.f32.mrb[0].mxu0
          %v1631 = vadd.f32 %v1566, %v1630
          %v1632 = vpop.f32.mrb[0].mxu0
          %1633 = vmatprep.mubr.bf16.mxu0 %v777
          %1634 = vmatmul.mubr.bf16.gmra.mrb[0].mxu0 %v753
          %v1635 = vpop.f32.mrb[0].mxu0
          %v1636 = vadd.f32 %v1571, %v1635
          %v1637 = vpop.f32.mrb[0].mxu0
          %v1638 = vpop.f32.mrb[0].mxu0
          %v1639 = vadd.f32 %v1574, %v1638
          %v1640 = vpop.f32.mrb[0].mxu0
          %1641 = vmatprep.mubr.bf16.mxu0 %v778
          %1642 = vmatmul.mubr.bf16.gmra.mrb[0].mxu0 %v754
          %v1643 = vpop.f32.mrb[0].mxu0
          %v1644 = vadd.f32 %v1579, %v1643
          %v1645 = vpop.f32.mrb[0].mxu0
          %v1646 = vpop.f32.mrb[0].mxu0
          %v1647 = vadd.f32 %v1582, %v1646
          %v1648 = vpop.f32.mrb[0].mxu0
          %1649 = vdwg.mxu0
          %1650 = vmatprep.subr.bf16.mxu0 0
          %1651 = vmatpush1.bf16.msra.mxu0 %v1310
          %1652 = vmatprep.subr.bf16.mxu0 0
          %1653 = vmatpush1.bf16.msra.mxu0 %v1311
          %1654 = vmatprep.subr.bf16.mxu0 0
          %1655 = vmatpush1.bf16.msra.mxu0 %v1312
          %1656 = vmatprep.subr.bf16.mxu0 0
          %1657 = vmatpush1.bf16.msra.mxu0 %v1313
          %1658 = vmatprep.subr.bf16.mxu0 0
          %1659 = vmatpush1.bf16.msra.mxu0 %v1314
          %1660 = vmatprep.subr.bf16.mxu0 0
          %1661 = vmatpush1.bf16.msra.mxu0 %v1315
          %1662 = vmatprep.subr.bf16.mxu0 0
          %1663 = vmatpush1.bf16.msra.mxu0 %v1316
          %1664 = vmatprep.subr.bf16.mxu0 0
          %1665 = vmatpush1.bf16.msra.mxu0 %v1317
          %1666 = vmatprep.subr.bf16.mxu0 0
          %1667 = vmatpush1.bf16.msra.mxu0 0
          %1668 = vmatprep.subr.bf16.mxu0 0
          %1669 = vmatpush1.bf16.msra.mxu0 0
          %1670 = vmatprep.subr.bf16.mxu0 0
          %1671 = vmatpush1.bf16.msra.mxu0 0
          %1672 = vmatprep.subr.bf16.mxu0 0
          %1673 = vmatpush1.bf16.msra.mxu0 0
          %1674 = vmatprep.subr.bf16.mxu0 0
          %1675 = vmatpush1.bf16.msra.mxu0 0
          %1676 = vmatprep.subr.bf16.mxu0 0
          %1677 = vmatpush1.bf16.msra.mxu0 0
          %1678 = vmatprep.subr.bf16.mxu0 0
          %1679 = vmatpush1.bf16.msra.mxu0 0
          %1680 = vmatprep.subr.bf16.mxu0 0
          %1681 = vmatpush1.bf16.msra.mxu0 0
          %1682 = vmatprep.mubr.bf16.mxu0 0
          %1683 = vmatmul.mubr.bf16.gmra.mrb[0].mxu0 %v799
          %v1684 = vpop.f32.mrb[0].mxu0
          %v1685 = vadd.f32 %v1620, %v1684
          %v1686 = vpop.f32.mrb[0].mxu0
          %v1687 = vpop.f32.mrb[0].mxu0
          %v1688 = vadd.f32 %v1623, %v1687
          %v1689 = vpop.f32.mrb[0].mxu0
          %1690 = vmatprep.mubr.bf16.mxu0 0
          %1691 = vmatmul.mubr.bf16.gmra.mrb[0].mxu0 %v800
          %v1692 = vpop.f32.mrb[0].mxu0
          %v1693 = vadd.f32 %v1628, %v1692
          %v1694 = vpop.f32.mrb[0].mxu0
          %v1695 = vpop.f32.mrb[0].mxu0
          %v1696 = vadd.f32 %v1631, %v1695
          %v1697 = vpop.f32.mrb[0].mxu0
          %1698 = vmatprep.mubr.bf16.mxu0 0
          %1699 = vmatmul.mubr.bf16.gmra.mrb[0].mxu0 %v801
          %v1700 = vpop.f32.mrb[0].mxu0
          %v1701 = vadd.f32 %v1636, %v1700
          %v1702 = vpop.f32.mrb[0].mxu0
          %v1703 = vpop.f32.mrb[0].mxu0
          %v1704 = vadd.f32 %v1639, %v1703
          %v1705 = vpop.f32.mrb[0].mxu0
          %1706 = vmatprep.mubr.bf16.mxu0 0
          %1707 = vmatmul.mubr.bf16.gmra.mrb[0].mxu0 %v802
          %v1708 = vpop.f32.mrb[0].mxu0
          %v1709 = vadd.f32 %v1644, %v1708
          %v1710 = vpop.f32.mrb[0].mxu0
          %v1711 = vpop.f32.mrb[0].mxu0
          %v1712 = vadd.f32 %v1647, %v1711
          %v1713 = vpop.f32.mrb[0].mxu0
          %1714 = vdwg.mxu0
          %v1715 = vpack.c.bf16 %v1688, %v1685
          %v1716 = vpack.c.bf16 %v1696, %v1693
          %v1717 = vpack.c.bf16 %v1704, %v1701
          %v1718 = vpack.c.bf16 %v1712, %v1709
          %v1719 = vld [vmem:[#allocation9] sm:$0xff]
          %v1720 = vld [vmem:[#allocation9 + $0x8] sm:$0xff]
          %v1721 = vld [vmem:[#allocation9 + $0x10] sm:$0xff]
          %v1722 = vld [vmem:[#allocation9 + $0x18] sm:$0xff]
          %v1723 = vld [vmem:[#allocation9 + $0x20] sm:$0xff]
          %v1724 = vld [vmem:[#allocation9 + $0x28] sm:$0xff]
          %v1725 = vld [vmem:[#allocation9 + $0x30] sm:$0xff]
          %v1726 = vld [vmem:[#allocation9 + $0x38] sm:$0xff]
          %v1727 = vld [vmem:[#allocation9 + $0x40] sm:$0xff]
          %v1728 = vld [vmem:[#allocation9 + $0x48] sm:$0xff]
          %v1729 = vld [vmem:[#allocation9 + $0x50] sm:$0xff]
          %v1730 = vld [vmem:[#allocation9 + $0x58] sm:$0xff]
          %v1731 = vld [vmem:[#allocation9 + $0x60] sm:$0xff]
          %v1732 = vld [vmem:[#allocation9 + $0x68] sm:$0xff]
          %v1733 = vld [vmem:[#allocation9 + $0x70] sm:$0xff]
          %v1734 = vld [vmem:[#allocation9 + $0x78] sm:$0xff]
          %v1735 = vld [vmem:[#allocation9 + $0x80] sm:$0xff]
          %v1736 = vld [vmem:[#allocation9 + $0x88] sm:$0xff]
          %v1737 = vld [vmem:[#allocation9 + $0x90] sm:$0xff]
          %v1738 = vld [vmem:[#allocation9 + $0x98] sm:$0xff]
          %v1739 = vld [vmem:[#allocation9 + $0xa0] sm:$0xff]
          %v1740 = vld [vmem:[#allocation9 + $0xa8] sm:$0xff]
          %v1741 = vld [vmem:[#allocation9 + $0xb0] sm:$0xff]
          %v1742 = vld [vmem:[#allocation9 + $0xb8] sm:$0xff]
          %v1743 = vld [vmem:[#allocation9 + $0xc0] sm:$0xff]
          %v1744 = vld [vmem:[#allocation9 + $0xc8] sm:$0xff]
          %v1745 = vld [vmem:[#allocation9 + $0xd0] sm:$0xff]
          %v1746 = vld [vmem:[#allocation9 + $0xd8] sm:$0xff]
          %v1747 = vld [vmem:[#allocation9 + $0xe0] sm:$0xff]
          %v1748 = vld [vmem:[#allocation9 + $0xe8] sm:$0xff]
          %v1749 = vld [vmem:[#allocation9 + $0xf0] sm:$0xff]
          %v1750 = vld [vmem:[#allocation9 + $0xf8] sm:$0xff]
          %v1783 = vunpack.c.l.b16 %v1719
          %v1784 = vunpack.c.h.b16 %v1719
          %v1785 = vunpack.c.l.b16 %v1720
          %v1786 = vunpack.c.h.b16 %v1720
          %v1787 = vunpack.c.l.b16 %v1721
          %v1788 = vunpack.c.h.b16 %v1721
          %v1789 = vunpack.c.l.b16 %v1722
          %v1790 = vunpack.c.h.b16 %v1722
          %v1791 = vunpack.c.l.b16 %v1723
          %v1792 = vunpack.c.h.b16 %v1723
          %v1793 = vunpack.c.l.b16 %v1724
          %v1794 = vunpack.c.h.b16 %v1724
          %v1795 = vunpack.c.l.b16 %v1725
          %v1796 = vunpack.c.h.b16 %v1725
          %v1797 = vunpack.c.l.b16 %v1726
          %v1798 = vunpack.c.h.b16 %v1726
          %v1799 = vunpack.c.l.b16 %v1727
          %v1800 = vunpack.c.h.b16 %v1727
          %v1801 = vunpack.c.l.b16 %v1728
          %v1802 = vunpack.c.h.b16 %v1728
          %v1803 = vunpack.c.l.b16 %v1729
          %v1804 = vunpack.c.h.b16 %v1729
          %v1805 = vunpack.c.l.b16 %v1730
          %v1806 = vunpack.c.h.b16 %v1730
          %v1807 = vunpack.c.l.b16 %v1731
          %v1808 = vunpack.c.h.b16 %v1731
          %v1809 = vunpack.c.l.b16 %v1732
          %v1810 = vunpack.c.h.b16 %v1732
          %v1811 = vunpack.c.l.b16 %v1733
          %v1812 = vunpack.c.h.b16 %v1733
          %v1813 = vunpack.c.l.b16 %v1734
          %v1814 = vunpack.c.h.b16 %v1734
          %v1815 = vunpack.c.l.b16 %v1735
          %v1816 = vunpack.c.h.b16 %v1735
          %v1817 = vunpack.c.l.b16 %v1736
          %v1818 = vunpack.c.h.b16 %v1736
          %v1819 = vunpack.c.l.b16 %v1737
          %v1820 = vunpack.c.h.b16 %v1737
          %v1821 = vunpack.c.l.b16 %v1738
          %v1822 = vunpack.c.h.b16 %v1738
          %v1823 = vunpack.c.l.b16 %v1739
          %v1824 = vunpack.c.h.b16 %v1739
          %v1825 = vunpack.c.l.b16 %v1740
          %v1826 = vunpack.c.h.b16 %v1740
          %v1827 = vunpack.c.l.b16 %v1741
          %v1828 = vunpack.c.h.b16 %v1741
          %v1829 = vunpack.c.l.b16 %v1742
          %v1830 = vunpack.c.h.b16 %v1742
          %v1831 = vunpack.c.l.b16 %v1743
          %v1832 = vunpack.c.h.b16 %v1743
          %v1833 = vunpack.c.l.b16 %v1744
          %v1834 = vunpack.c.h.b16 %v1744
          %v1835 = vunpack.c.l.b16 %v1745
          %v1836 = vunpack.c.h.b16 %v1745
          %v1837 = vunpack.c.l.b16 %v1746
          %v1838 = vunpack.c.h.b16 %v1746
          %v1839 = vunpack.c.l.b16 %v1747
          %v1840 = vunpack.c.h.b16 %v1747
          %v1841 = vunpack.c.l.b16 %v1748
          %v1842 = vunpack.c.h.b16 %v1748
          %v1843 = vunpack.c.l.b16 %v1749
          %v1844 = vunpack.c.h.b16 %v1749
          %v1845 = vunpack.c.l.b16 %v1750
          %v1846 = vunpack.c.h.b16 %v1750
          %v1847 = vpack.c.b16 %v1787, %v1783
          %v1848 = vpack.c.b16 %v1788, %v1784
          %v1849 = vpack.c.b16 %v1789, %v1785
          %v1850 = vpack.c.b16 %v1790, %v1786
          %v1851 = vpack.c.b16 %v1795, %v1791
          %v1852 = vpack.c.b16 %v1796, %v1792
          %v1853 = vpack.c.b16 %v1797, %v1793
          %v1854 = vpack.c.b16 %v1798, %v1794
          %v1855 = vpack.c.b16 %v1803, %v1799
          %v1856 = vpack.c.b16 %v1804, %v1800
          %v1857 = vpack.c.b16 %v1805, %v1801
          %v1858 = vpack.c.b16 %v1806, %v1802
          %v1859 = vpack.c.b16 %v1811, %v1807
          %v1860 = vpack.c.b16 %v1812, %v1808
          %v1861 = vpack.c.b16 %v1813, %v1809
          %v1862 = vpack.c.b16 %v1814, %v1810
          %v1863 = vpack.c.b16 %v1819, %v1815
          %v1864 = vpack.c.b16 %v1820, %v1816
          %v1865 = vpack.c.b16 %v1821, %v1817
          %v1866 = vpack.c.b16 %v1822, %v1818
          %v1867 = vpack.c.b16 %v1827, %v1823
          %v1868 = vpack.c.b16 %v1828, %v1824
          %v1869 = vpack.c.b16 %v1829, %v1825
          %v1870 = vpack.c.b16 %v1830, %v1826
          %v1871 = vpack.c.b16 %v1835, %v1831
          %v1872 = vpack.c.b16 %v1836, %v1832
          %v1873 = vpack.c.b16 %v1837, %v1833
          %v1874 = vpack.c.b16 %v1838, %v1834
          %v1875 = vpack.c.b16 %v1843, %v1839
          %v1876 = vpack.c.b16 %v1844, %v1840
          %v1877 = vpack.c.b16 %v1845, %v1841
          %v1878 = vpack.c.b16 %v1846, %v1842
          %1911 = vmatprep.subr.bf16.mxu0 %v1848
          %1912 = vmatpush1.bf16.msra.mxu0 %v1847
          %1913 = vmatprep.subr.bf16.mxu0 %v1852
          %1914 = vmatpush1.bf16.msra.mxu0 %v1851
          %1915 = vmatprep.subr.bf16.mxu0 %v1856
          %1916 = vmatpush1.bf16.msra.mxu0 %v1855
          %1917 = vmatprep.subr.bf16.mxu0 %v1860
          %1918 = vmatpush1.bf16.msra.mxu0 %v1859
          %1919 = vmatprep.subr.bf16.mxu0 %v1864
          %1920 = vmatpush1.bf16.msra.mxu0 %v1863
          %1921 = vmatprep.subr.bf16.mxu0 %v1868
          %1922 = vmatpush1.bf16.msra.mxu0 %v1867
          %1923 = vmatprep.subr.bf16.mxu0 %v1872
          %1924 = vmatpush1.bf16.msra.mxu0 %v1871
          %1925 = vmatprep.subr.bf16.mxu0 %v1876
          %1926 = vmatpush1.bf16.msra.mxu0 %v1875
          %1927 = vmatprep.subr.bf16.mxu0 0
          %1928 = vmatpush1.bf16.msra.mxu0 0
          %1929 = vmatprep.subr.bf16.mxu0 0
          %1930 = vmatpush1.bf16.msra.mxu0 0
          %1931 = vmatprep.subr.bf16.mxu0 0
          %1932 = vmatpush1.bf16.msra.mxu0 0
          %1933 = vmatprep.subr.bf16.mxu0 0
          %1934 = vmatpush1.bf16.msra.mxu0 0
          %1935 = vmatprep.subr.bf16.mxu0 0
          %1936 = vmatpush1.bf16.msra.mxu0 0
          %1937 = vmatprep.subr.bf16.mxu0 0
          %1938 = vmatpush1.bf16.msra.mxu0 0
          %1939 = vmatprep.subr.bf16.mxu0 0
          %1940 = vmatpush1.bf16.msra.mxu0 0
          %1941 = vmatprep.subr.bf16.mxu0 0
          %1942 = vmatpush1.bf16.msra.mxu0 0
          %1943 = vmatprep.mubr.bf16.mxu0 0
          %1944 = vmatmul.mubr.bf16.gmra.mrb[0].mxu0 %v1715
          %v1945 = vpop.f32.mrb[0].mxu0
          %v1946 = vadd.f32 0.0, %v1945
          %v1947 = vpop.f32.mrb[0].mxu0
          %v1948 = vadd.f32 0.0, %v1947
          %v1949 = vpop.f32.mrb[0].mxu0
          %v1950 = vadd.f32 0.0, %v1949
          %v1951 = vpop.f32.mrb[0].mxu0
          %v1952 = vadd.f32 0.0, %v1951
          %1953 = vmatprep.mubr.bf16.mxu0 0
          %1954 = vmatmul.mubr.bf16.gmra.mrb[0].mxu0 %v1716
          %v1955 = vpop.f32.mrb[0].mxu0
          %v1956 = vadd.f32 0.0, %v1955
          %v1957 = vpop.f32.mrb[0].mxu0
          %v1958 = vadd.f32 0.0, %v1957
          %v1959 = vpop.f32.mrb[0].mxu0
          %v1960 = vadd.f32 0.0, %v1959
          %v1961 = vpop.f32.mrb[0].mxu0
          %v1962 = vadd.f32 0.0, %v1961
          %1963 = vmatprep.mubr.bf16.mxu0 0
          %1964 = vmatmul.mubr.bf16.gmra.mrb[0].mxu0 %v1717
          %v1965 = vpop.f32.mrb[0].mxu0
          %v1966 = vadd.f32 0.0, %v1965
          %v1967 = vpop.f32.mrb[0].mxu0
          %v1968 = vadd.f32 0.0, %v1967
          %v1969 = vpop.f32.mrb[0].mxu0
          %v1970 = vadd.f32 0.0, %v1969
          %v1971 = vpop.f32.mrb[0].mxu0
          %v1972 = vadd.f32 0.0, %v1971
          %1973 = vmatprep.mubr.bf16.mxu0 0
          %1974 = vmatmul.mubr.bf16.gmra.mrb[0].mxu0 %v1718
          %v1975 = vpop.f32.mrb[0].mxu0
          %v1976 = vadd.f32 0.0, %v1975
          %v1977 = vpop.f32.mrb[0].mxu0
          %v1978 = vadd.f32 0.0, %v1977
          %v1979 = vpop.f32.mrb[0].mxu0
          %v1980 = vadd.f32 0.0, %v1979
          %v1981 = vpop.f32.mrb[0].mxu0
          %v1982 = vadd.f32 0.0, %v1981
          %1983 = vdwg.mxu0
          %1984 = vmatprep.subr.bf16.mxu0 %v1850
          %1985 = vmatpush1.bf16.msra.mxu0 %v1849
          %1986 = vmatprep.subr.bf16.mxu0 %v1854
          %1987 = vmatpush1.bf16.msra.mxu0 %v1853
          %1988 = vmatprep.subr.bf16.mxu0 %v1858
          %1989 = vmatpush1.bf16.msra.mxu0 %v1857
          %1990 = vmatprep.subr.bf16.mxu0 %v1862
          %1991 = vmatpush1.bf16.msra.mxu0 %v1861
          %1992 = vmatprep.subr.bf16.mxu0 %v1866
          %1993 = vmatpush1.bf16.msra.mxu0 %v1865
          %1994 = vmatprep.subr.bf16.mxu0 %v1870
          %1995 = vmatpush1.bf16.msra.mxu0 %v1869
          %1996 = vmatprep.subr.bf16.mxu0 %v1874
          %1997 = vmatpush1.bf16.msra.mxu0 %v1873
          %1998 = vmatprep.subr.bf16.mxu0 %v1878
          %1999 = vmatpush1.bf16.msra.mxu0 %v1877
          %2000 = vmatprep.subr.bf16.mxu0 0
          %2001 = vmatpush1.bf16.msra.mxu0 0
          %2002 = vmatprep.subr.bf16.mxu0 0
          %2003 = vmatpush1.bf16.msra.mxu0 0
          %2004 = vmatprep.subr.bf16.mxu0 0
          %2005 = vmatpush1.bf16.msra.mxu0 0
          %2006 = vmatprep.subr.bf16.mxu0 0
          %2007 = vmatpush1.bf16.msra.mxu0 0
          %2008 = vmatprep.subr.bf16.mxu0 0
          %2009 = vmatpush1.bf16.msra.mxu0 0
          %2010 = vmatprep.subr.bf16.mxu0 0
          %2011 = vmatpush1.bf16.msra.mxu0 0
          %2012 = vmatprep.subr.bf16.mxu0 0
          %2013 = vmatpush1.bf16.msra.mxu0 0
          %2014 = vmatprep.subr.bf16.mxu0 0
          %2015 = vmatpush1.bf16.msra.mxu0 0
          %2016 = vmatprep.mubr.bf16.mxu0 0
          %2017 = vmatmul.mubr.bf16.gmra.mrb[0].mxu0 %v1715
          %v2018 = vpop.f32.mrb[0].mxu0
          %v2019 = vadd.f32 0.0, %v2018
          %v2020 = vpop.f32.mrb[0].mxu0
          %v2021 = vadd.f32 0.0, %v2020
          %v2022 = vpop.f32.mrb[0].mxu0
          %v2023 = vadd.f32 0.0, %v2022
          %v2024 = vpop.f32.mrb[0].mxu0
          %v2025 = vadd.f32 0.0, %v2024
          %2026 = vmatprep.mubr.bf16.mxu0 0
          %2027 = vmatmul.mubr.bf16.gmra.mrb[0].mxu0 %v1716
          %v2028 = vpop.f32.mrb[0].mxu0
          %v2029 = vadd.f32 0.0, %v2028
          %v2030 = vpop.f32.mrb[0].mxu0
          %v2031 = vadd.f32 0.0, %v2030
          %v2032 = vpop.f32.mrb[0].mxu0
          %v2033 = vadd.f32 0.0, %v2032
          %v2034 = vpop.f32.mrb[0].mxu0
          %v2035 = vadd.f32 0.0, %v2034
          %2036 = vmatprep.mubr.bf16.mxu0 0
          %2037 = vmatmul.mubr.bf16.gmra.mrb[0].mxu0 %v1717
          %v2038 = vpop.f32.mrb[0].mxu0
          %v2039 = vadd.f32 0.0, %v2038
          %v2040 = vpop.f32.mrb[0].mxu0
          %v2041 = vadd.f32 0.0, %v2040
          %v2042 = vpop.f32.mrb[0].mxu0
          %v2043 = vadd.f32 0.0, %v2042
          %v2044 = vpop.f32.mrb[0].mxu0
          %v2045 = vadd.f32 0.0, %v2044
          %2046 = vmatprep.mubr.bf16.mxu0 0
          %2047 = vmatmul.mubr.bf16.gmra.mrb[0].mxu0 %v1718
          %v2048 = vpop.f32.mrb[0].mxu0
          %v2049 = vadd.f32 0.0, %v2048
          %v2050 = vpop.f32.mrb[0].mxu0
          %v2051 = vadd.f32 0.0, %v2050
          %v2052 = vpop.f32.mrb[0].mxu0
          %v2053 = vadd.f32 0.0, %v2052
          %v2054 = vpop.f32.mrb[0].mxu0
          %v2055 = vadd.f32 0.0, %v2054
          %2056 = vdwg.mxu0
          %v2073 = vcombine.low %v1946, %v1948
          %v2074 = vcombine.high %v1946, %v1948
          %v2075 = vcombine.low %v1950, %v1952
          %v2076 = vcombine.high %v1950, %v1952
          %v2077 = vcombine.low %v1956, %v1958
          %v2078 = vcombine.high %v1956, %v1958
          %v2079 = vcombine.low %v1960, %v1962
          %v2080 = vcombine.high %v1960, %v1962
          %v2081 = vcombine.low %v1966, %v1968
          %v2082 = vcombine.high %v1966, %v1968
          %v2083 = vcombine.low %v1970, %v1972
          %v2084 = vcombine.high %v1970, %v1972
          %v2085 = vcombine.low %v1976, %v1978
          %v2086 = vcombine.high %v1976, %v1978
          %v2087 = vcombine.low %v1980, %v1982
          %v2088 = vcombine.high %v1980, %v1982
          %v2106 = vunpack.c.l.s4 1935823168
          %v2107 = vunpack.c.0.s8 %v2106
          %v2108 = vlaneseq
          %v2109 = vshrl.u32 %v2108, 7
          %v2110 = vsub.s32 %v2107, %v2109
          %v2111 = vrot.slane %v2073, %v2110
          %v2113 = vunpack.c.l.s4 1935823168
          %v2114 = vunpack.c.0.s8 %v2113
          %v2115 = vlaneseq
          %v2116 = vshrl.u32 %v2115, 7
          %v2117 = vsub.s32 %v2114, %v2116
          %v2118 = vrot.slane %v2074, %v2117
          %v2120 = vunpack.c.l.s4 1935823168
          %v2121 = vunpack.c.0.s8 %v2120
          %v2122 = vlaneseq
          %v2123 = vshrl.u32 %v2122, 7
          %v2124 = vsub.s32 %v2121, %v2123
          %v2125 = vrot.slane %v2075, %v2124
          %v2127 = vunpack.c.l.s4 1935823168
          %v2128 = vunpack.c.0.s8 %v2127
          %v2129 = vlaneseq
          %v2130 = vshrl.u32 %v2129, 7
          %v2131 = vsub.s32 %v2128, %v2130
          %v2132 = vrot.slane %v2076, %v2131
          %v2134 = vunpack.c.l.s4 1935823168
          %v2135 = vunpack.c.0.s8 %v2134
          %v2136 = vlaneseq
          %v2137 = vshrl.u32 %v2136, 7
          %v2138 = vsub.s32 %v2135, %v2137
          %v2139 = vrot.slane %v2077, %v2138
          %v2141 = vunpack.c.l.s4 1935823168
          %v2142 = vunpack.c.0.s8 %v2141
          %v2143 = vlaneseq
          %v2144 = vshrl.u32 %v2143, 7
          %v2145 = vsub.s32 %v2142, %v2144
          %v2146 = vrot.slane %v2078, %v2145
          %v2148 = vunpack.c.l.s4 1935823168
          %v2149 = vunpack.c.0.s8 %v2148
          %v2150 = vlaneseq
          %v2151 = vshrl.u32 %v2150, 7
          %v2152 = vsub.s32 %v2149, %v2151
          %v2153 = vrot.slane %v2079, %v2152
          %v2155 = vunpack.c.l.s4 1935823168
          %v2156 = vunpack.c.0.s8 %v2155
          %v2157 = vlaneseq
          %v2158 = vshrl.u32 %v2157, 7
          %v2159 = vsub.s32 %v2156, %v2158
          %v2160 = vrot.slane %v2080, %v2159
          %v2162 = vunpack.c.l.s4 1935823168
          %v2163 = vunpack.c.0.s8 %v2162
          %v2164 = vlaneseq
          %v2165 = vshrl.u32 %v2164, 7
          %v2166 = vsub.s32 %v2163, %v2165
          %v2167 = vrot.slane %v2081, %v2166
          %v2169 = vunpack.c.l.s4 1935823168
          %v2170 = vunpack.c.0.s8 %v2169
          %v2171 = vlaneseq
          %v2172 = vshrl.u32 %v2171, 7
          %v2173 = vsub.s32 %v2170, %v2172
          %v2174 = vrot.slane %v2082, %v2173
          %v2176 = vunpack.c.l.s4 1935823168
          %v2177 = vunpack.c.0.s8 %v2176
          %v2178 = vlaneseq
          %v2179 = vshrl.u32 %v2178, 7
          %v2180 = vsub.s32 %v2177, %v2179
          %v2181 = vrot.slane %v2083, %v2180
          %v2183 = vunpack.c.l.s4 1935823168
          %v2184 = vunpack.c.0.s8 %v2183
          %v2185 = vlaneseq
          %v2186 = vshrl.u32 %v2185, 7
          %v2187 = vsub.s32 %v2184, %v2186
          %v2188 = vrot.slane %v2084, %v2187
          %v2190 = vunpack.c.l.s4 1935823168
          %v2191 = vunpack.c.0.s8 %v2190
          %v2192 = vlaneseq
          %v2193 = vshrl.u32 %v2192, 7
          %v2194 = vsub.s32 %v2191, %v2193
          %v2195 = vrot.slane %v2085, %v2194
          %v2197 = vunpack.c.l.s4 1935823168
          %v2198 = vunpack.c.0.s8 %v2197
          %v2199 = vlaneseq
          %v2200 = vshrl.u32 %v2199, 7
          %v2201 = vsub.s32 %v2198, %v2200
          %v2202 = vrot.slane %v2086, %v2201
          %v2204 = vunpack.c.l.s4 1935823168
          %v2205 = vunpack.c.0.s8 %v2204
          %v2206 = vlaneseq
          %v2207 = vshrl.u32 %v2206, 7
          %v2208 = vsub.s32 %v2205, %v2207
          %v2209 = vrot.slane %v2087, %v2208
          %v2211 = vunpack.c.l.s4 1935823168
          %v2212 = vunpack.c.0.s8 %v2211
          %v2213 = vlaneseq
          %v2214 = vshrl.u32 %v2213, 7
          %v2215 = vsub.s32 %v2212, %v2214
          %v2216 = vrot.slane %v2088, %v2215
          %v2217 = vld [vmem:[%s4] sm:$0x1]
          %v2219 = vlaneseq
          %v2220 = vshrl.u32 %v2219, 7
          %v2221 = vsub.s32 0, %v2220
          %v2222 = vrot.slane %v2217, %v2221
          %v2224 = vadd.f32 %v2111, %v2222
          %v2225 = vadd.f32 %v2118, %v2222
          %v2226 = vadd.f32 %v2125, %v2222
          %v2227 = vadd.f32 %v2132, %v2222
          %v2228 = vadd.f32 %v2139, %v2222
          %v2229 = vadd.f32 %v2146, %v2222
          %v2230 = vadd.f32 %v2153, %v2222
          %v2231 = vadd.f32 %v2160, %v2222
          %v2232 = vadd.f32 %v2167, %v2222
          %v2233 = vadd.f32 %v2174, %v2222
          %v2234 = vadd.f32 %v2181, %v2222
          %v2235 = vadd.f32 %v2188, %v2222
          %v2236 = vadd.f32 %v2195, %v2222
          %v2237 = vadd.f32 %v2202, %v2222
          %v2238 = vadd.f32 %v2209, %v2222
          %v2239 = vadd.f32 %v2216, %v2222
          %v2256 = vcombine.low %v2019, %v2021
          %v2257 = vcombine.high %v2019, %v2021
          %v2258 = vcombine.low %v2023, %v2025
          %v2259 = vcombine.high %v2023, %v2025
          %v2260 = vcombine.low %v2029, %v2031
          %v2261 = vcombine.high %v2029, %v2031
          %v2262 = vcombine.low %v2033, %v2035
          %v2263 = vcombine.high %v2033, %v2035
          %v2264 = vcombine.low %v2039, %v2041
          %v2265 = vcombine.high %v2039, %v2041
          %v2266 = vcombine.low %v2043, %v2045
          %v2267 = vcombine.high %v2043, %v2045
          %v2268 = vcombine.low %v2049, %v2051
          %v2269 = vcombine.high %v2049, %v2051
          %v2270 = vcombine.low %v2053, %v2055
          %v2271 = vcombine.high %v2053, %v2055
          %v2289 = vunpack.c.l.s4 1935823168
          %v2290 = vunpack.c.0.s8 %v2289
          %v2291 = vlaneseq
          %v2292 = vshrl.u32 %v2291, 7
          %v2293 = vsub.s32 %v2290, %v2292
          %v2294 = vrot.slane %v2256, %v2293
          %v2296 = vunpack.c.l.s4 1935823168
          %v2297 = vunpack.c.0.s8 %v2296
          %v2298 = vlaneseq
          %v2299 = vshrl.u32 %v2298, 7
          %v2300 = vsub.s32 %v2297, %v2299
          %v2301 = vrot.slane %v2257, %v2300
          %v2303 = vunpack.c.l.s4 1935823168
          %v2304 = vunpack.c.0.s8 %v2303
          %v2305 = vlaneseq
          %v2306 = vshrl.u32 %v2305, 7
          %v2307 = vsub.s32 %v2304, %v2306
          %v2308 = vrot.slane %v2258, %v2307
          %v2310 = vunpack.c.l.s4 1935823168
          %v2311 = vunpack.c.0.s8 %v2310
          %v2312 = vlaneseq
          %v2313 = vshrl.u32 %v2312, 7
          %v2314 = vsub.s32 %v2311, %v2313
          %v2315 = vrot.slane %v2259, %v2314
          %v2317 = vunpack.c.l.s4 1935823168
          %v2318 = vunpack.c.0.s8 %v2317
          %v2319 = vlaneseq
          %v2320 = vshrl.u32 %v2319, 7
          %v2321 = vsub.s32 %v2318, %v2320
          %v2322 = vrot.slane %v2260, %v2321
          %v2324 = vunpack.c.l.s4 1935823168
          %v2325 = vunpack.c.0.s8 %v2324
          %v2326 = vlaneseq
          %v2327 = vshrl.u32 %v2326, 7
          %v2328 = vsub.s32 %v2325, %v2327
          %v2329 = vrot.slane %v2261, %v2328
          %v2331 = vunpack.c.l.s4 1935823168
          %v2332 = vunpack.c.0.s8 %v2331
          %v2333 = vlaneseq
          %v2334 = vshrl.u32 %v2333, 7
          %v2335 = vsub.s32 %v2332, %v2334
          %v2336 = vrot.slane %v2262, %v2335
          %v2338 = vunpack.c.l.s4 1935823168
          %v2339 = vunpack.c.0.s8 %v2338
          %v2340 = vlaneseq
          %v2341 = vshrl.u32 %v2340, 7
          %v2342 = vsub.s32 %v2339, %v2341
          %v2343 = vrot.slane %v2263, %v2342
          %v2345 = vunpack.c.l.s4 1935823168
          %v2346 = vunpack.c.0.s8 %v2345
          %v2347 = vlaneseq
          %v2348 = vshrl.u32 %v2347, 7
          %v2349 = vsub.s32 %v2346, %v2348
          %v2350 = vrot.slane %v2264, %v2349
          %v2352 = vunpack.c.l.s4 1935823168
          %v2353 = vunpack.c.0.s8 %v2352
          %v2354 = vlaneseq
          %v2355 = vshrl.u32 %v2354, 7
          %v2356 = vsub.s32 %v2353, %v2355
          %v2357 = vrot.slane %v2265, %v2356
          %v2359 = vunpack.c.l.s4 1935823168
          %v2360 = vunpack.c.0.s8 %v2359
          %v2361 = vlaneseq
          %v2362 = vshrl.u32 %v2361, 7
          %v2363 = vsub.s32 %v2360, %v2362
          %v2364 = vrot.slane %v2266, %v2363
          %v2366 = vunpack.c.l.s4 1935823168
          %v2367 = vunpack.c.0.s8 %v2366
          %v2368 = vlaneseq
          %v2369 = vshrl.u32 %v2368, 7
          %v2370 = vsub.s32 %v2367, %v2369
          %v2371 = vrot.slane %v2267, %v2370
          %v2373 = vunpack.c.l.s4 1935823168
          %v2374 = vunpack.c.0.s8 %v2373
          %v2375 = vlaneseq
          %v2376 = vshrl.u32 %v2375, 7
          %v2377 = vsub.s32 %v2374, %v2376
          %v2378 = vrot.slane %v2268, %v2377
          %v2380 = vunpack.c.l.s4 1935823168
          %v2381 = vunpack.c.0.s8 %v2380
          %v2382 = vlaneseq
          %v2383 = vshrl.u32 %v2382, 7
          %v2384 = vsub.s32 %v2381, %v2383
          %v2385 = vrot.slane %v2269, %v2384
          %v2387 = vunpack.c.l.s4 1935823168
          %v2388 = vunpack.c.0.s8 %v2387
          %v2389 = vlaneseq
          %v2390 = vshrl.u32 %v2389, 7
          %v2391 = vsub.s32 %v2388, %v2390
          %v2392 = vrot.slane %v2270, %v2391
          %v2394 = vunpack.c.l.s4 1935823168
          %v2395 = vunpack.c.0.s8 %v2394
          %v2396 = vlaneseq
          %v2397 = vshrl.u32 %v2396, 7
          %v2398 = vsub.s32 %v2395, %v2397
          %v2399 = vrot.slane %v2271, %v2398
          %v2400 = vadd.f32 %v2294, %v2222
          %v2401 = vadd.f32 %v2301, %v2222
          %v2402 = vadd.f32 %v2308, %v2222
          %v2403 = vadd.f32 %v2315, %v2222
          %v2404 = vadd.f32 %v2322, %v2222
          %v2405 = vadd.f32 %v2329, %v2222
          %v2406 = vadd.f32 %v2336, %v2222
          %v2407 = vadd.f32 %v2343, %v2222
          %v2408 = vadd.f32 %v2350, %v2222
          %v2409 = vadd.f32 %v2357, %v2222
          %v2410 = vadd.f32 %v2364, %v2222
          %v2411 = vadd.f32 %v2371, %v2222
          %v2412 = vadd.f32 %v2378, %v2222
          %v2413 = vadd.f32 %v2385, %v2222
          %v2414 = vadd.f32 %v2392, %v2222
          %v2415 = vadd.f32 %v2399, %v2222
          %s2416 = scalar_lea.vmem [#allocation3], 24
          %2417 = vst [vmem:[%s2416 + $0x1] sm:$0xff] %v2224
          %2418 = vst [vmem:[%s2416 + $0x9] sm:$0xff] %v2225
          %2419 = vst [vmem:[%s2416 + $0x19] sm:$0xff] %v2400
          %2420 = vst [vmem:[%s2416 + $0x21] sm:$0xff] %v2401
          %2421 = vst [vmem:[%s2416 + $0x31] sm:$0xff] %v2226
          %2422 = vst [vmem:[%s2416 + $0x39] sm:$0xff] %v2227
          %2423 = vst [vmem:[%s2416 + $0x49] sm:$0xff] %v2402
          %2424 = vst [vmem:[%s2416 + $0x51] sm:$0xff] %v2403
          %2425 = vst [vmem:[%s2416 + $0x61] sm:$0xff] %v2228
          %2426 = vst [vmem:[%s2416 + $0x69] sm:$0xff] %v2229
          %2427 = vst [vmem:[%s2416 + $0x79] sm:$0xff] %v2404
          %2428 = vst [vmem:[%s2416 + $0x81] sm:$0xff] %v2405
          %2429 = vst [vmem:[%s2416 + $0x91] sm:$0xff] %v2230
          %2430 = vst [vmem:[%s2416 + $0x99] sm:$0xff] %v2231
          %2431 = vst [vmem:[%s2416 + $0xa9] sm:$0xff] %v2406
          %2432 = vst [vmem:[%s2416 + $0xb1] sm:$0xff] %v2407
          %2433 = vst [vmem:[%s2416 + $0xc1] sm:$0xff] %v2232
          %2434 = vst [vmem:[%s2416 + $0xc9] sm:$0xff] %v2233
          %2435 = vst [vmem:[%s2416 + $0xd9] sm:$0xff] %v2408
          %2436 = vst [vmem:[%s2416 + $0xe1] sm:$0xff] %v2409
          %2437 = vst [vmem:[%s2416 + $0xf1] sm:$0xff] %v2234
          %2438 = vst [vmem:[%s2416 + $0xf9] sm:$0xff] %v2235
          %2439 = vst [vmem:[%s2416 + $0x109] sm:$0xff] %v2410
          %2440 = vst [vmem:[%s2416 + $0x111] sm:$0xff] %v2411
          %2441 = vst [vmem:[%s2416 + $0x121] sm:$0xff] %v2236
          %2442 = vst [vmem:[%s2416 + $0x129] sm:$0xff] %v2237
          %2443 = vst [vmem:[%s2416 + $0x139] sm:$0xff] %v2412
          %2444 = vst [vmem:[%s2416 + $0x141] sm:$0xff] %v2413
          %2445 = vst [vmem:[%s2416 + $0x151] sm:$0xff] %v2238
          %2446 = vst [vmem:[%s2416 + $0x159] sm:$0xff] %v2239
          %2447 = vst [vmem:[%s2416 + $0x169] sm:$0xff] %v2414
          %2448 = vst [vmem:[%s2416 + $0x171] sm:$0xff] %v2415
        $region68: #{tpu_custom_call.1} parent=47 // pred_fallthru
          _
        %s2449 = smul.u32 %s31, 8
        %s2450 = smul.u32 %s2449, 24
        %s2451 = scalar_lea.vmem [#allocation3], %s2450
        %v2452 = vld [vmem:[%s2451] sm:$0xff]
        %v2453 = vld [vmem:[%s2451 + $0x8] sm:$0xff]
        %v2454 = vld [vmem:[%s2451 + $0x18] sm:$0xff]
        %v2455 = vld [vmem:[%s2451 + $0x20] sm:$0xff]
        %v2456 = vld [vmem:[%s2451 + $0x30] sm:$0xff]
        %v2457 = vld [vmem:[%s2451 + $0x38] sm:$0xff]
        %v2458 = vld [vmem:[%s2451 + $0x48] sm:$0xff]
        %v2459 = vld [vmem:[%s2451 + $0x50] sm:$0xff]
        %v2460 = vld [vmem:[%s2451 + $0x60] sm:$0xff]
        %v2461 = vld [vmem:[%s2451 + $0x68] sm:$0xff]
        %v2462 = vld [vmem:[%s2451 + $0x78] sm:$0xff]
        %v2463 = vld [vmem:[%s2451 + $0x80] sm:$0xff]
        %v2464 = vld [vmem:[%s2451 + $0x90] sm:$0xff]
        %v2465 = vld [vmem:[%s2451 + $0x98] sm:$0xff]
        %v2466 = vld [vmem:[%s2451 + $0xa8] sm:$0xff]
        %v2467 = vld [vmem:[%s2451 + $0xb0] sm:$0xff]
        %v2468 = vpack.c.bf16 %v2453, %v2452
        %v2469 = vpack.c.bf16 %v2455, %v2454
        %v2470 = vpack.c.bf16 %v2457, %v2456
        %v2471 = vpack.c.bf16 %v2459, %v2458
        %v2472 = vpack.c.bf16 %v2461, %v2460
        %v2473 = vpack.c.bf16 %v2463, %v2462
        %v2474 = vpack.c.bf16 %v2465, %v2464
        %v2475 = vpack.c.bf16 %v2467, %v2466
        %v2476 = vld [vmem:[%s2451 + $0x1] sm:$0xff]
        %v2477 = vld [vmem:[%s2451 + $0x9] sm:$0xff]
        %v2478 = vld [vmem:[%s2451 + $0x19] sm:$0xff]
        %v2479 = vld [vmem:[%s2451 + $0x21] sm:$0xff]
        %v2480 = vld [vmem:[%s2451 + $0x31] sm:$0xff]
        %v2481 = vld [vmem:[%s2451 + $0x39] sm:$0xff]
        %v2482 = vld [vmem:[%s2451 + $0x49] sm:$0xff]
        %v2483 = vld [vmem:[%s2451 + $0x51] sm:$0xff]
        %v2484 = vld [vmem:[%s2451 + $0x61] sm:$0xff]
        %v2485 = vld [vmem:[%s2451 + $0x69] sm:$0xff]
        %v2486 = vld [vmem:[%s2451 + $0x79] sm:$0xff]
        %v2487 = vld [vmem:[%s2451 + $0x81] sm:$0xff]
        %v2488 = vld [vmem:[%s2451 + $0x91] sm:$0xff]
        %v2489 = vld [vmem:[%s2451 + $0x99] sm:$0xff]
        %v2490 = vld [vmem:[%s2451 + $0xa9] sm:$0xff]
        %v2491 = vld [vmem:[%s2451 + $0xb1] sm:$0xff]
        %v2492 = vpack.c.bf16 %v2477, %v2476
        %v2493 = vpack.c.bf16 %v2479, %v2478
        %v2494 = vpack.c.bf16 %v2481, %v2480
        %v2495 = vpack.c.bf16 %v2483, %v2482
        %v2496 = vpack.c.bf16 %v2485, %v2484
        %v2497 = vpack.c.bf16 %v2487, %v2486
        %v2498 = vpack.c.bf16 %v2489, %v2488
        %v2499 = vpack.c.bf16 %v2491, %v2490
        %v2500 = vld [vmem:[%s2451 + $0x2] sm:$0xff]
        %v2501 = vld [vmem:[%s2451 + $0xa] sm:$0xff]
        %v2502 = vld [vmem:[%s2451 + $0x1a] sm:$0xff]
        %v2503 = vld [vmem:[%s2451 + $0x22] sm:$0xff]
        %v2504 = vld [vmem:[%s2451 + $0x32] sm:$0xff]
        %v2505 = vld [vmem:[%s2451 + $0x3a] sm:$0xff]
        %v2506 = vld [vmem:[%s2451 + $0x4a] sm:$0xff]
        %v2507 = vld [vmem:[%s2451 + $0x52] sm:$0xff]
        %v2508 = vld [vmem:[%s2451 + $0x62] sm:$0xff]
        %v2509 = vld [vmem:[%s2451 + $0x6a] sm:$0xff]
        %v2510 = vld [vmem:[%s2451 + $0x7a] sm:$0xff]
        %v2511 = vld [vmem:[%s2451 + $0x82] sm:$0xff]
        %v2512 = vld [vmem:[%s2451 + $0x92] sm:$0xff]
        %v2513 = vld [vmem:[%s2451 + $0x9a] sm:$0xff]
        %v2514 = vld [vmem:[%s2451 + $0xaa] sm:$0xff]
        %v2515 = vld [vmem:[%s2451 + $0xb2] sm:$0xff]
        %v2516 = vpack.c.bf16 %v2501, %v2500
        %v2517 = vpack.c.bf16 %v2503, %v2502
        %v2518 = vpack.c.bf16 %v2505, %v2504
        %v2519 = vpack.c.bf16 %v2507, %v2506
        %v2520 = vpack.c.bf16 %v2509, %v2508
        %v2521 = vpack.c.bf16 %v2511, %v2510
        %v2522 = vpack.c.bf16 %v2513, %v2512
        %v2523 = vpack.c.bf16 %v2515, %v2514
        %s2524 = sadd.s32 %s2449, 1
        %s2525 = smul.u32 %s2524, 24
        %s2526 = scalar_lea.vmem [#allocation3], %s2525
        %v2527 = vld [vmem:[%s2526] sm:$0xff]
        %v2528 = vld [vmem:[%s2526 + $0x8] sm:$0xff]
        %v2529 = vld [vmem:[%s2526 + $0x18] sm:$0xff]
        %v2530 = vld [vmem:[%s2526 + $0x20] sm:$0xff]
        %v2531 = vld [vmem:[%s2526 + $0x30] sm:$0xff]
        %v2532 = vld [vmem:[%s2526 + $0x38] sm:$0xff]
        %v2533 = vld [vmem:[%s2526 + $0x48] sm:$0xff]
        %v2534 = vld [vmem:[%s2526 + $0x50] sm:$0xff]
        %v2535 = vld [vmem:[%s2526 + $0x60] sm:$0xff]
        %v2536 = vld [vmem:[%s2526 + $0x68] sm:$0xff]
        %v2537 = vld [vmem:[%s2526 + $0x78] sm:$0xff]
        %v2538 = vld [vmem:[%s2526 + $0x80] sm:$0xff]
        %v2539 = vld [vmem:[%s2526 + $0x90] sm:$0xff]
        %v2540 = vld [vmem:[%s2526 + $0x98] sm:$0xff]
        %v2541 = vld [vmem:[%s2526 + $0xa8] sm:$0xff]
        %v2542 = vld [vmem:[%s2526 + $0xb0] sm:$0xff]
        %v2543 = vpack.c.bf16 %v2528, %v2527
        %v2544 = vpack.c.bf16 %v2530, %v2529
        %v2545 = vpack.c.bf16 %v2532, %v2531
        %v2546 = vpack.c.bf16 %v2534, %v2533
        %v2547 = vpack.c.bf16 %v2536, %v2535
        %v2548 = vpack.c.bf16 %v2538, %v2537
        %v2549 = vpack.c.bf16 %v2540, %v2539
        %v2550 = vpack.c.bf16 %v2542, %v2541
        %v2551 = vld [vmem:[%s2526 + $0x1] sm:$0xff]
        %v2552 = vld [vmem:[%s2526 + $0x9] sm:$0xff]
        %v2553 = vld [vmem:[%s2526 + $0x19] sm:$0xff]
        %v2554 = vld [vmem:[%s2526 + $0x21] sm:$0xff]
        %v2555 = vld [vmem:[%s2526 + $0x31] sm:$0xff]
        %v2556 = vld [vmem:[%s2526 + $0x39] sm:$0xff]
        %v2557 = vld [vmem:[%s2526 + $0x49] sm:$0xff]
        %v2558 = vld [vmem:[%s2526 + $0x51] sm:$0xff]
        %v2559 = vld [vmem:[%s2526 + $0x61] sm:$0xff]
        %v2560 = vld [vmem:[%s2526 + $0x69] sm:$0xff]
        %v2561 = vld [vmem:[%s2526 + $0x79] sm:$0xff]
        %v2562 = vld [vmem:[%s2526 + $0x81] sm:$0xff]
        %v2563 = vld [vmem:[%s2526 + $0x91] sm:$0xff]
        %v2564 = vld [vmem:[%s2526 + $0x99] sm:$0xff]
        %v2565 = vld [vmem:[%s2526 + $0xa9] sm:$0xff]
        %v2566 = vld [vmem:[%s2526 + $0xb1] sm:$0xff]
        %v2567 = vpack.c.bf16 %v2552, %v2551
        %v2568 = vpack.c.bf16 %v2554, %v2553
        %v2569 = vpack.c.bf16 %v2556, %v2555
        %v2570 = vpack.c.bf16 %v2558, %v2557
        %v2571 = vpack.c.bf16 %v2560, %v2559
        %v2572 = vpack.c.bf16 %v2562, %v2561
        %v2573 = vpack.c.bf16 %v2564, %v2563
        %v2574 = vpack.c.bf16 %v2566, %v2565
        %v2575 = vld [vmem:[%s2526 + $0x2] sm:$0xff]
        %v2576 = vld [vmem:[%s2526 + $0xa] sm:$0xff]
        %v2577 = vld [vmem:[%s2526 + $0x1a] sm:$0xff]
        %v2578 = vld [vmem:[%s2526 + $0x22] sm:$0xff]
        %v2579 = vld [vmem:[%s2526 + $0x32] sm:$0xff]
        %v2580 = vld [vmem:[%s2526 + $0x3a] sm:$0xff]
        %v2581 = vld [vmem:[%s2526 + $0x4a] sm:$0xff]
        %v2582 = vld [vmem:[%s2526 + $0x52] sm:$0xff]
        %v2583 = vld [vmem:[%s2526 + $0x62] sm:$0xff]
        %v2584 = vld [vmem:[%s2526 + $0x6a] sm:$0xff]
        %v2585 = vld [vmem:[%s2526 + $0x7a] sm:$0xff]
        %v2586 = vld [vmem:[%s2526 + $0x82] sm:$0xff]
        %v2587 = vld [vmem:[%s2526 + $0x92] sm:$0xff]
        %v2588 = vld [vmem:[%s2526 + $0x9a] sm:$0xff]
        %v2589 = vld [vmem:[%s2526 + $0xaa] sm:$0xff]
        %v2590 = vld [vmem:[%s2526 + $0xb2] sm:$0xff]
        %v2591 = vpack.c.bf16 %v2576, %v2575
        %v2592 = vpack.c.bf16 %v2578, %v2577
        %v2593 = vpack.c.bf16 %v2580, %v2579
        %v2594 = vpack.c.bf16 %v2582, %v2581
        %v2595 = vpack.c.bf16 %v2584, %v2583
        %v2596 = vpack.c.bf16 %v2586, %v2585
        %v2597 = vpack.c.bf16 %v2588, %v2587
        %v2598 = vpack.c.bf16 %v2590, %v2589
        %s2599 = sadd.s32 %s2449, 2
        %s2600 = smul.u32 %s2599, 24
        %s2601 = scalar_lea.vmem [#allocation3], %s2600
        %v2602 = vld [vmem:[%s2601] sm:$0xff]
        %v2603 = vld [vmem:[%s2601 + $0x8] sm:$0xff]
        %v2604 = vld [vmem:[%s2601 + $0x18] sm:$0xff]
        %v2605 = vld [vmem:[%s2601 + $0x20] sm:$0xff]
        %v2606 = vld [vmem:[%s2601 + $0x30] sm:$0xff]
        %v2607 = vld [vmem:[%s2601 + $0x38] sm:$0xff]
        %v2608 = vld [vmem:[%s2601 + $0x48] sm:$0xff]
        %v2609 = vld [vmem:[%s2601 + $0x50] sm:$0xff]
        %v2610 = vld [vmem:[%s2601 + $0x60] sm:$0xff]
        %v2611 = vld [vmem:[%s2601 + $0x68] sm:$0xff]
        %v2612 = vld [vmem:[%s2601 + $0x78] sm:$0xff]
        %v2613 = vld [vmem:[%s2601 + $0x80] sm:$0xff]
        %v2614 = vld [vmem:[%s2601 + $0x90] sm:$0xff]
        %v2615 = vld [vmem:[%s2601 + $0x98] sm:$0xff]
        %v2616 = vld [vmem:[%s2601 + $0xa8] sm:$0xff]
        %v2617 = vld [vmem:[%s2601 + $0xb0] sm:$0xff]
        %v2618 = vpack.c.bf16 %v2603, %v2602
        %v2619 = vpack.c.bf16 %v2605, %v2604
        %v2620 = vpack.c.bf16 %v2607, %v2606
        %v2621 = vpack.c.bf16 %v2609, %v2608
        %v2622 = vpack.c.bf16 %v2611, %v2610
        %v2623 = vpack.c.bf16 %v2613, %v2612
        %v2624 = vpack.c.bf16 %v2615, %v2614
        %v2625 = vpack.c.bf16 %v2617, %v2616
        %v2626 = vld [vmem:[%s2601 + $0x1] sm:$0xff]
        %v2627 = vld [vmem:[%s2601 + $0x9] sm:$0xff]
        %v2628 = vld [vmem:[%s2601 + $0x19] sm:$0xff]
        %v2629 = vld [vmem:[%s2601 + $0x21] sm:$0xff]
        %v2630 = vld [vmem:[%s2601 + $0x31] sm:$0xff]
        %v2631 = vld [vmem:[%s2601 + $0x39] sm:$0xff]
        %v2632 = vld [vmem:[%s2601 + $0x49] sm:$0xff]
        %v2633 = vld [vmem:[%s2601 + $0x51] sm:$0xff]
        %v2634 = vld [vmem:[%s2601 + $0x61] sm:$0xff]
        %v2635 = vld [vmem:[%s2601 + $0x69] sm:$0xff]
        %v2636 = vld [vmem:[%s2601 + $0x79] sm:$0xff]
        %v2637 = vld [vmem:[%s2601 + $0x81] sm:$0xff]
        %v2638 = vld [vmem:[%s2601 + $0x91] sm:$0xff]
        %v2639 = vld [vmem:[%s2601 + $0x99] sm:$0xff]
        %v2640 = vld [vmem:[%s2601 + $0xa9] sm:$0xff]
        %v2641 = vld [vmem:[%s2601 + $0xb1] sm:$0xff]
        %v2642 = vpack.c.bf16 %v2627, %v2626
        %v2643 = vpack.c.bf16 %v2629, %v2628
        %v2644 = vpack.c.bf16 %v2631, %v2630
        %v2645 = vpack.c.bf16 %v2633, %v2632
        %v2646 = vpack.c.bf16 %v2635, %v2634
        %v2647 = vpack.c.bf16 %v2637, %v2636
        %v2648 = vpack.c.bf16 %v2639, %v2638
        %v2649 = vpack.c.bf16 %v2641, %v2640
        %v2650 = vld [vmem:[%s2601 + $0x2] sm:$0xff]
        %v2651 = vld [vmem:[%s2601 + $0xa] sm:$0xff]
        %v2652 = vld [vmem:[%s2601 + $0x1a] sm:$0xff]
        %v2653 = vld [vmem:[%s2601 + $0x22] sm:$0xff]
        %v2654 = vld [vmem:[%s2601 + $0x32] sm:$0xff]
        %v2655 = vld [vmem:[%s2601 + $0x3a] sm:$0xff]
        %v2656 = vld [vmem:[%s2601 + $0x4a] sm:$0xff]
        %v2657 = vld [vmem:[%s2601 + $0x52] sm:$0xff]
        %v2658 = vld [vmem:[%s2601 + $0x62] sm:$0xff]
        %v2659 = vld [vmem:[%s2601 + $0x6a] sm:$0xff]
        %v2660 = vld [vmem:[%s2601 + $0x7a] sm:$0xff]
        %v2661 = vld [vmem:[%s2601 + $0x82] sm:$0xff]
        %v2662 = vld [vmem:[%s2601 + $0x92] sm:$0xff]
        %v2663 = vld [vmem:[%s2601 + $0x9a] sm:$0xff]
        %v2664 = vld [vmem:[%s2601 + $0xaa] sm:$0xff]
        %v2665 = vld [vmem:[%s2601 + $0xb2] sm:$0xff]
        %v2666 = vpack.c.bf16 %v2651, %v2650
        %v2667 = vpack.c.bf16 %v2653, %v2652
        %v2668 = vpack.c.bf16 %v2655, %v2654
        %v2669 = vpack.c.bf16 %v2657, %v2656
        %v2670 = vpack.c.bf16 %v2659, %v2658
        %v2671 = vpack.c.bf16 %v2661, %v2660
        %v2672 = vpack.c.bf16 %v2663, %v2662
        %v2673 = vpack.c.bf16 %v2665, %v2664
        %v2674 = vld [vmem:[#allocation10] sm:$0xf]
        %v2675 = vld [vmem:[#allocation10 + $0x4] sm:$0xf]
        %v2676 = vld [vmem:[#allocation10 + $0x8] sm:$0xf]
        %v2677 = vld [vmem:[#allocation10 + $0xc] sm:$0xf]
        %v2678 = vld [vmem:[#allocation10 + $0x10] sm:$0xf]
        %v2679 = vld [vmem:[#allocation10 + $0x14] sm:$0xf]
        %v2680 = vld [vmem:[#allocation10 + $0x18] sm:$0xf]
        %v2681 = vld [vmem:[#allocation10 + $0x1c] sm:$0xf]
        %v2682 = vld [vmem:[#allocation10 + $0x20] sm:$0xf]
        %v2683 = vld [vmem:[#allocation10 + $0x24] sm:$0xf]
        %v2684 = vld [vmem:[#allocation10 + $0x28] sm:$0xf]
        %v2685 = vld [vmem:[#allocation10 + $0x2c] sm:$0xf]
        %v2686 = vld [vmem:[#allocation10 + $0x30] sm:$0xf]
        %v2687 = vld [vmem:[#allocation10 + $0x34] sm:$0xf]
        %v2688 = vld [vmem:[#allocation10 + $0x38] sm:$0xf]
        %v2689 = vld [vmem:[#allocation10 + $0x3c] sm:$0xf]
        %v2690 = vld [vmem:[#allocation10 + $0x40] sm:$0xf]
        %v2691 = vld [vmem:[#allocation10 + $0x44] sm:$0xf]
        %v2692 = vld [vmem:[#allocation10 + $0x48] sm:$0xf]
        %v2693 = vld [vmem:[#allocation10 + $0x4c] sm:$0xf]
        %v2694 = vld [vmem:[#allocation10 + $0x50] sm:$0xf]
        %v2695 = vld [vmem:[#allocation10 + $0x54] sm:$0xf]
        %v2696 = vld [vmem:[#allocation10 + $0x58] sm:$0xf]
        %v2697 = vld [vmem:[#allocation10 + $0x5c] sm:$0xf]
        %v2698 = vld [vmem:[#allocation10 + $0x60] sm:$0xf]
        %v2699 = vld [vmem:[#allocation10 + $0x64] sm:$0xf]
        %v2700 = vld [vmem:[#allocation10 + $0x68] sm:$0xf]
        %v2701 = vld [vmem:[#allocation10 + $0x6c] sm:$0xf]
        %v2702 = vld [vmem:[#allocation10 + $0x70] sm:$0xf]
        %v2703 = vld [vmem:[#allocation10 + $0x74] sm:$0xf]
        %v2704 = vld [vmem:[#allocation10 + $0x78] sm:$0xf]
        %v2705 = vld [vmem:[#allocation10 + $0x7c] sm:$0xf]
        %v2706 = vld [vmem:[#allocation10 + $0x80] sm:$0xf]
        %v2707 = vld [vmem:[#allocation10 + $0x84] sm:$0xf]
        %v2708 = vld [vmem:[#allocation10 + $0x88] sm:$0xf]
        %v2709 = vld [vmem:[#allocation10 + $0x8c] sm:$0xf]
        %v2710 = vld [vmem:[#allocation10 + $0x90] sm:$0xf]
        %v2711 = vld [vmem:[#allocation10 + $0x94] sm:$0xf]
        %v2712 = vld [vmem:[#allocation10 + $0x98] sm:$0xf]
        %v2713 = vld [vmem:[#allocation10 + $0x9c] sm:$0xf]
        %v2714 = vld [vmem:[#allocation10 + $0xa0] sm:$0xf]
        %v2715 = vld [vmem:[#allocation10 + $0xa4] sm:$0xf]
        %v2716 = vld [vmem:[#allocation10 + $0xa8] sm:$0xf]
        %v2717 = vld [vmem:[#allocation10 + $0xac] sm:$0xf]
        %v2718 = vld [vmem:[#allocation10 + $0xb0] sm:$0xf]
        %v2719 = vld [vmem:[#allocation10 + $0xb4] sm:$0xf]
        %v2720 = vld [vmem:[#allocation10 + $0xb8] sm:$0xf]
        %v2721 = vld [vmem:[#allocation10 + $0xbc] sm:$0xf]
        %v2722 = vld [vmem:[#allocation10 + $0xc0] sm:$0xf]
        %v2723 = vld [vmem:[#allocation10 + $0xc4] sm:$0xf]
        %v2724 = vld [vmem:[#allocation10 + $0xc8] sm:$0xf]
        %v2725 = vld [vmem:[#allocation10 + $0xcc] sm:$0xf]
        %v2726 = vld [vmem:[#allocation10 + $0xd0] sm:$0xf]
        %v2727 = vld [vmem:[#allocation10 + $0xd4] sm:$0xf]
        %v2728 = vld [vmem:[#allocation10 + $0xd8] sm:$0xf]
        %v2729 = vld [vmem:[#allocation10 + $0xdc] sm:$0xf]
        %v2730 = vld [vmem:[#allocation10 + $0xe0] sm:$0xf]
        %v2731 = vld [vmem:[#allocation10 + $0xe4] sm:$0xf]
        %v2732 = vld [vmem:[#allocation10 + $0xe8] sm:$0xf]
        %v2733 = vld [vmem:[#allocation10 + $0xec] sm:$0xf]
        %v2734 = vld [vmem:[#allocation10 + $0xf0] sm:$0xf]
        %v2735 = vld [vmem:[#allocation10 + $0xf4] sm:$0xf]
        %v2736 = vld [vmem:[#allocation10 + $0xf8] sm:$0xf]
        %v2737 = vld [vmem:[#allocation10 + $0xfc] sm:$0xf]
        %v2738 = vld [vmem:[#allocation10 + $0x100] sm:$0xf]
        %v2739 = vld [vmem:[#allocation10 + $0x104] sm:$0xf]
        %v2740 = vld [vmem:[#allocation10 + $0x108] sm:$0xf]
        %v2741 = vld [vmem:[#allocation10 + $0x10c] sm:$0xf]
        %v2742 = vld [vmem:[#allocation10 + $0x110] sm:$0xf]
        %v2743 = vld [vmem:[#allocation10 + $0x114] sm:$0xf]
        %v2744 = vld [vmem:[#allocation10 + $0x118] sm:$0xf]
        %v2745 = vld [vmem:[#allocation10 + $0x11c] sm:$0xf]
        %v2746 = vld [vmem:[#allocation10 + $0x120] sm:$0xf]
        %v2747 = vld [vmem:[#allocation10 + $0x124] sm:$0xf]
        %v2748 = vld [vmem:[#allocation10 + $0x128] sm:$0xf]
        %v2749 = vld [vmem:[#allocation10 + $0x12c] sm:$0xf]
        %v2750 = vld [vmem:[#allocation10 + $0x130] sm:$0xf]
        %v2751 = vld [vmem:[#allocation10 + $0x134] sm:$0xf]
        %v2752 = vld [vmem:[#allocation10 + $0x138] sm:$0xf]
        %v2753 = vld [vmem:[#allocation10 + $0x13c] sm:$0xf]
        %v2754 = vld [vmem:[#allocation10 + $0x140] sm:$0xf]
        %v2755 = vld [vmem:[#allocation10 + $0x144] sm:$0xf]
        %v2756 = vld [vmem:[#allocation10 + $0x148] sm:$0xf]
        %v2757 = vld [vmem:[#allocation10 + $0x14c] sm:$0xf]
        %v2758 = vld [vmem:[#allocation10 + $0x150] sm:$0xf]
        %v2759 = vld [vmem:[#allocation10 + $0x154] sm:$0xf]
        %v2760 = vld [vmem:[#allocation10 + $0x158] sm:$0xf]
        %v2761 = vld [vmem:[#allocation10 + $0x15c] sm:$0xf]
        %v2762 = vld [vmem:[#allocation10 + $0x160] sm:$0xf]
        %v2763 = vld [vmem:[#allocation10 + $0x164] sm:$0xf]
        %v2764 = vld [vmem:[#allocation10 + $0x168] sm:$0xf]
        %v2765 = vld [vmem:[#allocation10 + $0x16c] sm:$0xf]
        %v2766 = vld [vmem:[#allocation10 + $0x170] sm:$0xf]
        %v2767 = vld [vmem:[#allocation10 + $0x174] sm:$0xf]
        %v2768 = vld [vmem:[#allocation10 + $0x178] sm:$0xf]
        %v2769 = vld [vmem:[#allocation10 + $0x17c] sm:$0xf]
        %v2770 = vld [vmem:[#allocation10 + $0x180] sm:$0xf]
        %v2771 = vld [vmem:[#allocation10 + $0x184] sm:$0xf]
        %v2772 = vld [vmem:[#allocation10 + $0x188] sm:$0xf]
        %v2773 = vld [vmem:[#allocation10 + $0x18c] sm:$0xf]
        %v2774 = vld [vmem:[#allocation10 + $0x190] sm:$0xf]
        %v2775 = vld [vmem:[#allocation10 + $0x194] sm:$0xf]
        %v2776 = vld [vmem:[#allocation10 + $0x198] sm:$0xf]
        %v2777 = vld [vmem:[#allocation10 + $0x19c] sm:$0xf]
        %v2778 = vld [vmem:[#allocation10 + $0x1a0] sm:$0xf]
        %v2779 = vld [vmem:[#allocation10 + $0x1a4] sm:$0xf]
        %v2780 = vld [vmem:[#allocation10 + $0x1a8] sm:$0xf]
        %v2781 = vld [vmem:[#allocation10 + $0x1ac] sm:$0xf]
        %v2782 = vld [vmem:[#allocation10 + $0x1b0] sm:$0xf]
        %v2783 = vld [vmem:[#allocation10 + $0x1b4] sm:$0xf]
        %v2784 = vld [vmem:[#allocation10 + $0x1b8] sm:$0xf]
        %v2785 = vld [vmem:[#allocation10 + $0x1bc] sm:$0xf]
        %v2786 = vld [vmem:[#allocation10 + $0x1c0] sm:$0xf]
        %v2787 = vld [vmem:[#allocation10 + $0x1c4] sm:$0xf]
        %v2788 = vld [vmem:[#allocation10 + $0x1c8] sm:$0xf]
        %v2789 = vld [vmem:[#allocation10 + $0x1cc] sm:$0xf]
        %v2790 = vld [vmem:[#allocation10 + $0x1d0] sm:$0xf]
        %v2791 = vld [vmem:[#allocation10 + $0x1d4] sm:$0xf]
        %v2792 = vld [vmem:[#allocation10 + $0x1d8] sm:$0xf]
        %v2793 = vld [vmem:[#allocation10 + $0x1dc] sm:$0xf]
        %v2794 = vld [vmem:[#allocation10 + $0x1e0] sm:$0xf]
        %v2795 = vld [vmem:[#allocation10 + $0x1e4] sm:$0xf]
        %v2796 = vld [vmem:[#allocation10 + $0x1e8] sm:$0xf]
        %v2797 = vld [vmem:[#allocation10 + $0x1ec] sm:$0xf]
        %v2798 = vld [vmem:[#allocation10 + $0x1f0] sm:$0xf]
        %v2799 = vld [vmem:[#allocation10 + $0x1f4] sm:$0xf]
        %v2800 = vld [vmem:[#allocation10 + $0x1f8] sm:$0xf]
        %v2801 = vld [vmem:[#allocation10 + $0x1fc] sm:$0xf]
        %v2802 = vld [vmem:[#allocation10 + $0x200] sm:$0xf]
        %v2803 = vld [vmem:[#allocation10 + $0x204] sm:$0xf]
        %v2804 = vld [vmem:[#allocation10 + $0x208] sm:$0xf]
        %v2805 = vld [vmem:[#allocation10 + $0x20c] sm:$0xf]
        %v2806 = vld [vmem:[#allocation10 + $0x210] sm:$0xf]
        %v2807 = vld [vmem:[#allocation10 + $0x214] sm:$0xf]
        %v2808 = vld [vmem:[#allocation10 + $0x218] sm:$0xf]
        %v2809 = vld [vmem:[#allocation10 + $0x21c] sm:$0xf]
        %v2810 = vld [vmem:[#allocation10 + $0x220] sm:$0xf]
        %v2811 = vld [vmem:[#allocation10 + $0x224] sm:$0xf]
        %v2812 = vld [vmem:[#allocation10 + $0x228] sm:$0xf]
        %v2813 = vld [vmem:[#allocation10 + $0x22c] sm:$0xf]
        %v2814 = vld [vmem:[#allocation10 + $0x230] sm:$0xf]
        %v2815 = vld [vmem:[#allocation10 + $0x234] sm:$0xf]
        %v2816 = vld [vmem:[#allocation10 + $0x238] sm:$0xf]
        %v2817 = vld [vmem:[#allocation10 + $0x23c] sm:$0xf]
        %v2818 = vld [vmem:[%s6] sm:$0x1]
        %v2820 = vlaneseq
        %v2821 = vshrl.u32 %v2820, 7
        %v2822 = vsub.s32 0, %v2821
        %v2823 = vrot.slane %v2818, %v2822
        %v2969 = vunpack.c.l.b16 %v2674
        %v2970 = vunpack.c.l.b16 %v2675
        %v2971 = vunpack.c.l.b16 %v2676
        %v2972 = vunpack.c.l.b16 %v2677
        %v2973 = vunpack.c.l.b16 %v2678
        %v2974 = vunpack.c.l.b16 %v2679
        %v2975 = vunpack.c.l.b16 %v2680
        %v2976 = vunpack.c.l.b16 %v2681
        %v2977 = vunpack.c.l.b16 %v2682
        %v2978 = vunpack.c.l.b16 %v2683
        %v2979 = vunpack.c.l.b16 %v2684
        %v2980 = vunpack.c.l.b16 %v2685
        %v2981 = vunpack.c.l.b16 %v2686
        %v2982 = vunpack.c.l.b16 %v2687
        %v2983 = vunpack.c.l.b16 %v2688
        %v2984 = vunpack.c.l.b16 %v2689
        %v2985 = vunpack.c.l.b16 %v2690
        %v2986 = vunpack.c.l.b16 %v2691
        %v2987 = vunpack.c.l.b16 %v2692
        %v2988 = vunpack.c.l.b16 %v2693
        %v2989 = vunpack.c.l.b16 %v2694
        %v2990 = vunpack.c.l.b16 %v2695
        %v2991 = vunpack.c.l.b16 %v2696
        %v2992 = vunpack.c.l.b16 %v2697
        %v2993 = vunpack.c.l.b16 %v2698
        %v2994 = vunpack.c.l.b16 %v2699
        %v2995 = vunpack.c.l.b16 %v2700
        %v2996 = vunpack.c.l.b16 %v2701
        %v2997 = vunpack.c.l.b16 %v2702
        %v2998 = vunpack.c.l.b16 %v2703
        %v2999 = vunpack.c.l.b16 %v2704
        %v3000 = vunpack.c.l.b16 %v2705
        %v3001 = vunpack.c.l.b16 %v2706
        %v3002 = vunpack.c.l.b16 %v2707
        %v3003 = vunpack.c.l.b16 %v2708
        %v3004 = vunpack.c.l.b16 %v2709
        %v3005 = vunpack.c.l.b16 %v2710
        %v3006 = vunpack.c.l.b16 %v2711
        %v3007 = vunpack.c.l.b16 %v2712
        %v3008 = vunpack.c.l.b16 %v2713
        %v3009 = vunpack.c.l.b16 %v2714
        %v3010 = vunpack.c.l.b16 %v2715
        %v3011 = vunpack.c.l.b16 %v2716
        %v3012 = vunpack.c.l.b16 %v2717
        %v3013 = vunpack.c.l.b16 %v2718
        %v3014 = vunpack.c.l.b16 %v2719
        %v3015 = vunpack.c.l.b16 %v2720
        %v3016 = vunpack.c.l.b16 %v2721
        %v3017 = vunpack.c.l.b16 %v2722
        %v3018 = vunpack.c.l.b16 %v2723
        %v3019 = vunpack.c.l.b16 %v2724
        %v3020 = vunpack.c.l.b16 %v2725
        %v3021 = vunpack.c.l.b16 %v2726
        %v3022 = vunpack.c.l.b16 %v2727
        %v3023 = vunpack.c.l.b16 %v2728
        %v3024 = vunpack.c.l.b16 %v2729
        %v3025 = vunpack.c.l.b16 %v2730
        %v3026 = vunpack.c.l.b16 %v2731
        %v3027 = vunpack.c.l.b16 %v2732
        %v3028 = vunpack.c.l.b16 %v2733
        %v3029 = vunpack.c.l.b16 %v2734
        %v3030 = vunpack.c.l.b16 %v2735
        %v3031 = vunpack.c.l.b16 %v2736
        %v3032 = vunpack.c.l.b16 %v2737
        %v3033 = vunpack.c.l.b16 %v2738
        %v3034 = vunpack.c.l.b16 %v2739
        %v3035 = vunpack.c.l.b16 %v2740
        %v3036 = vunpack.c.l.b16 %v2741
        %v3037 = vunpack.c.l.b16 %v2742
        %v3038 = vunpack.c.l.b16 %v2743
        %v3039 = vunpack.c.l.b16 %v2744
        %v3040 = vunpack.c.l.b16 %v2745
        %v3041 = vunpack.c.l.b16 %v2746
        %v3042 = vunpack.c.l.b16 %v2747
        %v3043 = vunpack.c.l.b16 %v2748
        %v3044 = vunpack.c.l.b16 %v2749
        %v3045 = vunpack.c.l.b16 %v2750
        %v3046 = vunpack.c.l.b16 %v2751
        %v3047 = vunpack.c.l.b16 %v2752
        %v3048 = vunpack.c.l.b16 %v2753
        %v3049 = vunpack.c.l.b16 %v2754
        %v3050 = vunpack.c.l.b16 %v2755
        %v3051 = vunpack.c.l.b16 %v2756
        %v3052 = vunpack.c.l.b16 %v2757
        %v3053 = vunpack.c.l.b16 %v2758
        %v3054 = vunpack.c.l.b16 %v2759
        %v3055 = vunpack.c.l.b16 %v2760
        %v3056 = vunpack.c.l.b16 %v2761
        %v3057 = vunpack.c.l.b16 %v2762
        %v3058 = vunpack.c.l.b16 %v2763
        %v3059 = vunpack.c.l.b16 %v2764
        %v3060 = vunpack.c.l.b16 %v2765
        %v3061 = vunpack.c.l.b16 %v2766
        %v3062 = vunpack.c.l.b16 %v2767
        %v3063 = vunpack.c.l.b16 %v2768
        %v3064 = vunpack.c.l.b16 %v2769
        %v3065 = vunpack.c.l.b16 %v2770
        %v3066 = vunpack.c.l.b16 %v2771
        %v3067 = vunpack.c.l.b16 %v2772
        %v3068 = vunpack.c.l.b16 %v2773
        %v3069 = vunpack.c.l.b16 %v2774
        %v3070 = vunpack.c.l.b16 %v2775
        %v3071 = vunpack.c.l.b16 %v2776
        %v3072 = vunpack.c.l.b16 %v2777
        %v3073 = vunpack.c.l.b16 %v2778
        %v3074 = vunpack.c.l.b16 %v2779
        %v3075 = vunpack.c.l.b16 %v2780
        %v3076 = vunpack.c.l.b16 %v2781
        %v3077 = vunpack.c.l.b16 %v2782
        %v3078 = vunpack.c.l.b16 %v2783
        %v3079 = vunpack.c.l.b16 %v2784
        %v3080 = vunpack.c.l.b16 %v2785
        %v3081 = vunpack.c.l.b16 %v2786
        %v3082 = vunpack.c.l.b16 %v2787
        %v3083 = vunpack.c.l.b16 %v2788
        %v3084 = vunpack.c.l.b16 %v2789
        %v3085 = vunpack.c.l.b16 %v2790
        %v3086 = vunpack.c.l.b16 %v2791
        %v3087 = vunpack.c.l.b16 %v2792
        %v3088 = vunpack.c.l.b16 %v2793
        %v3089 = vunpack.c.l.b16 %v2794
        %v3090 = vunpack.c.l.b16 %v2795
        %v3091 = vunpack.c.l.b16 %v2796
        %v3092 = vunpack.c.l.b16 %v2797
        %v3093 = vunpack.c.l.b16 %v2798
        %v3094 = vunpack.c.l.b16 %v2799
        %v3095 = vunpack.c.l.b16 %v2800
        %v3096 = vunpack.c.l.b16 %v2801
        %v3097 = vunpack.c.l.b16 %v2802
        %v3098 = vunpack.c.l.b16 %v2803
        %v3099 = vunpack.c.l.b16 %v2804
        %v3100 = vunpack.c.l.b16 %v2805
        %v3101 = vunpack.c.l.b16 %v2806
        %v3102 = vunpack.c.l.b16 %v2807
        %v3103 = vunpack.c.l.b16 %v2808
        %v3104 = vunpack.c.l.b16 %v2809
        %v3105 = vunpack.c.l.b16 %v2810
        %v3106 = vunpack.c.l.b16 %v2811
        %v3107 = vunpack.c.l.b16 %v2812
        %v3108 = vunpack.c.l.b16 %v2813
        %v3109 = vunpack.c.l.b16 %v2814
        %v3110 = vunpack.c.l.b16 %v2815
        %v3111 = vunpack.c.l.b16 %v2816
        %v3112 = vunpack.c.l.b16 %v2817
        %v3113 = vpack.c.b16 %v2970, %v2969
        %v3114 = vpack.c.b16 %v2972, %v2971
        %v3115 = vpack.c.b16 %v2974, %v2973
        %v3116 = vpack.c.b16 %v2976, %v2975
        %v3117 = vpack.c.b16 %v2978, %v2977
        %v3118 = vpack.c.b16 %v2980, %v2979
        %v3119 = vpack.c.b16 %v2982, %v2981
        %v3120 = vpack.c.b16 %v2984, %v2983
        %v3121 = vpack.c.b16 %v2986, %v2985
        %v3122 = vpack.c.b16 %v2988, %v2987
        %v3123 = vpack.c.b16 %v2990, %v2989
        %v3124 = vpack.c.b16 %v2992, %v2991
        %v3125 = vpack.c.b16 %v2994, %v2993
        %v3126 = vpack.c.b16 %v2996, %v2995
        %v3127 = vpack.c.b16 %v2998, %v2997
        %v3128 = vpack.c.b16 %v3000, %v2999
        %v3129 = vpack.c.b16 %v3002, %v3001
        %v3130 = vpack.c.b16 %v3004, %v3003
        %v3131 = vpack.c.b16 %v3006, %v3005
        %v3132 = vpack.c.b16 %v3008, %v3007
        %v3133 = vpack.c.b16 %v3010, %v3009
        %v3134 = vpack.c.b16 %v3012, %v3011
        %v3135 = vpack.c.b16 %v3014, %v3013
        %v3136 = vpack.c.b16 %v3016, %v3015
        %v3137 = vpack.c.b16 %v3018, %v3017
        %v3138 = vpack.c.b16 %v3020, %v3019
        %v3139 = vpack.c.b16 %v3022, %v3021
        %v3140 = vpack.c.b16 %v3024, %v3023
        %v3141 = vpack.c.b16 %v3026, %v3025
        %v3142 = vpack.c.b16 %v3028, %v3027
        %v3143 = vpack.c.b16 %v3030, %v3029
        %v3144 = vpack.c.b16 %v3032, %v3031
        %v3145 = vpack.c.b16 %v3034, %v3033
        %v3146 = vpack.c.b16 %v3036, %v3035
        %v3147 = vpack.c.b16 %v3038, %v3037
        %v3148 = vpack.c.b16 %v3040, %v3039
        %v3149 = vpack.c.b16 %v3042, %v3041
        %v3150 = vpack.c.b16 %v3044, %v3043
        %v3151 = vpack.c.b16 %v3046, %v3045
        %v3152 = vpack.c.b16 %v3048, %v3047
        %v3153 = vpack.c.b16 %v3050, %v3049
        %v3154 = vpack.c.b16 %v3052, %v3051
        %v3155 = vpack.c.b16 %v3054, %v3053
        %v3156 = vpack.c.b16 %v3056, %v3055
        %v3157 = vpack.c.b16 %v3058, %v3057
        %v3158 = vpack.c.b16 %v3060, %v3059
        %v3159 = vpack.c.b16 %v3062, %v3061
        %v3160 = vpack.c.b16 %v3064, %v3063
        %v3161 = vpack.c.b16 %v3066, %v3065
        %v3162 = vpack.c.b16 %v3068, %v3067
        %v3163 = vpack.c.b16 %v3070, %v3069
        %v3164 = vpack.c.b16 %v3072, %v3071
        %v3165 = vpack.c.b16 %v3074, %v3073
        %v3166 = vpack.c.b16 %v3076, %v3075
        %v3167 = vpack.c.b16 %v3078, %v3077
        %v3168 = vpack.c.b16 %v3080, %v3079
        %v3169 = vpack.c.b16 %v3082, %v3081
        %v3170 = vpack.c.b16 %v3084, %v3083
        %v3171 = vpack.c.b16 %v3086, %v3085
        %v3172 = vpack.c.b16 %v3088, %v3087
        %v3173 = vpack.c.b16 %v3090, %v3089
        %v3174 = vpack.c.b16 %v3092, %v3091
        %v3175 = vpack.c.b16 %v3094, %v3093
        %v3176 = vpack.c.b16 %v3096, %v3095
        %v3177 = vpack.c.b16 %v3098, %v3097
        %v3178 = vpack.c.b16 %v3100, %v3099
        %v3179 = vpack.c.b16 %v3102, %v3101
        %v3180 = vpack.c.b16 %v3104, %v3103
        %v3181 = vpack.c.b16 %v3106, %v3105
        %v3182 = vpack.c.b16 %v3108, %v3107
        %v3183 = vpack.c.b16 %v3110, %v3109
        %v3184 = vpack.c.b16 %v3112, %v3111
        %3257 = vmatprep.subr.bf16.mxu0 0
        %3258 = vmatpush1.bf16.msra.mxu0 %v3113
        %3259 = vmatprep.subr.bf16.mxu0 0
        %3260 = vmatpush1.bf16.msra.mxu0 %v3114
        %3261 = vmatprep.subr.bf16.mxu0 0
        %3262 = vmatpush1.bf16.msra.mxu0 %v3115
        %3263 = vmatprep.subr.bf16.mxu0 0
        %3264 = vmatpush1.bf16.msra.mxu0 %v3116
        %3265 = vmatprep.subr.bf16.mxu0 0
        %3266 = vmatpush1.bf16.msra.mxu0 %v3117
        %3267 = vmatprep.subr.bf16.mxu0 0
        %3268 = vmatpush1.bf16.msra.mxu0 %v3118
        %3269 = vmatprep.subr.bf16.mxu0 0
        %3270 = vmatpush1.bf16.msra.mxu0 %v3119
        %3271 = vmatprep.subr.bf16.mxu0 0
        %3272 = vmatpush1.bf16.msra.mxu0 %v3120
        %3273 = vmatprep.subr.bf16.mxu0 0
        %3274 = vmatpush1.bf16.msra.mxu0 %v3121
        %3275 = vmatprep.subr.bf16.mxu0 0
        %3276 = vmatpush1.bf16.msra.mxu0 %v3122
        %3277 = vmatprep.subr.bf16.mxu0 0
        %3278 = vmatpush1.bf16.msra.mxu0 %v3123
        %3279 = vmatprep.subr.bf16.mxu0 0
        %3280 = vmatpush1.bf16.msra.mxu0 %v3124
        %3281 = vmatprep.subr.bf16.mxu0 0
        %3282 = vmatpush1.bf16.msra.mxu0 %v3125
        %3283 = vmatprep.subr.bf16.mxu0 0
        %3284 = vmatpush1.bf16.msra.mxu0 %v3126
        %3285 = vmatprep.subr.bf16.mxu0 0
        %3286 = vmatpush1.bf16.msra.mxu0 %v3127
        %3287 = vmatprep.subr.bf16.mxu0 0
        %3288 = vmatpush1.bf16.msra.mxu0 %v3128
        %3289 = vmatprep.mubr.bf16.mxu0 %v2492
        %3290 = vmatmul.mubr.bf16.gmra.mrb[0].mxu0 %v2468
        %v3291 = vpop.f32.mrb[0].mxu0
        %v3292 = vadd.f32 %v2823, %v3291
        %v3293 = vpop.f32.mrb[0].mxu0
        %v3294 = vpop.f32.mrb[0].mxu0
        %v3295 = vadd.f32 %v2823, %v3294
        %v3296 = vpop.f32.mrb[0].mxu0
        %3297 = vmatprep.mubr.bf16.mxu0 %v2493
        %3298 = vmatmul.mubr.bf16.gmra.mrb[0].mxu0 %v2469
        %v3299 = vpop.f32.mrb[0].mxu0
        %v3300 = vadd.f32 %v2823, %v3299
        %v3301 = vpop.f32.mrb[0].mxu0
        %v3302 = vpop.f32.mrb[0].mxu0
        %v3303 = vadd.f32 %v2823, %v3302
        %v3304 = vpop.f32.mrb[0].mxu0
        %3305 = vmatprep.mubr.bf16.mxu0 %v2494
        %3306 = vmatmul.mubr.bf16.gmra.mrb[0].mxu0 %v2470
        %v3307 = vpop.f32.mrb[0].mxu0
        %v3308 = vadd.f32 %v2823, %v3307
        %v3309 = vpop.f32.mrb[0].mxu0
        %v3310 = vpop.f32.mrb[0].mxu0
        %v3311 = vadd.f32 %v2823, %v3310
        %v3312 = vpop.f32.mrb[0].mxu0
        %3313 = vmatprep.mubr.bf16.mxu0 %v2495
        %3314 = vmatmul.mubr.bf16.gmra.mrb[0].mxu0 %v2471
        %v3315 = vpop.f32.mrb[0].mxu0
        %v3316 = vadd.f32 %v2823, %v3315
        %v3317 = vpop.f32.mrb[0].mxu0
        %v3318 = vpop.f32.mrb[0].mxu0
        %v3319 = vadd.f32 %v2823, %v3318
        %v3320 = vpop.f32.mrb[0].mxu0
        %3321 = vmatprep.mubr.bf16.mxu0 %v2496
        %3322 = vmatmul.mubr.bf16.gmra.mrb[0].mxu0 %v2472
        %v3323 = vpop.f32.mrb[0].mxu0
        %v3324 = vadd.f32 %v2823, %v3323
        %v3325 = vpop.f32.mrb[0].mxu0
        %v3326 = vpop.f32.mrb[0].mxu0
        %v3327 = vadd.f32 %v2823, %v3326
        %v3328 = vpop.f32.mrb[0].mxu0
        %3329 = vmatprep.mubr.bf16.mxu0 %v2497
        %3330 = vmatmul.mubr.bf16.gmra.mrb[0].mxu0 %v2473
        %v3331 = vpop.f32.mrb[0].mxu0
        %v3332 = vadd.f32 %v2823, %v3331
        %v3333 = vpop.f32.mrb[0].mxu0
        %v3334 = vpop.f32.mrb[0].mxu0
        %v3335 = vadd.f32 %v2823, %v3334
        %v3336 = vpop.f32.mrb[0].mxu0
        %3337 = vmatprep.mubr.bf16.mxu0 %v2498
        %3338 = vmatmul.mubr.bf16.gmra.mrb[0].mxu0 %v2474
        %v3339 = vpop.f32.mrb[0].mxu0
        %v3340 = vadd.f32 %v2823, %v3339
        %v3341 = vpop.f32.mrb[0].mxu0
        %v3342 = vpop.f32.mrb[0].mxu0
        %v3343 = vadd.f32 %v2823, %v3342
        %v3344 = vpop.f32.mrb[0].mxu0
        %3345 = vmatprep.mubr.bf16.mxu0 %v2499
        %3346 = vmatmul.mubr.bf16.gmra.mrb[0].mxu0 %v2475
        %v3347 = vpop.f32.mrb[0].mxu0
        %v3348 = vadd.f32 %v2823, %v3347
        %v3349 = vpop.f32.mrb[0].mxu0
        %v3350 = vpop.f32.mrb[0].mxu0
        %v3351 = vadd.f32 %v2823, %v3350
        %v3352 = vpop.f32.mrb[0].mxu0
        %3353 = vdwg.mxu0
        %3354 = vmatprep.subr.bf16.mxu0 0
        %3355 = vmatpush1.bf16.msra.mxu0 %v3129
        %3356 = vmatprep.subr.bf16.mxu0 0
        %3357 = vmatpush1.bf16.msra.mxu0 %v3130
        %3358 = vmatprep.subr.bf16.mxu0 0
        %3359 = vmatpush1.bf16.msra.mxu0 %v3131
        %3360 = vmatprep.subr.bf16.mxu0 0
        %3361 = vmatpush1.bf16.msra.mxu0 %v3132
        %3362 = vmatprep.subr.bf16.mxu0 0
        %3363 = vmatpush1.bf16.msra.mxu0 %v3133
        %3364 = vmatprep.subr.bf16.mxu0 0
        %3365 = vmatpush1.bf16.msra.mxu0 %v3134
        %3366 = vmatprep.subr.bf16.mxu0 0
        %3367 = vmatpush1.bf16.msra.mxu0 %v3135
        %3368 = vmatprep.subr.bf16.mxu0 0
        %3369 = vmatpush1.bf16.msra.mxu0 %v3136
        %3370 = vmatprep.subr.bf16.mxu0 0
        %3371 = vmatpush1.bf16.msra.mxu0 %v3137
        %3372 = vmatprep.subr.bf16.mxu0 0
        %3373 = vmatpush1.bf16.msra.mxu0 %v3138
        %3374 = vmatprep.subr.bf16.mxu0 0
        %3375 = vmatpush1.bf16.msra.mxu0 %v3139
        %3376 = vmatprep.subr.bf16.mxu0 0
        %3377 = vmatpush1.bf16.msra.mxu0 %v3140
        %3378 = vmatprep.subr.bf16.mxu0 0
        %3379 = vmatpush1.bf16.msra.mxu0 %v3141
        %3380 = vmatprep.subr.bf16.mxu0 0
        %3381 = vmatpush1.bf16.msra.mxu0 %v3142
        %3382 = vmatprep.subr.bf16.mxu0 0
        %3383 = vmatpush1.bf16.msra.mxu0 %v3143
        %3384 = vmatprep.subr.bf16.mxu0 0
        %3385 = vmatpush1.bf16.msra.mxu0 %v3144
        %3386 = vmatprep.mubr.bf16.mxu0 %v2543
        %3387 = vmatmul.mubr.bf16.gmra.mrb[0].mxu0 %v2516
        %v3388 = vpop.f32.mrb[0].mxu0
        %v3389 = vadd.f32 %v3292, %v3388
        %v3390 = vpop.f32.mrb[0].mxu0
        %v3391 = vpop.f32.mrb[0].mxu0
        %v3392 = vadd.f32 %v3295, %v3391
        %v3393 = vpop.f32.mrb[0].mxu0
        %3394 = vmatprep.mubr.bf16.mxu0 %v2544
        %3395 = vmatmul.mubr.bf16.gmra.mrb[0].mxu0 %v2517
        %v3396 = vpop.f32.mrb[0].mxu0
        %v3397 = vadd.f32 %v3300, %v3396
        %v3398 = vpop.f32.mrb[0].mxu0
        %v3399 = vpop.f32.mrb[0].mxu0
        %v3400 = vadd.f32 %v3303, %v3399
        %v3401 = vpop.f32.mrb[0].mxu0
        %3402 = vmatprep.mubr.bf16.mxu0 %v2545
        %3403 = vmatmul.mubr.bf16.gmra.mrb[0].mxu0 %v2518
        %v3404 = vpop.f32.mrb[0].mxu0
        %v3405 = vadd.f32 %v3308, %v3404
        %v3406 = vpop.f32.mrb[0].mxu0
        %v3407 = vpop.f32.mrb[0].mxu0
        %v3408 = vadd.f32 %v3311, %v3407
        %v3409 = vpop.f32.mrb[0].mxu0
        %3410 = vmatprep.mubr.bf16.mxu0 %v2546
        %3411 = vmatmul.mubr.bf16.gmra.mrb[0].mxu0 %v2519
        %v3412 = vpop.f32.mrb[0].mxu0
        %v3413 = vadd.f32 %v3316, %v3412
        %v3414 = vpop.f32.mrb[0].mxu0
        %v3415 = vpop.f32.mrb[0].mxu0
        %v3416 = vadd.f32 %v3319, %v3415
        %v3417 = vpop.f32.mrb[0].mxu0
        %3418 = vmatprep.mubr.bf16.mxu0 %v2547
        %3419 = vmatmul.mubr.bf16.gmra.mrb[0].mxu0 %v2520
        %v3420 = vpop.f32.mrb[0].mxu0
        %v3421 = vadd.f32 %v3324, %v3420
        %v3422 = vpop.f32.mrb[0].mxu0
        %v3423 = vpop.f32.mrb[0].mxu0
        %v3424 = vadd.f32 %v3327, %v3423
        %v3425 = vpop.f32.mrb[0].mxu0
        %3426 = vmatprep.mubr.bf16.mxu0 %v2548
        %3427 = vmatmul.mubr.bf16.gmra.mrb[0].mxu0 %v2521
        %v3428 = vpop.f32.mrb[0].mxu0
        %v3429 = vadd.f32 %v3332, %v3428
        %v3430 = vpop.f32.mrb[0].mxu0
        %v3431 = vpop.f32.mrb[0].mxu0
        %v3432 = vadd.f32 %v3335, %v3431
        %v3433 = vpop.f32.mrb[0].mxu0
        %3434 = vmatprep.mubr.bf16.mxu0 %v2549
        %3435 = vmatmul.mubr.bf16.gmra.mrb[0].mxu0 %v2522
        %v3436 = vpop.f32.mrb[0].mxu0
        %v3437 = vadd.f32 %v3340, %v3436
        %v3438 = vpop.f32.mrb[0].mxu0
        %v3439 = vpop.f32.mrb[0].mxu0
        %v3440 = vadd.f32 %v3343, %v3439
        %v3441 = vpop.f32.mrb[0].mxu0
        %3442 = vmatprep.mubr.bf16.mxu0 %v2550
        %3443 = vmatmul.mubr.bf16.gmra.mrb[0].mxu0 %v2523
        %v3444 = vpop.f32.mrb[0].mxu0
        %v3445 = vadd.f32 %v3348, %v3444
        %v3446 = vpop.f32.mrb[0].mxu0
        %v3447 = vpop.f32.mrb[0].mxu0
        %v3448 = vadd.f32 %v3351, %v3447
        %v3449 = vpop.f32.mrb[0].mxu0
        %3450 = vdwg.mxu0
        %3451 = vmatprep.subr.bf16.mxu0 0
        %3452 = vmatpush1.bf16.msra.mxu0 %v3145
        %3453 = vmatprep.subr.bf16.mxu0 0
        %3454 = vmatpush1.bf16.msra.mxu0 %v3146
        %3455 = vmatprep.subr.bf16.mxu0 0
        %3456 = vmatpush1.bf16.msra.mxu0 %v3147
        %3457 = vmatprep.subr.bf16.mxu0 0
        %3458 = vmatpush1.bf16.msra.mxu0 %v3148
        %3459 = vmatprep.subr.bf16.mxu0 0
        %3460 = vmatpush1.bf16.msra.mxu0 %v3149
        %3461 = vmatprep.subr.bf16.mxu0 0
        %3462 = vmatpush1.bf16.msra.mxu0 %v3150
        %3463 = vmatprep.subr.bf16.mxu0 0
        %3464 = vmatpush1.bf16.msra.mxu0 %v3151
        %3465 = vmatprep.subr.bf16.mxu0 0
        %3466 = vmatpush1.bf16.msra.mxu0 %v3152
        %3467 = vmatprep.subr.bf16.mxu0 0
        %3468 = vmatpush1.bf16.msra.mxu0 %v3153
        %3469 = vmatprep.subr.bf16.mxu0 0
        %3470 = vmatpush1.bf16.msra.mxu0 %v3154
        %3471 = vmatprep.subr.bf16.mxu0 0
        %3472 = vmatpush1.bf16.msra.mxu0 %v3155
        %3473 = vmatprep.subr.bf16.mxu0 0
        %3474 = vmatpush1.bf16.msra.mxu0 %v3156
        %3475 = vmatprep.subr.bf16.mxu0 0
        %3476 = vmatpush1.bf16.msra.mxu0 %v3157
        %3477 = vmatprep.subr.bf16.mxu0 0
        %3478 = vmatpush1.bf16.msra.mxu0 %v3158
        %3479 = vmatprep.subr.bf16.mxu0 0
        %3480 = vmatpush1.bf16.msra.mxu0 %v3159
        %3481 = vmatprep.subr.bf16.mxu0 0
        %3482 = vmatpush1.bf16.msra.mxu0 %v3160
        %3483 = vmatprep.mubr.bf16.mxu0 %v2591
        %3484 = vmatmul.mubr.bf16.gmra.mrb[0].mxu0 %v2567
        %v3485 = vpop.f32.mrb[0].mxu0
        %v3486 = vadd.f32 %v3389, %v3485
        %v3487 = vpop.f32.mrb[0].mxu0
        %v3488 = vpop.f32.mrb[0].mxu0
        %v3489 = vadd.f32 %v3392, %v3488
        %v3490 = vpop.f32.mrb[0].mxu0
        %3491 = vmatprep.mubr.bf16.mxu0 %v2592
        %3492 = vmatmul.mubr.bf16.gmra.mrb[0].mxu0 %v2568
        %v3493 = vpop.f32.mrb[0].mxu0
        %v3494 = vadd.f32 %v3397, %v3493
        %v3495 = vpop.f32.mrb[0].mxu0
        %v3496 = vpop.f32.mrb[0].mxu0
        %v3497 = vadd.f32 %v3400, %v3496
        %v3498 = vpop.f32.mrb[0].mxu0
        %3499 = vmatprep.mubr.bf16.mxu0 %v2593
        %3500 = vmatmul.mubr.bf16.gmra.mrb[0].mxu0 %v2569
        %v3501 = vpop.f32.mrb[0].mxu0
        %v3502 = vadd.f32 %v3405, %v3501
        %v3503 = vpop.f32.mrb[0].mxu0
        %v3504 = vpop.f32.mrb[0].mxu0
        %v3505 = vadd.f32 %v3408, %v3504
        %v3506 = vpop.f32.mrb[0].mxu0
        %3507 = vmatprep.mubr.bf16.mxu0 %v2594
        %3508 = vmatmul.mubr.bf16.gmra.mrb[0].mxu0 %v2570
        %v3509 = vpop.f32.mrb[0].mxu0
        %v3510 = vadd.f32 %v3413, %v3509
        %v3511 = vpop.f32.mrb[0].mxu0
        %v3512 = vpop.f32.mrb[0].mxu0
        %v3513 = vadd.f32 %v3416, %v3512
        %v3514 = vpop.f32.mrb[0].mxu0
        %3515 = vmatprep.mubr.bf16.mxu0 %v2595
        %3516 = vmatmul.mubr.bf16.gmra.mrb[0].mxu0 %v2571
        %v3517 = vpop.f32.mrb[0].mxu0
        %v3518 = vadd.f32 %v3421, %v3517
        %v3519 = vpop.f32.mrb[0].mxu0
        %v3520 = vpop.f32.mrb[0].mxu0
        %v3521 = vadd.f32 %v3424, %v3520
        %v3522 = vpop.f32.mrb[0].mxu0
        %3523 = vmatprep.mubr.bf16.mxu0 %v2596
        %3524 = vmatmul.mubr.bf16.gmra.mrb[0].mxu0 %v2572
        %v3525 = vpop.f32.mrb[0].mxu0
        %v3526 = vadd.f32 %v3429, %v3525
        %v3527 = vpop.f32.mrb[0].mxu0
        %v3528 = vpop.f32.mrb[0].mxu0
        %v3529 = vadd.f32 %v3432, %v3528
        %v3530 = vpop.f32.mrb[0].mxu0
        %3531 = vmatprep.mubr.bf16.mxu0 %v2597
        %3532 = vmatmul.mubr.bf16.gmra.mrb[0].mxu0 %v2573
        %v3533 = vpop.f32.mrb[0].mxu0
        %v3534 = vadd.f32 %v3437, %v3533
        %v3535 = vpop.f32.mrb[0].mxu0
        %v3536 = vpop.f32.mrb[0].mxu0
        %v3537 = vadd.f32 %v3440, %v3536
        %v3538 = vpop.f32.mrb[0].mxu0
        %3539 = vmatprep.mubr.bf16.mxu0 %v2598
        %3540 = vmatmul.mubr.bf16.gmra.mrb[0].mxu0 %v2574
        %v3541 = vpop.f32.mrb[0].mxu0
        %v3542 = vadd.f32 %v3445, %v3541
        %v3543 = vpop.f32.mrb[0].mxu0
        %v3544 = vpop.f32.mrb[0].mxu0
        %v3545 = vadd.f32 %v3448, %v3544
        %v3546 = vpop.f32.mrb[0].mxu0
        %3547 = vdwg.mxu0
        %3548 = vmatprep.subr.bf16.mxu0 0
        %3549 = vmatpush1.bf16.msra.mxu0 %v3161
        %3550 = vmatprep.subr.bf16.mxu0 0
        %3551 = vmatpush1.bf16.msra.mxu0 %v3162
        %3552 = vmatprep.subr.bf16.mxu0 0
        %3553 = vmatpush1.bf16.msra.mxu0 %v3163
        %3554 = vmatprep.subr.bf16.mxu0 0
        %3555 = vmatpush1.bf16.msra.mxu0 %v3164
        %3556 = vmatprep.subr.bf16.mxu0 0
        %3557 = vmatpush1.bf16.msra.mxu0 %v3165
        %3558 = vmatprep.subr.bf16.mxu0 0
        %3559 = vmatpush1.bf16.msra.mxu0 %v3166
        %3560 = vmatprep.subr.bf16.mxu0 0
        %3561 = vmatpush1.bf16.msra.mxu0 %v3167
        %3562 = vmatprep.subr.bf16.mxu0 0
        %3563 = vmatpush1.bf16.msra.mxu0 %v3168
        %3564 = vmatprep.subr.bf16.mxu0 0
        %3565 = vmatpush1.bf16.msra.mxu0 %v3169
        %3566 = vmatprep.subr.bf16.mxu0 0
        %3567 = vmatpush1.bf16.msra.mxu0 %v3170
        %3568 = vmatprep.subr.bf16.mxu0 0
        %3569 = vmatpush1.bf16.msra.mxu0 %v3171
        %3570 = vmatprep.subr.bf16.mxu0 0
        %3571 = vmatpush1.bf16.msra.mxu0 %v3172
        %3572 = vmatprep.subr.bf16.mxu0 0
        %3573 = vmatpush1.bf16.msra.mxu0 %v3173
        %3574 = vmatprep.subr.bf16.mxu0 0
        %3575 = vmatpush1.bf16.msra.mxu0 %v3174
        %3576 = vmatprep.subr.bf16.mxu0 0
        %3577 = vmatpush1.bf16.msra.mxu0 %v3175
        %3578 = vmatprep.subr.bf16.mxu0 0
        %3579 = vmatpush1.bf16.msra.mxu0 %v3176
        %3580 = vmatprep.mubr.bf16.mxu0 %v2642
        %3581 = vmatmul.mubr.bf16.gmra.mrb[0].mxu0 %v2618
        %v3582 = vpop.f32.mrb[0].mxu0
        %v3583 = vadd.f32 %v3486, %v3582
        %v3584 = vpop.f32.mrb[0].mxu0
        %v3585 = vpop.f32.mrb[0].mxu0
        %v3586 = vadd.f32 %v3489, %v3585
        %v3587 = vpop.f32.mrb[0].mxu0
        %3588 = vmatprep.mubr.bf16.mxu0 %v2643
        %3589 = vmatmul.mubr.bf16.gmra.mrb[0].mxu0 %v2619
        %v3590 = vpop.f32.mrb[0].mxu0
        %v3591 = vadd.f32 %v3494, %v3590
        %v3592 = vpop.f32.mrb[0].mxu0
        %v3593 = vpop.f32.mrb[0].mxu0
        %v3594 = vadd.f32 %v3497, %v3593
        %v3595 = vpop.f32.mrb[0].mxu0
        %3596 = vmatprep.mubr.bf16.mxu0 %v2644
        %3597 = vmatmul.mubr.bf16.gmra.mrb[0].mxu0 %v2620
        %v3598 = vpop.f32.mrb[0].mxu0
        %v3599 = vadd.f32 %v3502, %v3598
        %v3600 = vpop.f32.mrb[0].mxu0
        %v3601 = vpop.f32.mrb[0].mxu0
        %v3602 = vadd.f32 %v3505, %v3601
        %v3603 = vpop.f32.mrb[0].mxu0
        %3604 = vmatprep.mubr.bf16.mxu0 %v2645
        %3605 = vmatmul.mubr.bf16.gmra.mrb[0].mxu0 %v2621
        %v3606 = vpop.f32.mrb[0].mxu0
        %v3607 = vadd.f32 %v3510, %v3606
        %v3608 = vpop.f32.mrb[0].mxu0
        %v3609 = vpop.f32.mrb[0].mxu0
        %v3610 = vadd.f32 %v3513, %v3609
        %v3611 = vpop.f32.mrb[0].mxu0
        %3612 = vmatprep.mubr.bf16.mxu0 %v2646
        %3613 = vmatmul.mubr.bf16.gmra.mrb[0].mxu0 %v2622
        %v3614 = vpop.f32.mrb[0].mxu0
        %v3615 = vadd.f32 %v3518, %v3614
        %v3616 = vpop.f32.mrb[0].mxu0
        %v3617 = vpop.f32.mrb[0].mxu0
        %v3618 = vadd.f32 %v3521, %v3617
        %v3619 = vpop.f32.mrb[0].mxu0
        %3620 = vmatprep.mubr.bf16.mxu0 %v2647
        %3621 = vmatmul.mubr.bf16.gmra.mrb[0].mxu0 %v2623
        %v3622 = vpop.f32.mrb[0].mxu0
        %v3623 = vadd.f32 %v3526, %v3622
        %v3624 = vpop.f32.mrb[0].mxu0
        %v3625 = vpop.f32.mrb[0].mxu0
        %v3626 = vadd.f32 %v3529, %v3625
        %v3627 = vpop.f32.mrb[0].mxu0
        %3628 = vmatprep.mubr.bf16.mxu0 %v2648
        %3629 = vmatmul.mubr.bf16.gmra.mrb[0].mxu0 %v2624
        %v3630 = vpop.f32.mrb[0].mxu0
        %v3631 = vadd.f32 %v3534, %v3630
        %v3632 = vpop.f32.mrb[0].mxu0
        %v3633 = vpop.f32.mrb[0].mxu0
        %v3634 = vadd.f32 %v3537, %v3633
        %v3635 = vpop.f32.mrb[0].mxu0
        %3636 = vmatprep.mubr.bf16.mxu0 %v2649
        %3637 = vmatmul.mubr.bf16.gmra.mrb[0].mxu0 %v2625
        %v3638 = vpop.f32.mrb[0].mxu0
        %v3639 = vadd.f32 %v3542, %v3638
        %v3640 = vpop.f32.mrb[0].mxu0
        %v3641 = vpop.f32.mrb[0].mxu0
        %v3642 = vadd.f32 %v3545, %v3641
        %v3643 = vpop.f32.mrb[0].mxu0
        %3644 = vdwg.mxu0
        %3645 = vmatprep.subr.bf16.mxu0 0
        %3646 = vmatpush1.bf16.msra.mxu0 %v3177
        %3647 = vmatprep.subr.bf16.mxu0 0
        %3648 = vmatpush1.bf16.msra.mxu0 %v3178
        %3649 = vmatprep.subr.bf16.mxu0 0
        %3650 = vmatpush1.bf16.msra.mxu0 %v3179
        %3651 = vmatprep.subr.bf16.mxu0 0
        %3652 = vmatpush1.bf16.msra.mxu0 %v3180
        %3653 = vmatprep.subr.bf16.mxu0 0
        %3654 = vmatpush1.bf16.msra.mxu0 %v3181
        %3655 = vmatprep.subr.bf16.mxu0 0
        %3656 = vmatpush1.bf16.msra.mxu0 %v3182
        %3657 = vmatprep.subr.bf16.mxu0 0
        %3658 = vmatpush1.bf16.msra.mxu0 %v3183
        %3659 = vmatprep.subr.bf16.mxu0 0
        %3660 = vmatpush1.bf16.msra.mxu0 %v3184
        %3661 = vmatprep.subr.bf16.mxu0 0
        %3662 = vmatpush1.bf16.msra.mxu0 0
        %3663 = vmatprep.subr.bf16.mxu0 0
        %3664 = vmatpush1.bf16.msra.mxu0 0
        %3665 = vmatprep.subr.bf16.mxu0 0
        %3666 = vmatpush1.bf16.msra.mxu0 0
        %3667 = vmatprep.subr.bf16.mxu0 0
        %3668 = vmatpush1.bf16.msra.mxu0 0
        %3669 = vmatprep.subr.bf16.mxu0 0
        %3670 = vmatpush1.bf16.msra.mxu0 0
        %3671 = vmatprep.subr.bf16.mxu0 0
        %3672 = vmatpush1.bf16.msra.mxu0 0
        %3673 = vmatprep.subr.bf16.mxu0 0
        %3674 = vmatpush1.bf16.msra.mxu0 0
        %3675 = vmatprep.subr.bf16.mxu0 0
        %3676 = vmatpush1.bf16.msra.mxu0 0
        %3677 = vmatprep.mubr.bf16.mxu0 0
        %3678 = vmatmul.mubr.bf16.gmra.mrb[0].mxu0 %v2666
        %v3679 = vpop.f32.mrb[0].mxu0
        %v3680 = vadd.f32 %v3583, %v3679
        %v3681 = vpop.f32.mrb[0].mxu0
        %v3682 = vpop.f32.mrb[0].mxu0
        %v3683 = vadd.f32 %v3586, %v3682
        %v3684 = vpop.f32.mrb[0].mxu0
        %3685 = vmatprep.mubr.bf16.mxu0 0
        %3686 = vmatmul.mubr.bf16.gmra.mrb[0].mxu0 %v2667
        %v3687 = vpop.f32.mrb[0].mxu0
        %v3688 = vadd.f32 %v3591, %v3687
        %v3689 = vpop.f32.mrb[0].mxu0
        %v3690 = vpop.f32.mrb[0].mxu0
        %v3691 = vadd.f32 %v3594, %v3690
        %v3692 = vpop.f32.mrb[0].mxu0
        %3693 = vmatprep.mubr.bf16.mxu0 0
        %3694 = vmatmul.mubr.bf16.gmra.mrb[0].mxu0 %v2668
        %v3695 = vpop.f32.mrb[0].mxu0
        %v3696 = vadd.f32 %v3599, %v3695
        %v3697 = vpop.f32.mrb[0].mxu0
        %v3698 = vpop.f32.mrb[0].mxu0
        %v3699 = vadd.f32 %v3602, %v3698
        %v3700 = vpop.f32.mrb[0].mxu0
        %3701 = vmatprep.mubr.bf16.mxu0 0
        %3702 = vmatmul.mubr.bf16.gmra.mrb[0].mxu0 %v2669
        %v3703 = vpop.f32.mrb[0].mxu0
        %v3704 = vadd.f32 %v3607, %v3703
        %v3705 = vpop.f32.mrb[0].mxu0
        %v3706 = vpop.f32.mrb[0].mxu0
        %v3707 = vadd.f32 %v3610, %v3706
        %v3708 = vpop.f32.mrb[0].mxu0
        %3709 = vmatprep.mubr.bf16.mxu0 0
        %3710 = vmatmul.mubr.bf16.gmra.mrb[0].mxu0 %v2670
        %v3711 = vpop.f32.mrb[0].mxu0
        %v3712 = vadd.f32 %v3615, %v3711
        %v3713 = vpop.f32.mrb[0].mxu0
        %v3714 = vpop.f32.mrb[0].mxu0
        %v3715 = vadd.f32 %v3618, %v3714
        %v3716 = vpop.f32.mrb[0].mxu0
        %3717 = vmatprep.mubr.bf16.mxu0 0
        %3718 = vmatmul.mubr.bf16.gmra.mrb[0].mxu0 %v2671
        %v3719 = vpop.f32.mrb[0].mxu0
        %v3720 = vadd.f32 %v3623, %v3719
        %v3721 = vpop.f32.mrb[0].mxu0
        %v3722 = vpop.f32.mrb[0].mxu0
        %v3723 = vadd.f32 %v3626, %v3722
        %v3724 = vpop.f32.mrb[0].mxu0
        %3725 = vmatprep.mubr.bf16.mxu0 0
        %3726 = vmatmul.mubr.bf16.gmra.mrb[0].mxu0 %v2672
        %v3727 = vpop.f32.mrb[0].mxu0
        %v3728 = vadd.f32 %v3631, %v3727
        %v3729 = vpop.f32.mrb[0].mxu0
        %v3730 = vpop.f32.mrb[0].mxu0
        %v3731 = vadd.f32 %v3634, %v3730
        %v3732 = vpop.f32.mrb[0].mxu0
        %3733 = vmatprep.mubr.bf16.mxu0 0
        %3734 = vmatmul.mubr.bf16.gmra.mrb[0].mxu0 %v2673
        %v3735 = vpop.f32.mrb[0].mxu0
        %v3736 = vadd.f32 %v3639, %v3735
        %v3737 = vpop.f32.mrb[0].mxu0
        %v3738 = vpop.f32.mrb[0].mxu0
        %v3739 = vadd.f32 %v3642, %v3738
        %v3740 = vpop.f32.mrb[0].mxu0
        %3741 = vdwg.mxu0
        %3742 = vst [vmem:[%s354] sm:$0xff] %v3680
        %3743 = vst [vmem:[%s354 + $0x8] sm:$0xff] %v3683
        %3744 = vst [vmem:[%s354 + $0x10] sm:$0xff] %v3688
        %3745 = vst [vmem:[%s354 + $0x18] sm:$0xff] %v3691
        %3746 = vst [vmem:[%s354 + $0x20] sm:$0xff] %v3696
        %3747 = vst [vmem:[%s354 + $0x28] sm:$0xff] %v3699
        %3748 = vst [vmem:[%s354 + $0x30] sm:$0xff] %v3704
        %3749 = vst [vmem:[%s354 + $0x38] sm:$0xff] %v3707
        %3750 = vst [vmem:[%s354 + $0x40] sm:$0xff] %v3712
        %3751 = vst [vmem:[%s354 + $0x48] sm:$0xff] %v3715
        %3752 = vst [vmem:[%s354 + $0x50] sm:$0xff] %v3720
        %3753 = vst [vmem:[%s354 + $0x58] sm:$0xff] %v3723
        %3754 = vst [vmem:[%s354 + $0x60] sm:$0xff] %v3728
        %3755 = vst [vmem:[%s354 + $0x68] sm:$0xff] %v3731
        %3756 = vst [vmem:[%s354 + $0x70] sm:$0xff] %v3736
        %3757 = vst [vmem:[%s354 + $0x78] sm:$0xff] %v3739
        %s3758 = sand.u32 %s200, 1
        %s3759 = scalar_lea.sflag [#allocation6], %s3758
        %s3760 = sand.u32 %s200, 1
        %s3761 = smul.addr %s3760, 128
        %s3762 = scalar_lea.vmem [#allocation12], %s3761
        // Predicated region
        $region69: #{tpu_custom_call.1} parent=47 // pred_check
          %p3763 = pneg %p210
        $region70: #{tpu_custom_call.1} parent=47 // pred_check_branch
          %3765 = sbr.rel (%p3763) target = $region72
        $region71: #{tpu_custom_call.1} parent=47 // pred_region
          %s3766 = smul.u32 8, %s31
          %s3768 = ssub.s32 2048, 2048
          %3769 = vsyncadd %s3759, %s3768
          %s3770 = smul.addr %s3766, 2
          %s3771 = smul.addr %s30, 32
          %s3772 = sadd.s32 %s3770, %s3771
          %s3773 = smul.addr %s3772, 128
          %s3774 = scalar_lea.hbm %s7, %s3773
          %s3775 = sshll.u32 %s3762, 4
          %s3776 = int_to_ptr.vmem [resolvable:$true] %s3775
          %3781 = dma.vmem_to_hbm [thread:$0]  %s3776, 2048, %s3774, %s3759, 128, 128, 8
        $region72: #{tpu_custom_call.1} parent=47 // pred_fallthru
          _
      $region48: #{tpu_custom_call.1} parent=5 // pred_fallthru
        _
      %p3782 = scmp.le.s32.totalorder 2, %s21
      // Predicated region
      $region73: #{tpu_custom_call.1} parent=5 // pred_check
        %p3783 = pneg %p3782
      $region74: #{tpu_custom_call.1} parent=5 // pred_check_branch
        %3785 = sbr.rel (%p3783) target = $region76
      $region75: #{tpu_custom_call.1} parent=5 // pred_region
        %s3786 = ssub.s32 %s21, 2
        // Predicated region
        $region77: #{tpu_custom_call.1} parent=75 // pred_check
          %p3787 = pneg %p216
        $region78: #{tpu_custom_call.1} parent=75 // pred_check_branch
          %3789 = sbr.rel (%p3787) target = $region80
        $region79: #{tpu_custom_call.1} parent=75 // pred_region
          %s3790 = sand.u32 %s201, 1
          %s3791 = scalar_lea.sflag [#allocation6], %s3790
          %s3792 = sand.u32 %s201, 1
          %s3793 = smul.addr %s3792, 128
          %s3794 = scalar_lea.vmem [#allocation12], %s3793
          %3795 = dma.done %s3791, 2048
        $region80: #{tpu_custom_call.1} parent=75 // pred_fallthru
          _
      $region76: #{tpu_custom_call.1} parent=5 // pred_fallthru
        _
    $region6: #{tpu_custom_call.1} parent=1 // loop_footer
      %s25 = sadd.s32 1, %s21
    $region7: #{tpu_custom_call.1} parent=1 // loop_footer_branch
      %20 = sbr.rel target = $region3
    $region8: #{tpu_custom_call.1} parent=1 // loop_exit
      _
    %3796 = vsyncpa [#allocation5], 1
    %s3797 = scalar_lea.sflag [#allocation5], 1
    %3798 = vsyncpa %s3797, 1
    %3799 = vsyncpa [#allocation8], 1
    %3800 = vsyncpa [#allocation11], 1
    %3801 = vsyncpa [#allocation6], 1
    %s3802 = scalar_lea.sflag [#allocation6], 1
    %3803 = vsyncpa %s3802, 1

</llo_original>
